<compile_context>
chip_gen: v7x
topology: tpu7x:2x2x1
jax: 0.10.0
libtpu: 0.0.40
codegen_flags: <defaults>
</compile_context>

<pallas_src>
import functools
import jax
import jax.numpy as jnp
from jax import lax
from jax.experimental import pallas as pl
from jax.experimental.pallas import tpu as pltpu


# ----------------------------------------------------------------------------
# In-kernel helpers
# ----------------------------------------------------------------------------
def _layer_norm(y, gamma, beta, eps):
    mean = jnp.mean(y, axis=-1, keepdims=True)
    var = jnp.mean((y - mean) ** 2, axis=-1, keepdims=True)
    # rsqrt goes to the EUP slot; avoids sqrt + divide on the VPU.
    return (y - mean) * lax.rsqrt(var + eps) * gamma + beta


def _mha(q_in, k_in, v_in, residual, wq, wk, wv, wfc, gamma, beta,
         attn_out_ref, *, n_head, d_k, d_v, eps):
    # Lane-dense projections: one (L, D) x (D, H*dk) matmul per operand.
    Q = jnp.dot(q_in, wq, preferred_element_type=jnp.float32)   # (Lq, H*dk)
    K = jnp.dot(k_in, wk, preferred_element_type=jnp.float32)   # (Lk, H*dk)
    V = jnp.dot(v_in, wv, preferred_element_type=jnp.float32)   # (Lk, H*dv)

    inv_temp = 1.0 / (d_k ** 0.5)
    head_attns = []
    head_outs = []
    for h in range(n_head):                                     # static loop
        Qh = Q[:, h * d_k:(h + 1) * d_k] * inv_temp
        Kh = K[:, h * d_k:(h + 1) * d_k]
        Vh = V[:, h * d_v:(h + 1) * d_v]
        # scores = Qh @ Kh.T (contract last dims; no explicit transpose)
        s = lax.dot_general(Qh, Kh, (((1,), (1,)), ((), ())),
                            preferred_element_type=jnp.float32)  # (Lq, Lk)
        s = s - jnp.max(s, axis=-1, keepdims=True)
        e = jnp.exp(s)
        attn = e * pl.reciprocal(jnp.sum(e, axis=-1, keepdims=True), approx=False)
        head_attns.append(attn)
        head_outs.append(jnp.dot(attn, Vh, preferred_element_type=jnp.float32))

    # Single lane-dense store of all heads' probabilities: layout (Lq, H*Lk);
    # the wrapper reshapes/transposes this to the module's (B, H, Lq, Lk).
    attn_out_ref[0] = jnp.concatenate(head_attns, axis=-1)

    # Concat heads once, then a single (Lq, H*dv) x (H*dv, D) output projection.
    o = jnp.dot(jnp.concatenate(head_outs, axis=-1), wfc,
                preferred_element_type=jnp.float32)
    return _layer_norm(o + residual, gamma, beta, eps)


# ----------------------------------------------------------------------------
# Fused decoder-layer kernel (one grid step per batch element)
# ----------------------------------------------------------------------------
def decoder_layer_kernel(dec_ref, pos_ref, enc_ref,
                         s_wq, s_wk, s_wv, s_wfc, s_g, s_b,
                         c_wq, c_wk, c_wv, c_wfc, c_g, c_b,
                         w1_ref, b1_ref, w2_ref, b2_ref, f_g, f_b,
                         out_ref, slf_attn_ref, enc_attn_ref,
                         *, n_head, d_k, d_v, eps):
    x = dec_ref[0]                  # (Lq, D)
    enc = enc_ref[0]                # (Lk, D)
    q_in = x + pos_ref[0]           # with_pos_embed(dec_input, query_pos)

    # self-attention: q = k = dec + pos, v = dec, residual = q
    o = _mha(q_in, q_in, x, q_in,
             s_wq[...], s_wk[...], s_wv[...], s_wfc[...], s_g[...], s_b[...],
             slf_attn_ref, n_head=n_head, d_k=d_k, d_v=d_v, eps=eps)

    # cross-attention: q = o, k = v = enc_output, residual = o
    o = _mha(o, enc, enc, o,
             c_wq[...], c_wk[...], c_wv[...], c_wfc[...], c_g[...], c_b[...],
             enc_attn_ref, n_head=n_head, d_k=d_k, d_v=d_v, eps=eps)

    # position-wise FFN: Linear -> ReLU -> Linear -> +residual -> LayerNorm
    h = jnp.maximum(
        jnp.dot(o, w1_ref[...], preferred_element_type=jnp.float32) + b1_ref[...],
        0.0)
    y = jnp.dot(h, w2_ref[...], preferred_element_type=jnp.float32) + b2_ref[...]
    out_ref[0] = _layer_norm(y + o, f_g[...], f_b[...], eps)


# ----------------------------------------------------------------------------
# Wrapper
# ----------------------------------------------------------------------------
def decoder_layer(dec_input, enc_output, params, *, n_head, d_k, d_v,
                  query_pos=None):
    B, Lq, D = dec_input.shape
    Lk = enc_output.shape[1]
    if query_pos is None:
        query_pos = jnp.zeros_like(dec_input)

    slf, enc_p, ffn = params["slf"], params["enc"], params["ffn"]
    Dh = ffn["w1"].shape[1]

    kern = functools.partial(decoder_layer_kernel, n_head=n_head, d_k=d_k,
                             d_v=d_v, eps=1e-6)

    def act_spec(L, W):
        return pl.BlockSpec((1, L, W), lambda b: (b, 0, 0))

    def w_spec(shape):
        return pl.BlockSpec(shape, lambda b: (0, 0))

    in_specs = [
        act_spec(Lq, D), act_spec(Lq, D), act_spec(Lk, D),
        # self-attention weights
        w_spec((D, n_head * d_k)), w_spec((D, n_head * d_k)),
        w_spec((D, n_head * d_v)), w_spec((n_head * d_v, D)),
        w_spec((1, D)), w_spec((1, D)),
        # cross-attention weights
        w_spec((D, n_head * d_k)), w_spec((D, n_head * d_k)),
        w_spec((D, n_head * d_v)), w_spec((n_head * d_v, D)),
        w_spec((1, D)), w_spec((1, D)),
        # FFN weights
        w_spec((D, Dh)), w_spec((1, Dh)), w_spec((Dh, D)), w_spec((1, D)),
        w_spec((1, D)), w_spec((1, D)),
    ]
    out_specs = [
        act_spec(Lq, D),
        act_spec(Lq, n_head * Lq),   # lane-dense attn slabs
        act_spec(Lq, n_head * Lk),
    ]
    out_shape = [
        jax.ShapeDtypeStruct((B, Lq, D), jnp.float32),
        jax.ShapeDtypeStruct((B, Lq, n_head * Lq), jnp.float32),
        jax.ShapeDtypeStruct((B, Lq, n_head * Lk), jnp.float32),
    ]

    out, slf_cat, enc_cat = pl.pallas_call(
        kern,
        grid=(B,),
        in_specs=in_specs,
        out_specs=out_specs,
        out_shape=out_shape,
        compiler_params=pltpu.CompilerParams(
            dimension_semantics=("parallel",)),
    )(dec_input, query_pos, enc_output,
      slf["wq"], slf["wk"], slf["wv"], slf["wfc"], slf["gamma"], slf["beta"],
      enc_p["wq"], enc_p["wk"], enc_p["wv"], enc_p["wfc"], enc_p["gamma"], enc_p["beta"],
      ffn["w1"], ffn["b1"], ffn["w2"], ffn["b2"], ffn["gamma"], ffn["beta"])

    # layout plumbing (cheap, wrapper-side): (B, Lq, H*Lk) -> (B, H, Lq, Lk)
    dec_slf_attn = slf_cat.reshape(B, Lq, n_head, Lq).transpose(0, 2, 1, 3)
    dec_enc_attn = enc_cat.reshape(B, Lq, n_head, Lk).transpose(0, 2, 1, 3)
    return out, dec_slf_attn, dec_enc_attn


# ----------------------------------------------------------------------------
# Pure-JAX reference (for correctness check)
# ----------------------------------------------------------------------------
def mha_ref(q, k, v, p, n_head, d_k, d_v):
    B, Lq, D = q.shape
    Lk = k.shape[1]
    residual = q
    Q = (q @ p["wq"]).reshape(B, Lq, n_head, d_k).transpose(0, 2, 1, 3)
    K = (k @ p["wk"]).reshape(B, Lk, n_head, d_k).transpose(0, 2, 1, 3)
    V = (v @ p["wv"]).reshape(B, Lk, n_head, d_v).transpose(0, 2, 1, 3)
    attn = jnp.einsum("bhqd,bhkd->bhqk", Q / (d_k ** 0.5), K)
    attn = jax.nn.softmax(attn, axis=-1)
    o = jnp.einsum("bhqk,bhkd->bhqd", attn, V)
    o = o.transpose(0, 2, 1, 3).reshape(B, Lq, n_head * d_v) @ p["wfc"]
    o = o + residual
    mean = o.mean(-1, keepdims=True)
    var = ((o - mean) ** 2).mean(-1, keepdims=True)
    o = (o - mean) / jnp.sqrt(var + 1e-6) * p["gamma"] + p["beta"]
    return o, attn


def ffn_ref(x, p):
    residual = x
    y = jnp.maximum(x @ p["w1"] + p["b1"], 0.0) @ p["w2"] + p["b2"]
    y = y + residual
    mean = y.mean(-1, keepdims=True)
    var = ((y - mean) ** 2).mean(-1, keepdims=True)
    return (y - mean) / jnp.sqrt(var + 1e-6) * p["gamma"] + p["beta"]


def decoder_layer_ref(dec_input, enc_output, params, n_head, d_k, d_v,
                      query_pos=None):
    q = dec_input if query_pos is None else dec_input + query_pos
    o, a1 = mha_ref(q, q, dec_input, params["slf"], n_head, d_k, d_v)
    o, a2 = mha_ref(o, enc_output, enc_output, params["enc"], n_head, d_k, d_v)
    o = ffn_ref(o, params["ffn"])
    return o, a1, a2


# ----------------------------------------------------------------------------
if __name__ == "__main__":
    B, L_dec, L_enc = 2, 8, 16
    d_model, d_inner, n_head, d_k, d_v = 32, 64, 4, 8, 8

    key = jax.random.PRNGKey(0)
    keys = jax.random.split(key, 16)

    def mha_params(k0, k1, k2, k3):
        return {
            "wq": 0.1 * jax.random.normal(k0, (d_model, n_head * d_k), jnp.float32),
            "wk": 0.1 * jax.random.normal(k1, (d_model, n_head * d_k), jnp.float32),
            "wv": 0.1 * jax.random.normal(k2, (d_model, n_head * d_v), jnp.float32),
            "wfc": 0.1 * jax.random.normal(k3, (n_head * d_v, d_model), jnp.float32),
            "gamma": jnp.ones((1, d_model), jnp.float32),
            "beta": jnp.zeros((1, d_model), jnp.float32),
        }

    params = {
        "slf": mha_params(*keys[0:4]),
        "enc": mha_params(*keys[4:8]),
        "ffn": {
            "w1": 0.1 * jax.random.normal(keys[8], (d_model, d_inner), jnp.float32),
            "b1": 0.01 * jax.random.normal(keys[9], (1, d_inner), jnp.float32),
            "w2": 0.1 * jax.random.normal(keys[10], (d_inner, d_model), jnp.float32),
            "b2": 0.01 * jax.random.normal(keys[11], (1, d_model), jnp.float32),
            "gamma": jnp.ones((1, d_model), jnp.float32),
            "beta": jnp.zeros((1, d_model), jnp.float32),
        },
    }

    dec_input = jax.random.normal(keys[12], (B, L_dec, d_model), jnp.float32)
    enc_output = jax.random.normal(keys[13], (B, L_enc, d_model), jnp.float32)
    query_pos = 0.1 * jax.random.normal(keys[14], (B, L_dec, d_model), jnp.float32)

    out, slf_attn, enc_attn = decoder_layer(
        dec_input, enc_output, params,
        n_head=n_head, d_k=d_k, d_v=d_v, query_pos=query_pos)
    jax.block_until_ready((out, slf_attn, enc_attn))

    out_r, slf_r, enc_r = decoder_layer_ref(
        dec_input, enc_output, params, n_head, d_k, d_v, query_pos=query_pos)

    assert out.shape == (B, L_dec, d_model)
    assert slf_attn.shape == (B, n_head, L_dec, L_dec)
    assert enc_attn.shape == (B, n_head, L_dec, L_enc)
    assert jnp.allclose(out, out_r, atol=1e-4, rtol=1e-4)
    assert jnp.allclose(slf_attn, slf_r, atol=1e-4, rtol=1e-4)
    assert jnp.allclose(enc_attn, enc_r, atol=1e-4, rtol=1e-4)

    print("KERNEL_OK")
</pallas_src>

<mosaic_0001>
module attributes {stable_mosaic.version = 11 : i64} {
  func.func @decoder_layer_kernel(%arg0: i32, %arg1: memref<1x8x32xf32, #tpu.memory_space<vmem>>, %arg2: memref<1x8x32xf32, #tpu.memory_space<vmem>>, %arg3: memref<1x16x32xf32, #tpu.memory_space<vmem>>, %arg4: memref<32x32xf32, #tpu.memory_space<vmem>>, %arg5: memref<32x32xf32, #tpu.memory_space<vmem>>, %arg6: memref<32x32xf32, #tpu.memory_space<vmem>>, %arg7: memref<32x32xf32, #tpu.memory_space<vmem>>, %arg8: memref<1x32xf32, #tpu.memory_space<vmem>>, %arg9: memref<1x32xf32, #tpu.memory_space<vmem>>, %arg10: memref<32x32xf32, #tpu.memory_space<vmem>>, %arg11: memref<32x32xf32, #tpu.memory_space<vmem>>, %arg12: memref<32x32xf32, #tpu.memory_space<vmem>>, %arg13: memref<32x32xf32, #tpu.memory_space<vmem>>, %arg14: memref<1x32xf32, #tpu.memory_space<vmem>>, %arg15: memref<1x32xf32, #tpu.memory_space<vmem>>, %arg16: memref<32x64xf32, #tpu.memory_space<vmem>>, %arg17: memref<1x64xf32, #tpu.memory_space<vmem>>, %arg18: memref<64x32xf32, #tpu.memory_space<vmem>>, %arg19: memref<1x32xf32, #tpu.memory_space<vmem>>, %arg20: memref<1x32xf32, #tpu.memory_space<vmem>>, %arg21: memref<1x32xf32, #tpu.memory_space<vmem>>, %arg22: memref<1x8x32xf32, #tpu.memory_space<vmem>>, %arg23: memref<1x8x32xf32, #tpu.memory_space<vmem>>, %arg24: memref<1x8x64xf32, #tpu.memory_space<vmem>>) attributes {dimension_semantics = [#tpu.dimension_semantics<parallel>], iteration_bounds = array<i64: 2>, scalar_prefetch = 0 : i64, scratch_operands = 0 : i64, tpu.core_type = #tpu.core_type<tc>, window_params = [{transform_indices = @transform_0, window_bounds = array<i64: 1, 8, 32>}, {transform_indices = @transform_1, window_bounds = array<i64: 1, 8, 32>}, {transform_indices = @transform_2, window_bounds = array<i64: 1, 16, 32>}, {pipeline_mode = #tpu.pipeline_mode<synchronous>, transform_indices = @transform_3, window_bounds = array<i64: 32, 32>}, {pipeline_mode = #tpu.pipeline_mode<synchronous>, transform_indices = @transform_4, window_bounds = array<i64: 32, 32>}, {pipeline_mode = #tpu.pipeline_mode<synchronous>, transform_indices = @transform_5, window_bounds = array<i64: 32, 32>}, {pipeline_mode = #tpu.pipeline_mode<synchronous>, transform_indices = @transform_6, window_bounds = array<i64: 32, 32>}, {pipeline_mode = #tpu.pipeline_mode<synchronous>, transform_indices = @transform_7, window_bounds = array<i64: 1, 32>}, {pipeline_mode = #tpu.pipeline_mode<synchronous>, transform_indices = @transform_8, window_bounds = array<i64: 1, 32>}, {pipeline_mode = #tpu.pipeline_mode<synchronous>, transform_indices = @transform_9, window_bounds = array<i64: 32, 32>}, {pipeline_mode = #tpu.pipeline_mode<synchronous>, transform_indices = @transform_10, window_bounds = array<i64: 32, 32>}, {pipeline_mode = #tpu.pipeline_mode<synchronous>, transform_indices = @transform_11, window_bounds = array<i64: 32, 32>}, {pipeline_mode = #tpu.pipeline_mode<synchronous>, transform_indices = @transform_12, window_bounds = array<i64: 32, 32>}, {pipeline_mode = #tpu.pipeline_mode<synchronous>, transform_indices = @transform_13, window_bounds = array<i64: 1, 32>}, {pipeline_mode = #tpu.pipeline_mode<synchronous>, transform_indices = @transform_14, window_bounds = array<i64: 1, 32>}, {pipeline_mode = #tpu.pipeline_mode<synchronous>, transform_indices = @transform_15, window_bounds = array<i64: 32, 64>}, {pipeline_mode = #tpu.pipeline_mode<synchronous>, transform_indices = @transform_16, window_bounds = array<i64: 1, 64>}, {pipeline_mode = #tpu.pipeline_mode<synchronous>, transform_indices = @transform_17, window_bounds = array<i64: 64, 32>}, {pipeline_mode = #tpu.pipeline_mode<synchronous>, transform_indices = @transform_18, window_bounds = array<i64: 1, 32>}, {pipeline_mode = #tpu.pipeline_mode<synchronous>, transform_indices = @transform_19, window_bounds = array<i64: 1, 32>}, {pipeline_mode = #tpu.pipeline_mode<synchronous>, transform_indices = @transform_20, window_bounds = array<i64: 1, 32>}, {transform_indices = @transform_21, window_bounds = array<i64: 1, 8, 32>}, {transform_indices = @transform_22, window_bounds = array<i64: 1, 8, 32>}, {transform_indices = @transform_23, window_bounds = array<i64: 1, 8, 64>}]} {
    %c0 = arith.constant 0 : index
    %c0_0 = arith.constant 0 : index
    %c0_1 = arith.constant 0 : index
    %0 = vector.load %arg1[%c0, %c0_0, %c0_1] : memref<1x8x32xf32, #tpu.memory_space<vmem>>, vector<1x8x32xf32>
    %1 = vector.shape_cast %0 : vector<1x8x32xf32> to vector<8x32xf32>
    %c0_2 = arith.constant 0 : index
    %c0_3 = arith.constant 0 : index
    %c0_4 = arith.constant 0 : index
    %2 = vector.load %arg3[%c0_2, %c0_3, %c0_4] : memref<1x16x32xf32, #tpu.memory_space<vmem>>, vector<1x16x32xf32>
    %3 = vector.shape_cast %2 : vector<1x16x32xf32> to vector<16x32xf32>
    %c0_5 = arith.constant 0 : index
    %c0_6 = arith.constant 0 : index
    %c0_7 = arith.constant 0 : index
    %4 = vector.load %arg2[%c0_5, %c0_6, %c0_7] : memref<1x8x32xf32, #tpu.memory_space<vmem>>, vector<1x8x32xf32>
    %5 = vector.shape_cast %4 : vector<1x8x32xf32> to vector<8x32xf32>
    %6 = arith.addf %1, %5 : vector<8x32xf32>
    %c0_8 = arith.constant 0 : index
    %c0_9 = arith.constant 0 : index
    %7 = vector.load %arg4[%c0_8, %c0_9] : memref<32x32xf32, #tpu.memory_space<vmem>>, vector<32x32xf32>
    %c0_10 = arith.constant 0 : index
    %c0_11 = arith.constant 0 : index
    %8 = vector.load %arg5[%c0_10, %c0_11] : memref<32x32xf32, #tpu.memory_space<vmem>>, vector<32x32xf32>
    %c0_12 = arith.constant 0 : index
    %c0_13 = arith.constant 0 : index
    %9 = vector.load %arg6[%c0_12, %c0_13] : memref<32x32xf32, #tpu.memory_space<vmem>>, vector<32x32xf32>
    %c0_14 = arith.constant 0 : index
    %c0_15 = arith.constant 0 : index
    %10 = vector.load %arg7[%c0_14, %c0_15] : memref<32x32xf32, #tpu.memory_space<vmem>>, vector<32x32xf32>
    %c0_16 = arith.constant 0 : index
    %c0_17 = arith.constant 0 : index
    %11 = vector.load %arg8[%c0_16, %c0_17] : memref<1x32xf32, #tpu.memory_space<vmem>>, vector<1x32xf32>
    %c0_18 = arith.constant 0 : index
    %c0_19 = arith.constant 0 : index
    %12 = vector.load %arg9[%c0_18, %c0_19] : memref<1x32xf32, #tpu.memory_space<vmem>>, vector<1x32xf32>
    %cst = arith.constant dense<0.000000e+00> : vector<8x32xf32>
    %13 = tpu.matmul %6, %7, %cst {dimension_numbers = #tpu.dot_dimension_numbers<[1], [0], [0], [1], [0, 0, 1, 1], [], []>} : vector<8x32xf32>, vector<32x32xf32>, vector<8x32xf32> -> vector<8x32xf32>
    %cst_20 = arith.constant dense<0.000000e+00> : vector<8x32xf32>
    %14 = tpu.matmul %6, %8, %cst_20 {dimension_numbers = #tpu.dot_dimension_numbers<[1], [0], [0], [1], [0, 0, 1, 1], [], []>} : vector<8x32xf32>, vector<32x32xf32>, vector<8x32xf32> -> vector<8x32xf32>
    %cst_21 = arith.constant dense<0.000000e+00> : vector<8x32xf32>
    %15 = tpu.matmul %1, %9, %cst_21 {dimension_numbers = #tpu.dot_dimension_numbers<[1], [0], [0], [1], [0, 0, 1, 1], [], []>} : vector<8x32xf32>, vector<32x32xf32>, vector<8x32xf32> -> vector<8x32xf32>
    %16 = vector.extract_strided_slice %13 {offsets = [0, 0], sizes = [8, 8], strides = [1, 1]} : vector<8x32xf32> to vector<8x8xf32>
    %cst_22 = arith.constant 0.353553385 : f32
    %17 = vector.broadcast %cst_22 : f32 to vector<8x8xf32>
    %18 = arith.mulf %16, %17 : vector<8x8xf32>
    %19 = vector.extract_strided_slice %14 {offsets = [0, 0], sizes = [8, 8], strides = [1, 1]} : vector<8x32xf32> to vector<8x8xf32>
    %20 = vector.extract_strided_slice %15 {offsets = [0, 0], sizes = [8, 8], strides = [1, 1]} : vector<8x32xf32> to vector<8x8xf32>
    %cst_23 = arith.constant dense<0.000000e+00> : vector<8x8xf32>
    %21 = tpu.matmul %18, %19, %cst_23 {dimension_numbers = #tpu.dot_dimension_numbers<[1], [1], [0], [0], [0, 0, 1, 0], [], []>} : vector<8x8xf32>, vector<8x8xf32>, vector<8x8xf32> -> vector<8x8xf32>
    %cst_24 = arith.constant dense<0xFF800000> : vector<8xf32>
    %22 = vector.multi_reduction <maximumf>, %21, %cst_24 [1] : vector<8x8xf32> to vector<8xf32>
    %23 = vector.shape_cast %22 : vector<8xf32> to vector<8x1xf32>
    %24 = vector.broadcast %23 : vector<8x1xf32> to vector<8x8xf32>
    %25 = arith.subf %21, %24 : vector<8x8xf32>
    %26 = math.exp %25 : vector<8x8xf32>
    %cst_25 = arith.constant dense<0.000000e+00> : vector<8xf32>
    %27 = vector.multi_reduction <add>, %26, %cst_25 [1] : vector<8x8xf32> to vector<8xf32>
    %28 = vector.shape_cast %27 : vector<8xf32> to vector<8x1xf32>
    %29 = tpu.reciprocal %28 : vector<8x1xf32> -> vector<8x1xf32>
    %30 = vector.broadcast %29 : vector<8x1xf32> to vector<8x8xf32>
    %31 = arith.mulf %26, %30 : vector<8x8xf32>
    %cst_26 = arith.constant dense<0.000000e+00> : vector<8x8xf32>
    %32 = tpu.matmul %31, %20, %cst_26 {dimension_numbers = #tpu.dot_dimension_numbers<[1], [0], [0], [1], [0, 0, 1, 1], [], []>} : vector<8x8xf32>, vector<8x8xf32>, vector<8x8xf32> -> vector<8x8xf32>
    %33 = vector.extract_strided_slice %13 {offsets = [0, 8], sizes = [8, 8], strides = [1, 1]} : vector<8x32xf32> to vector<8x8xf32>
    %cst_27 = arith.constant 0.353553385 : f32
    %34 = vector.broadcast %cst_27 : f32 to vector<8x8xf32>
    %35 = arith.mulf %33, %34 : vector<8x8xf32>
    %36 = vector.extract_strided_slice %14 {offsets = [0, 8], sizes = [8, 8], strides = [1, 1]} : vector<8x32xf32> to vector<8x8xf32>
    %37 = vector.extract_strided_slice %15 {offsets = [0, 8], sizes = [8, 8], strides = [1, 1]} : vector<8x32xf32> to vector<8x8xf32>
    %cst_28 = arith.constant dense<0.000000e+00> : vector<8x8xf32>
    %38 = tpu.matmul %35, %36, %cst_28 {dimension_numbers = #tpu.dot_dimension_numbers<[1], [1], [0], [0], [0, 0, 1, 0], [], []>} : vector<8x8xf32>, vector<8x8xf32>, vector<8x8xf32> -> vector<8x8xf32>
    %cst_29 = arith.constant dense<0xFF800000> : vector<8xf32>
    %39 = vector.multi_reduction <maximumf>, %38, %cst_29 [1] : vector<8x8xf32> to vector<8xf32>
    %40 = vector.shape_cast %39 : vector<8xf32> to vector<8x1xf32>
    %41 = vector.broadcast %40 : vector<8x1xf32> to vector<8x8xf32>
    %42 = arith.subf %38, %41 : vector<8x8xf32>
    %43 = math.exp %42 : vector<8x8xf32>
    %cst_30 = arith.constant dense<0.000000e+00> : vector<8xf32>
    %44 = vector.multi_reduction <add>, %43, %cst_30 [1] : vector<8x8xf32> to vector<8xf32>
    %45 = vector.shape_cast %44 : vector<8xf32> to vector<8x1xf32>
    %46 = tpu.reciprocal %45 : vector<8x1xf32> -> vector<8x1xf32>
    %47 = vector.broadcast %46 : vector<8x1xf32> to vector<8x8xf32>
    %48 = arith.mulf %43, %47 : vector<8x8xf32>
    %cst_31 = arith.constant dense<0.000000e+00> : vector<8x8xf32>
    %49 = tpu.matmul %48, %37, %cst_31 {dimension_numbers = #tpu.dot_dimension_numbers<[1], [0], [0], [1], [0, 0, 1, 1], [], []>} : vector<8x8xf32>, vector<8x8xf32>, vector<8x8xf32> -> vector<8x8xf32>
    %50 = vector.extract_strided_slice %13 {offsets = [0, 16], sizes = [8, 8], strides = [1, 1]} : vector<8x32xf32> to vector<8x8xf32>
    %cst_32 = arith.constant 0.353553385 : f32
    %51 = vector.broadcast %cst_32 : f32 to vector<8x8xf32>
    %52 = arith.mulf %50, %51 : vector<8x8xf32>
    %53 = vector.extract_strided_slice %14 {offsets = [0, 16], sizes = [8, 8], strides = [1, 1]} : vector<8x32xf32> to vector<8x8xf32>
    %54 = vector.extract_strided_slice %15 {offsets = [0, 16], sizes = [8, 8], strides = [1, 1]} : vector<8x32xf32> to vector<8x8xf32>
    %cst_33 = arith.constant dense<0.000000e+00> : vector<8x8xf32>
    %55 = tpu.matmul %52, %53, %cst_33 {dimension_numbers = #tpu.dot_dimension_numbers<[1], [1], [0], [0], [0, 0, 1, 0], [], []>} : vector<8x8xf32>, vector<8x8xf32>, vector<8x8xf32> -> vector<8x8xf32>
    %cst_34 = arith.constant dense<0xFF800000> : vector<8xf32>
    %56 = vector.multi_reduction <maximumf>, %55, %cst_34 [1] : vector<8x8xf32> to vector<8xf32>
    %57 = vector.shape_cast %56 : vector<8xf32> to vector<8x1xf32>
    %58 = vector.broadcast %57 : vector<8x1xf32> to vector<8x8xf32>
    %59 = arith.subf %55, %58 : vector<8x8xf32>
    %60 = math.exp %59 : vector<8x8xf32>
    %cst_35 = arith.constant dense<0.000000e+00> : vector<8xf32>
    %61 = vector.multi_reduction <add>, %60, %cst_35 [1] : vector<8x8xf32> to vector<8xf32>
    %62 = vector.shape_cast %61 : vector<8xf32> to vector<8x1xf32>
    %63 = tpu.reciprocal %62 : vector<8x1xf32> -> vector<8x1xf32>
    %64 = vector.broadcast %63 : vector<8x1xf32> to vector<8x8xf32>
    %65 = arith.mulf %60, %64 : vector<8x8xf32>
    %cst_36 = arith.constant dense<0.000000e+00> : vector<8x8xf32>
    %66 = tpu.matmul %65, %54, %cst_36 {dimension_numbers = #tpu.dot_dimension_numbers<[1], [0], [0], [1], [0, 0, 1, 1], [], []>} : vector<8x8xf32>, vector<8x8xf32>, vector<8x8xf32> -> vector<8x8xf32>
    %67 = vector.extract_strided_slice %13 {offsets = [0, 24], sizes = [8, 8], strides = [1, 1]} : vector<8x32xf32> to vector<8x8xf32>
    %cst_37 = arith.constant 0.353553385 : f32
    %68 = vector.broadcast %cst_37 : f32 to vector<8x8xf32>
    %69 = arith.mulf %67, %68 : vector<8x8xf32>
    %70 = vector.extract_strided_slice %14 {offsets = [0, 24], sizes = [8, 8], strides = [1, 1]} : vector<8x32xf32> to vector<8x8xf32>
    %71 = vector.extract_strided_slice %15 {offsets = [0, 24], sizes = [8, 8], strides = [1, 1]} : vector<8x32xf32> to vector<8x8xf32>
    %cst_38 = arith.constant dense<0.000000e+00> : vector<8x8xf32>
    %72 = tpu.matmul %69, %70, %cst_38 {dimension_numbers = #tpu.dot_dimension_numbers<[1], [1], [0], [0], [0, 0, 1, 0], [], []>} : vector<8x8xf32>, vector<8x8xf32>, vector<8x8xf32> -> vector<8x8xf32>
    %cst_39 = arith.constant dense<0xFF800000> : vector<8xf32>
    %73 = vector.multi_reduction <maximumf>, %72, %cst_39 [1] : vector<8x8xf32> to vector<8xf32>
    %74 = vector.shape_cast %73 : vector<8xf32> to vector<8x1xf32>
    %75 = vector.broadcast %74 : vector<8x1xf32> to vector<8x8xf32>
    %76 = arith.subf %72, %75 : vector<8x8xf32>
    %77 = math.exp %76 : vector<8x8xf32>
    %cst_40 = arith.constant dense<0.000000e+00> : vector<8xf32>
    %78 = vector.multi_reduction <add>, %77, %cst_40 [1] : vector<8x8xf32> to vector<8xf32>
    %79 = vector.shape_cast %78 : vector<8xf32> to vector<8x1xf32>
    %80 = tpu.reciprocal %79 : vector<8x1xf32> -> vector<8x1xf32>
    %81 = vector.broadcast %80 : vector<8x1xf32> to vector<8x8xf32>
    %82 = arith.mulf %77, %81 : vector<8x8xf32>
    %cst_41 = arith.constant dense<0.000000e+00> : vector<8x8xf32>
    %83 = tpu.matmul %82, %71, %cst_41 {dimension_numbers = #tpu.dot_dimension_numbers<[1], [0], [0], [1], [0, 0, 1, 1], [], []>} : vector<8x8xf32>, vector<8x8xf32>, vector<8x8xf32> -> vector<8x8xf32>
    %84 = tpu.concatenate %31, %48, %65, %82 in 1 : vector<8x8xf32>, vector<8x8xf32>, vector<8x8xf32>, vector<8x8xf32> -> vector<8x32xf32>
    %c0_42 = arith.constant 0 : index
    %c0_43 = arith.constant 0 : index
    %c0_44 = arith.constant 0 : index
    %85 = vector.load %arg23[%c0_42, %c0_43, %c0_44] : memref<1x8x32xf32, #tpu.memory_space<vmem>>, vector<1x8x32xf32>
    %86 = vector.shape_cast %85 : vector<1x8x32xf32> to vector<8x32xf32>
    %87 = vector.shape_cast %84 : vector<8x32xf32> to vector<1x8x32xf32>
    tpu.vector_store %arg23[%c0_42, %c0_43, %c0_44], %87 {strides = array<i32>} : memref<1x8x32xf32, #tpu.memory_space<vmem>>, vector<1x8x32xf32>,
    %88 = tpu.concatenate %32, %49, %66, %83 in 1 : vector<8x8xf32>, vector<8x8xf32>, vector<8x8xf32>, vector<8x8xf32> -> vector<8x32xf32>
    %cst_45 = arith.constant dense<0.000000e+00> : vector<8x32xf32>
    %89 = tpu.matmul %88, %10, %cst_45 {dimension_numbers = #tpu.dot_dimension_numbers<[1], [0], [0], [1], [0, 0, 1, 1], [], []>} : vector<8x32xf32>, vector<32x32xf32>, vector<8x32xf32> -> vector<8x32xf32>
    %90 = arith.addf %89, %6 : vector<8x32xf32>
    %cst_46 = arith.constant dense<0.000000e+00> : vector<8xf32>
    %91 = vector.multi_reduction <add>, %90, %cst_46 [1] : vector<8x32xf32> to vector<8xf32>
    %92 = vector.shape_cast %91 : vector<8xf32> to vector<8x1xf32>
    %cst_47 = arith.constant 3.200000e+01 : f32
    %93 = vector.broadcast %cst_47 : f32 to vector<8x1xf32>
    %94 = arith.divf %92, %93 : vector<8x1xf32>
    %95 = vector.broadcast %94 : vector<8x1xf32> to vector<8x32xf32>
    %96 = arith.subf %90, %95 : vector<8x32xf32>
    %97 = arith.mulf %96, %96 : vector<8x32xf32>
    %cst_48 = arith.constant dense<0.000000e+00> : vector<8xf32>
    %98 = vector.multi_reduction <add>, %97, %cst_48 [1] : vector<8x32xf32> to vector<8xf32>
    %99 = vector.shape_cast %98 : vector<8xf32> to vector<8x1xf32>
    %cst_49 = arith.constant 3.200000e+01 : f32
    %100 = vector.broadcast %cst_49 : f32 to vector<8x1xf32>
    %101 = arith.divf %99, %100 : vector<8x1xf32>
    %102 = vector.broadcast %94 : vector<8x1xf32> to vector<8x32xf32>
    %103 = arith.subf %90, %102 : vector<8x32xf32>
    %cst_50 = arith.constant 9.99999997E-7 : f32
    %104 = vector.broadcast %cst_50 : f32 to vector<8x1xf32>
    %105 = arith.addf %101, %104 : vector<8x1xf32>
    %106 = math.rsqrt %105 : vector<8x1xf32>
    %107 = vector.broadcast %106 : vector<8x1xf32> to vector<8x32xf32>
    %108 = arith.mulf %103, %107 : vector<8x32xf32>
    %109 = vector.broadcast %11 : vector<1x32xf32> to vector<8x32xf32>
    %110 = arith.mulf %108, %109 : vector<8x32xf32>
    %111 = vector.broadcast %12 : vector<1x32xf32> to vector<8x32xf32>
    %112 = arith.addf %110, %111 : vector<8x32xf32>
    %c0_51 = arith.constant 0 : index
    %c0_52 = arith.constant 0 : index
    %113 = vector.load %arg10[%c0_51, %c0_52] : memref<32x32xf32, #tpu.memory_space<vmem>>, vector<32x32xf32>
    %c0_53 = arith.constant 0 : index
    %c0_54 = arith.constant 0 : index
    %114 = vector.load %arg11[%c0_53, %c0_54] : memref<32x32xf32, #tpu.memory_space<vmem>>, vector<32x32xf32>
    %c0_55 = arith.constant 0 : index
    %c0_56 = arith.constant 0 : index
    %115 = vector.load %arg12[%c0_55, %c0_56] : memref<32x32xf32, #tpu.memory_space<vmem>>, vector<32x32xf32>
    %c0_57 = arith.constant 0 : index
    %c0_58 = arith.constant 0 : index
    %116 = vector.load %arg13[%c0_57, %c0_58] : memref<32x32xf32, #tpu.memory_space<vmem>>, vector<32x32xf32>
    %c0_59 = arith.constant 0 : index
    %c0_60 = arith.constant 0 : index
    %117 = vector.load %arg14[%c0_59, %c0_60] : memref<1x32xf32, #tpu.memory_space<vmem>>, vector<1x32xf32>
    %c0_61 = arith.constant 0 : index
    %c0_62 = arith.constant 0 : index
    %118 = vector.load %arg15[%c0_61, %c0_62] : memref<1x32xf32, #tpu.memory_space<vmem>>, vector<1x32xf32>
    %cst_63 = arith.constant dense<0.000000e+00> : vector<8x32xf32>
    %119 = tpu.matmul %112, %113, %cst_63 {dimension_numbers = #tpu.dot_dimension_numbers<[1], [0], [0], [1], [0, 0, 1, 1], [], []>} : vector<8x32xf32>, vector<32x32xf32>, vector<8x32xf32> -> vector<8x32xf32>
    %cst_64 = arith.constant dense<0.000000e+00> : vector<16x32xf32>
    %120 = tpu.matmul %3, %114, %cst_64 {dimension_numbers = #tpu.dot_dimension_numbers<[1], [0], [0], [1], [0, 0, 1, 1], [], []>} : vector<16x32xf32>, vector<32x32xf32>, vector<16x32xf32> -> vector<16x32xf32>
    %cst_65 = arith.constant dense<0.000000e+00> : vector<16x32xf32>
    %121 = tpu.matmul %3, %115, %cst_65 {dimension_numbers = #tpu.dot_dimension_numbers<[1], [0], [0], [1], [0, 0, 1, 1], [], []>} : vector<16x32xf32>, vector<32x32xf32>, vector<16x32xf32> -> vector<16x32xf32>
    %122 = vector.extract_strided_slice %119 {offsets = [0, 0], sizes = [8, 8], strides = [1, 1]} : vector<8x32xf32> to vector<8x8xf32>
    %cst_66 = arith.constant 0.353553385 : f32
    %123 = vector.broadcast %cst_66 : f32 to vector<8x8xf32>
    %124 = arith.mulf %122, %123 : vector<8x8xf32>
    %125 = vector.extract_strided_slice %120 {offsets = [0, 0], sizes = [16, 8], strides = [1, 1]} : vector<16x32xf32> to vector<16x8xf32>
    %126 = vector.extract_strided_slice %121 {offsets = [0, 0], sizes = [16, 8], strides = [1, 1]} : vector<16x32xf32> to vector<16x8xf32>
    %cst_67 = arith.constant dense<0.000000e+00> : vector<8x16xf32>
    %127 = tpu.matmul %124, %125, %cst_67 {dimension_numbers = #tpu.dot_dimension_numbers<[1], [1], [0], [0], [0, 0, 1, 0], [], []>} : vector<8x8xf32>, vector<16x8xf32>, vector<8x16xf32> -> vector<8x16xf32>
    %cst_68 = arith.constant dense<0xFF800000> : vector<8xf32>
    %128 = vector.multi_reduction <maximumf>, %127, %cst_68 [1] : vector<8x16xf32> to vector<8xf32>
    %129 = vector.shape_cast %128 : vector<8xf32> to vector<8x1xf32>
    %130 = vector.broadcast %129 : vector<8x1xf32> to vector<8x16xf32>
    %131 = arith.subf %127, %130 : vector<8x16xf32>
    %132 = math.exp %131 : vector<8x16xf32>
    %cst_69 = arith.constant dense<0.000000e+00> : vector<8xf32>
    %133 = vector.multi_reduction <add>, %132, %cst_69 [1] : vector<8x16xf32> to vector<8xf32>
    %134 = vector.shape_cast %133 : vector<8xf32> to vector<8x1xf32>
    %135 = tpu.reciprocal %134 : vector<8x1xf32> -> vector<8x1xf32>
    %136 = vector.broadcast %135 : vector<8x1xf32> to vector<8x16xf32>
    %137 = arith.mulf %132, %136 : vector<8x16xf32>
    %cst_70 = arith.constant dense<0.000000e+00> : vector<8x8xf32>
    %138 = tpu.matmul %137, %126, %cst_70 {dimension_numbers = #tpu.dot_dimension_numbers<[1], [0], [0], [1], [0, 0, 1, 1], [], []>} : vector<8x16xf32>, vector<16x8xf32>, vector<8x8xf32> -> vector<8x8xf32>
    %139 = vector.extract_strided_slice %119 {offsets = [0, 8], sizes = [8, 8], strides = [1, 1]} : vector<8x32xf32> to vector<8x8xf32>
    %cst_71 = arith.constant 0.353553385 : f32
    %140 = vector.broadcast %cst_71 : f32 to vector<8x8xf32>
    %141 = arith.mulf %139, %140 : vector<8x8xf32>
    %142 = vector.extract_strided_slice %120 {offsets = [0, 8], sizes = [16, 8], strides = [1, 1]} : vector<16x32xf32> to vector<16x8xf32>
    %143 = vector.extract_strided_slice %121 {offsets = [0, 8], sizes = [16, 8], strides = [1, 1]} : vector<16x32xf32> to vector<16x8xf32>
    %cst_72 = arith.constant dense<0.000000e+00> : vector<8x16xf32>
    %144 = tpu.matmul %141, %142, %cst_72 {dimension_numbers = #tpu.dot_dimension_numbers<[1], [1], [0], [0], [0, 0, 1, 0], [], []>} : vector<8x8xf32>, vector<16x8xf32>, vector<8x16xf32> -> vector<8x16xf32>
    %cst_73 = arith.constant dense<0xFF800000> : vector<8xf32>
    %145 = vector.multi_reduction <maximumf>, %144, %cst_73 [1] : vector<8x16xf32> to vector<8xf32>
    %146 = vector.shape_cast %145 : vector<8xf32> to vector<8x1xf32>
    %147 = vector.broadcast %146 : vector<8x1xf32> to vector<8x16xf32>
    %148 = arith.subf %144, %147 : vector<8x16xf32>
    %149 = math.exp %148 : vector<8x16xf32>
    %cst_74 = arith.constant dense<0.000000e+00> : vector<8xf32>
    %150 = vector.multi_reduction <add>, %149, %cst_74 [1] : vector<8x16xf32> to vector<8xf32>
    %151 = vector.shape_cast %150 : vector<8xf32> to vector<8x1xf32>
    %152 = tpu.reciprocal %151 : vector<8x1xf32> -> vector<8x1xf32>
    %153 = vector.broadcast %152 : vector<8x1xf32> to vector<8x16xf32>
    %154 = arith.mulf %149, %153 : vector<8x16xf32>
    %cst_75 = arith.constant dense<0.000000e+00> : vector<8x8xf32>
    %155 = tpu.matmul %154, %143, %cst_75 {dimension_numbers = #tpu.dot_dimension_numbers<[1], [0], [0], [1], [0, 0, 1, 1], [], []>} : vector<8x16xf32>, vector<16x8xf32>, vector<8x8xf32> -> vector<8x8xf32>
    %156 = vector.extract_strided_slice %119 {offsets = [0, 16], sizes = [8, 8], strides = [1, 1]} : vector<8x32xf32> to vector<8x8xf32>
    %cst_76 = arith.constant 0.353553385 : f32
    %157 = vector.broadcast %cst_76 : f32 to vector<8x8xf32>
    %158 = arith.mulf %156, %157 : vector<8x8xf32>
    %159 = vector.extract_strided_slice %120 {offsets = [0, 16], sizes = [16, 8], strides = [1, 1]} : vector<16x32xf32> to vector<16x8xf32>
    %160 = vector.extract_strided_slice %121 {offsets = [0, 16], sizes = [16, 8], strides = [1, 1]} : vector<16x32xf32> to vector<16x8xf32>
    %cst_77 = arith.constant dense<0.000000e+00> : vector<8x16xf32>
    %161 = tpu.matmul %158, %159, %cst_77 {dimension_numbers = #tpu.dot_dimension_numbers<[1], [1], [0], [0], [0, 0, 1, 0], [], []>} : vector<8x8xf32>, vector<16x8xf32>, vector<8x16xf32> -> vector<8x16xf32>
    %cst_78 = arith.constant dense<0xFF800000> : vector<8xf32>
    %162 = vector.multi_reduction <maximumf>, %161, %cst_78 [1] : vector<8x16xf32> to vector<8xf32>
    %163 = vector.shape_cast %162 : vector<8xf32> to vector<8x1xf32>
    %164 = vector.broadcast %163 : vector<8x1xf32> to vector<8x16xf32>
    %165 = arith.subf %161, %164 : vector<8x16xf32>
    %166 = math.exp %165 : vector<8x16xf32>
    %cst_79 = arith.constant dense<0.000000e+00> : vector<8xf32>
    %167 = vector.multi_reduction <add>, %166, %cst_79 [1] : vector<8x16xf32> to vector<8xf32>
    %168 = vector.shape_cast %167 : vector<8xf32> to vector<8x1xf32>
    %169 = tpu.reciprocal %168 : vector<8x1xf32> -> vector<8x1xf32>
    %170 = vector.broadcast %169 : vector<8x1xf32> to vector<8x16xf32>
    %171 = arith.mulf %166, %170 : vector<8x16xf32>
    %cst_80 = arith.constant dense<0.000000e+00> : vector<8x8xf32>
    %172 = tpu.matmul %171, %160, %cst_80 {dimension_numbers = #tpu.dot_dimension_numbers<[1], [0], [0], [1], [0, 0, 1, 1], [], []>} : vector<8x16xf32>, vector<16x8xf32>, vector<8x8xf32> -> vector<8x8xf32>
    %173 = vector.extract_strided_slice %119 {offsets = [0, 24], sizes = [8, 8], strides = [1, 1]} : vector<8x32xf32> to vector<8x8xf32>
    %cst_81 = arith.constant 0.353553385 : f32
    %174 = vector.broadcast %cst_81 : f32 to vector<8x8xf32>
    %175 = arith.mulf %173, %174 : vector<8x8xf32>
    %176 = vector.extract_strided_slice %120 {offsets = [0, 24], sizes = [16, 8], strides = [1, 1]} : vector<16x32xf32> to vector<16x8xf32>
    %177 = vector.extract_strided_slice %121 {offsets = [0, 24], sizes = [16, 8], strides = [1, 1]} : vector<16x32xf32> to vector<16x8xf32>
    %cst_82 = arith.constant dense<0.000000e+00> : vector<8x16xf32>
    %178 = tpu.matmul %175, %176, %cst_82 {dimension_numbers = #tpu.dot_dimension_numbers<[1], [1], [0], [0], [0, 0, 1, 0], [], []>} : vector<8x8xf32>, vector<16x8xf32>, vector<8x16xf32> -> vector<8x16xf32>
    %cst_83 = arith.constant dense<0xFF800000> : vector<8xf32>
    %179 = vector.multi_reduction <maximumf>, %178, %cst_83 [1] : vector<8x16xf32> to vector<8xf32>
    %180 = vector.shape_cast %179 : vector<8xf32> to vector<8x1xf32>
    %181 = vector.broadcast %180 : vector<8x1xf32> to vector<8x16xf32>
    %182 = arith.subf %178, %181 : vector<8x16xf32>
    %183 = math.exp %182 : vector<8x16xf32>
    %cst_84 = arith.constant dense<0.000000e+00> : vector<8xf32>
    %184 = vector.multi_reduction <add>, %183, %cst_84 [1] : vector<8x16xf32> to vector<8xf32>
    %185 = vector.shape_cast %184 : vector<8xf32> to vector<8x1xf32>
    %186 = tpu.reciprocal %185 : vector<8x1xf32> -> vector<8x1xf32>
    %187 = vector.broadcast %186 : vector<8x1xf32> to vector<8x16xf32>
    %188 = arith.mulf %183, %187 : vector<8x16xf32>
    %cst_85 = arith.constant dense<0.000000e+00> : vector<8x8xf32>
    %189 = tpu.matmul %188, %177, %cst_85 {dimension_numbers = #tpu.dot_dimension_numbers<[1], [0], [0], [1], [0, 0, 1, 1], [], []>} : vector<8x16xf32>, vector<16x8xf32>, vector<8x8xf32> -> vector<8x8xf32>
    %190 = tpu.concatenate %137, %154, %171, %188 in 1 : vector<8x16xf32>, vector<8x16xf32>, vector<8x16xf32>, vector<8x16xf32> -> vector<8x64xf32>
    %c0_86 = arith.constant 0 : index
    %c0_87 = arith.constant 0 : index
    %c0_88 = arith.constant 0 : index
    %191 = vector.load %arg24[%c0_86, %c0_87, %c0_88] : memref<1x8x64xf32, #tpu.memory_space<vmem>>, vector<1x8x64xf32>
    %192 = vector.shape_cast %191 : vector<1x8x64xf32> to vector<8x64xf32>
    %193 = vector.shape_cast %190 : vector<8x64xf32> to vector<1x8x64xf32>
    tpu.vector_store %arg24[%c0_86, %c0_87, %c0_88], %193 {strides = array<i32>} : memref<1x8x64xf32, #tpu.memory_space<vmem>>, vector<1x8x64xf32>,
    %194 = tpu.concatenate %138, %155, %172, %189 in 1 : vector<8x8xf32>, vector<8x8xf32>, vector<8x8xf32>, vector<8x8xf32> -> vector<8x32xf32>
    %cst_89 = arith.constant dense<0.000000e+00> : vector<8x32xf32>
    %195 = tpu.matmul %194, %116, %cst_89 {dimension_numbers = #tpu.dot_dimension_numbers<[1], [0], [0], [1], [0, 0, 1, 1], [], []>} : vector<8x32xf32>, vector<32x32xf32>, vector<8x32xf32> -> vector<8x32xf32>
    %196 = arith.addf %195, %112 : vector<8x32xf32>
    %cst_90 = arith.constant dense<0.000000e+00> : vector<8xf32>
    %197 = vector.multi_reduction <add>, %196, %cst_90 [1] : vector<8x32xf32> to vector<8xf32>
    %198 = vector.shape_cast %197 : vector<8xf32> to vector<8x1xf32>
    %cst_91 = arith.constant 3.200000e+01 : f32
    %199 = vector.broadcast %cst_91 : f32 to vector<8x1xf32>
    %200 = arith.divf %198, %199 : vector<8x1xf32>
    %201 = vector.broadcast %200 : vector<8x1xf32> to vector<8x32xf32>
    %202 = arith.subf %196, %201 : vector<8x32xf32>
    %203 = arith.mulf %202, %202 : vector<8x32xf32>
    %cst_92 = arith.constant dense<0.000000e+00> : vector<8xf32>
    %204 = vector.multi_reduction <add>, %203, %cst_92 [1] : vector<8x32xf32> to vector<8xf32>
    %205 = vector.shape_cast %204 : vector<8xf32> to vector<8x1xf32>
    %cst_93 = arith.constant 3.200000e+01 : f32
    %206 = vector.broadcast %cst_93 : f32 to vector<8x1xf32>
    %207 = arith.divf %205, %206 : vector<8x1xf32>
    %208 = vector.broadcast %200 : vector<8x1xf32> to vector<8x32xf32>
    %209 = arith.subf %196, %208 : vector<8x32xf32>
    %cst_94 = arith.constant 9.99999997E-7 : f32
    %210 = vector.broadcast %cst_94 : f32 to vector<8x1xf32>
    %211 = arith.addf %207, %210 : vector<8x1xf32>
    %212 = math.rsqrt %211 : vector<8x1xf32>
    %213 = vector.broadcast %212 : vector<8x1xf32> to vector<8x32xf32>
    %214 = arith.mulf %209, %213 : vector<8x32xf32>
    %215 = vector.broadcast %117 : vector<1x32xf32> to vector<8x32xf32>
    %216 = arith.mulf %214, %215 : vector<8x32xf32>
    %217 = vector.broadcast %118 : vector<1x32xf32> to vector<8x32xf32>
    %218 = arith.addf %216, %217 : vector<8x32xf32>
    %c0_95 = arith.constant 0 : index
    %c0_96 = arith.constant 0 : index
    %219 = vector.load %arg16[%c0_95, %c0_96] : memref<32x64xf32, #tpu.memory_space<vmem>>, vector<32x64xf32>
    %cst_97 = arith.constant dense<0.000000e+00> : vector<8x64xf32>
    %220 = tpu.matmul %218, %219, %cst_97 {dimension_numbers = #tpu.dot_dimension_numbers<[1], [0], [0], [1], [0, 0, 1, 1], [], []>} : vector<8x32xf32>, vector<32x64xf32>, vector<8x64xf32> -> vector<8x64xf32>
    %c0_98 = arith.constant 0 : index
    %c0_99 = arith.constant 0 : index
    %221 = vector.load %arg17[%c0_98, %c0_99] : memref<1x64xf32, #tpu.memory_space<vmem>>, vector<1x64xf32>
    %222 = vector.broadcast %221 : vector<1x64xf32> to vector<8x64xf32>
    %223 = arith.addf %220, %222 : vector<8x64xf32>
    %cst_100 = arith.constant 0.000000e+00 : f32
    %224 = vector.broadcast %cst_100 : f32 to vector<8x64xf32>
    %225 = arith.maximumf %223, %224 : vector<8x64xf32>
    %c0_101 = arith.constant 0 : index
    %c0_102 = arith.constant 0 : index
    %226 = vector.load %arg18[%c0_101, %c0_102] : memref<64x32xf32, #tpu.memory_space<vmem>>, vector<64x32xf32>
    %cst_103 = arith.constant dense<0.000000e+00> : vector<8x32xf32>
    %227 = tpu.matmul %225, %226, %cst_103 {dimension_numbers = #tpu.dot_dimension_numbers<[1], [0], [0], [1], [0, 0, 1, 1], [], []>} : vector<8x64xf32>, vector<64x32xf32>, vector<8x32xf32> -> vector<8x32xf32>
    %c0_104 = arith.constant 0 : index
    %c0_105 = arith.constant 0 : index
    %228 = vector.load %arg19[%c0_104, %c0_105] : memref<1x32xf32, #tpu.memory_space<vmem>>, vector<1x32xf32>
    %229 = vector.broadcast %228 : vector<1x32xf32> to vector<8x32xf32>
    %230 = arith.addf %227, %229 : vector<8x32xf32>
    %231 = arith.addf %230, %218 : vector<8x32xf32>
    %c0_106 = arith.constant 0 : index
    %c0_107 = arith.constant 0 : index
    %232 = vector.load %arg20[%c0_106, %c0_107] : memref<1x32xf32, #tpu.memory_space<vmem>>, vector<1x32xf32>
    %c0_108 = arith.constant 0 : index
    %c0_109 = arith.constant 0 : index
    %233 = vector.load %arg21[%c0_108, %c0_109] : memref<1x32xf32, #tpu.memory_space<vmem>>, vector<1x32xf32>
    %cst_110 = arith.constant dense<0.000000e+00> : vector<8xf32>
    %234 = vector.multi_reduction <add>, %231, %cst_110 [1] : vector<8x32xf32> to vector<8xf32>
    %235 = vector.shape_cast %234 : vector<8xf32> to vector<8x1xf32>
    %cst_111 = arith.constant 3.200000e+01 : f32
    %236 = vector.broadcast %cst_111 : f32 to vector<8x1xf32>
    %237 = arith.divf %235, %236 : vector<8x1xf32>
    %238 = vector.broadcast %237 : vector<8x1xf32> to vector<8x32xf32>
    %239 = arith.subf %231, %238 : vector<8x32xf32>
    %240 = arith.mulf %239, %239 : vector<8x32xf32>
    %cst_112 = arith.constant dense<0.000000e+00> : vector<8xf32>
    %241 = vector.multi_reduction <add>, %240, %cst_112 [1] : vector<8x32xf32> to vector<8xf32>
    %242 = vector.shape_cast %241 : vector<8xf32> to vector<8x1xf32>
    %cst_113 = arith.constant 3.200000e+01 : f32
    %243 = vector.broadcast %cst_113 : f32 to vector<8x1xf32>
    %244 = arith.divf %242, %243 : vector<8x1xf32>
    %245 = vector.broadcast %237 : vector<8x1xf32> to vector<8x32xf32>
    %246 = arith.subf %231, %245 : vector<8x32xf32>
    %cst_114 = arith.constant 9.99999997E-7 : f32
    %247 = vector.broadcast %cst_114 : f32 to vector<8x1xf32>
    %248 = arith.addf %244, %247 : vector<8x1xf32>
    %249 = math.rsqrt %248 : vector<8x1xf32>
    %250 = vector.broadcast %249 : vector<8x1xf32> to vector<8x32xf32>
    %251 = arith.mulf %246, %250 : vector<8x32xf32>
    %252 = vector.broadcast %232 : vector<1x32xf32> to vector<8x32xf32>
    %253 = arith.mulf %251, %252 : vector<8x32xf32>
    %254 = vector.broadcast %233 : vector<1x32xf32> to vector<8x32xf32>
    %255 = arith.addf %253, %254 : vector<8x32xf32>
    %c0_115 = arith.constant 0 : index
    %c0_116 = arith.constant 0 : index
    %c0_117 = arith.constant 0 : index
    %256 = vector.load %arg22[%c0_115, %c0_116, %c0_117] : memref<1x8x32xf32, #tpu.memory_space<vmem>>, vector<1x8x32xf32>
    %257 = vector.shape_cast %256 : vector<1x8x32xf32> to vector<8x32xf32>
    %258 = vector.shape_cast %255 : vector<8x32xf32> to vector<1x8x32xf32>
    tpu.vector_store %arg22[%c0_115, %c0_116, %c0_117], %258 {strides = array<i32>} : memref<1x8x32xf32, #tpu.memory_space<vmem>>, vector<1x8x32xf32>,
    return
  }
  func.func @transform_0(%arg0: i32) -> (i32, i32, i32) {
    %c0_i32 = arith.constant 0 : i32
    %c0_i32_0 = arith.constant 0 : i32
    %c0_i32_1 = arith.constant 0 : i32
    return %arg0, %c0_i32, %c0_i32_0 : i32, i32, i32
  }
  func.func @transform_1(%arg0: i32) -> (i32, i32, i32) {
    %c0_i32 = arith.constant 0 : i32
    %c0_i32_0 = arith.constant 0 : i32
    %c0_i32_1 = arith.constant 0 : i32
    return %arg0, %c0_i32, %c0_i32_0 : i32, i32, i32
  }
  func.func @transform_2(%arg0: i32) -> (i32, i32, i32) {
    %c0_i32 = arith.constant 0 : i32
    %c0_i32_0 = arith.constant 0 : i32
    %c0_i32_1 = arith.constant 0 : i32
    return %arg0, %c0_i32, %c0_i32_0 : i32, i32, i32
  }
  func.func @transform_3(%arg0: i32) -> (i32, i32) {
    %c0_i32 = arith.constant 0 : i32
    %c0_i32_0 = arith.constant 0 : i32
    %c0_i32_1 = arith.constant 0 : i32
    return %c0_i32, %c0_i32_0 : i32, i32
  }
  func.func @transform_4(%arg0: i32) -> (i32, i32) {
    %c0_i32 = arith.constant 0 : i32
    %c0_i32_0 = arith.constant 0 : i32
    %c0_i32_1 = arith.constant 0 : i32
    return %c0_i32, %c0_i32_0 : i32, i32
  }
  func.func @transform_5(%arg0: i32) -> (i32, i32) {
    %c0_i32 = arith.constant 0 : i32
    %c0_i32_0 = arith.constant 0 : i32
    %c0_i32_1 = arith.constant 0 : i32
    return %c0_i32, %c0_i32_0 : i32, i32
  }
  func.func @transform_6(%arg0: i32) -> (i32, i32) {
    %c0_i32 = arith.constant 0 : i32
    %c0_i32_0 = arith.constant 0 : i32
    %c0_i32_1 = arith.constant 0 : i32
    return %c0_i32, %c0_i32_0 : i32, i32
  }
  func.func @transform_7(%arg0: i32) -> (i32, i32) {
    %c0_i32 = arith.constant 0 : i32
    %c0_i32_0 = arith.constant 0 : i32
    %c0_i32_1 = arith.constant 0 : i32
    return %c0_i32, %c0_i32_0 : i32, i32
  }
  func.func @transform_8(%arg0: i32) -> (i32, i32) {
    %c0_i32 = arith.constant 0 : i32
    %c0_i32_0 = arith.constant 0 : i32
    %c0_i32_1 = arith.constant 0 : i32
    return %c0_i32, %c0_i32_0 : i32, i32
  }
  func.func @transform_9(%arg0: i32) -> (i32, i32) {
    %c0_i32 = arith.constant 0 : i32
    %c0_i32_0 = arith.constant 0 : i32
    %c0_i32_1 = arith.constant 0 : i32
    return %c0_i32, %c0_i32_0 : i32, i32
  }
  func.func @transform_10(%arg0: i32) -> (i32, i32) {
    %c0_i32 = arith.constant 0 : i32
    %c0_i32_0 = arith.constant 0 : i32
    %c0_i32_1 = arith.constant 0 : i32
    return %c0_i32, %c0_i32_0 : i32, i32
  }
  func.func @transform_11(%arg0: i32) -> (i32, i32) {
    %c0_i32 = arith.constant 0 : i32
    %c0_i32_0 = arith.constant 0 : i32
    %c0_i32_1 = arith.constant 0 : i32
    return %c0_i32, %c0_i32_0 : i32, i32
  }
  func.func @transform_12(%arg0: i32) -> (i32, i32) {
    %c0_i32 = arith.constant 0 : i32
    %c0_i32_0 = arith.constant 0 : i32
    %c0_i32_1 = arith.constant 0 : i32
    return %c0_i32, %c0_i32_0 : i32, i32
  }
  func.func @transform_13(%arg0: i32) -> (i32, i32) {
    %c0_i32 = arith.constant 0 : i32
    %c0_i32_0 = arith.constant 0 : i32
    %c0_i32_1 = arith.constant 0 : i32
    return %c0_i32, %c0_i32_0 : i32, i32
  }
  func.func @transform_14(%arg0: i32) -> (i32, i32) {
    %c0_i32 = arith.constant 0 : i32
    %c0_i32_0 = arith.constant 0 : i32
    %c0_i32_1 = arith.constant 0 : i32
    return %c0_i32, %c0_i32_0 : i32, i32
  }
  func.func @transform_15(%arg0: i32) -> (i32, i32) {
    %c0_i32 = arith.constant 0 : i32
    %c0_i32_0 = arith.constant 0 : i32
    %c0_i32_1 = arith.constant 0 : i32
    return %c0_i32, %c0_i32_0 : i32, i32
  }
  func.func @transform_16(%arg0: i32) -> (i32, i32) {
    %c0_i32 = arith.constant 0 : i32
    %c0_i32_0 = arith.constant 0 : i32
    %c0_i32_1 = arith.constant 0 : i32
    return %c0_i32, %c0_i32_0 : i32, i32
  }
  func.func @transform_17(%arg0: i32) -> (i32, i32) {
    %c0_i32 = arith.constant 0 : i32
    %c0_i32_0 = arith.constant 0 : i32
    %c0_i32_1 = arith.constant 0 : i32
    return %c0_i32, %c0_i32_0 : i32, i32
  }
  func.func @transform_18(%arg0: i32) -> (i32, i32) {
    %c0_i32 = arith.constant 0 : i32
    %c0_i32_0 = arith.constant 0 : i32
    %c0_i32_1 = arith.constant 0 : i32
    return %c0_i32, %c0_i32_0 : i32, i32
  }
  func.func @transform_19(%arg0: i32) -> (i32, i32) {
    %c0_i32 = arith.constant 0 : i32
    %c0_i32_0 = arith.constant 0 : i32
    %c0_i32_1 = arith.constant 0 : i32
    return %c0_i32, %c0_i32_0 : i32, i32
  }
  func.func @transform_20(%arg0: i32) -> (i32, i32) {
    %c0_i32 = arith.constant 0 : i32
    %c0_i32_0 = arith.constant 0 : i32
    %c0_i32_1 = arith.constant 0 : i32
    return %c0_i32, %c0_i32_0 : i32, i32
  }
  func.func @transform_21(%arg0: i32) -> (i32, i32, i32) {
    %c0_i32 = arith.constant 0 : i32
    %c0_i32_0 = arith.constant 0 : i32
    %c0_i32_1 = arith.constant 0 : i32
    return %arg0, %c0_i32, %c0_i32_0 : i32, i32, i32
  }
  func.func @transform_22(%arg0: i32) -> (i32, i32, i32) {
    %c0_i32 = arith.constant 0 : i32
    %c0_i32_0 = arith.constant 0 : i32
    %c0_i32_1 = arith.constant 0 : i32
    return %arg0, %c0_i32, %c0_i32_0 : i32, i32, i32
  }
  func.func @transform_23(%arg0: i32) -> (i32, i32, i32) {
    %c0_i32 = arith.constant 0 : i32
    %c0_i32_0 = arith.constant 0 : i32
    %c0_i32_1 = arith.constant 0 : i32
    return %arg0, %c0_i32, %c0_i32_0 : i32, i32, i32
  }
}

</mosaic_0001>

<llo_original>
// kernel: tpu_custom_call.1
$region0: #{tpu_custom_call.1}
  #allocation0 [shape = 'u32[]', space=smem, size = 0x4, offset = 0x4, fixed_abs, tag = 'smem constant byte address 0x4 - core index']
  #allocation1 [shape = 'u32[144,128]{1,0:T(1,128)}', space=vmem, size = 0x12000, scoped, tag = 'internal scratch']
  %s0 = inlined_call_operand.hbm [shape: f32[2,8,32], index: 0, kind: input, shape index: {}]
  %s1 = inlined_call_operand.hbm [shape: f32[2,8,32], index: 1, kind: input, shape index: {}]
  %s2 = inlined_call_operand.vmem [shape: f32[2,16,32], index: 2, kind: input, shape index: {}]
  %s3 = inlined_call_operand.vmem [shape: f32[32,32], index: 3, kind: input, shape index: {}]
  %s4 = inlined_call_operand.vmem [shape: f32[32,32], index: 4, kind: input, shape index: {}]
  %s5 = inlined_call_operand.hbm [shape: f32[32,32], index: 5, kind: input, shape index: {}]
  %s6 = inlined_call_operand.hbm [shape: f32[32,32], index: 6, kind: input, shape index: {}]
  %s7 = inlined_call_operand.hbm [shape: f32[1,32], index: 7, kind: input, shape index: {}]
  %s8 = inlined_call_operand.hbm [shape: f32[1,32], index: 8, kind: input, shape index: {}]
  %s9 = inlined_call_operand.vmem [shape: f32[32,32], index: 9, kind: input, shape index: {}]
  %s10 = inlined_call_operand.hbm [shape: f32[32,32], index: 10, kind: input, shape index: {}]
  %s11 = inlined_call_operand.hbm [shape: f32[32,32], index: 11, kind: input, shape index: {}]
  %s12 = inlined_call_operand.hbm [shape: f32[32,32], index: 12, kind: input, shape index: {}]
  %s13 = inlined_call_operand.hbm [shape: f32[1,32], index: 13, kind: input, shape index: {}]
  %s14 = inlined_call_operand.hbm [shape: f32[1,32], index: 14, kind: input, shape index: {}]
  %s15 = inlined_call_operand.hbm [shape: f32[32,64], index: 15, kind: input, shape index: {}]
  %s16 = inlined_call_operand.hbm [shape: f32[1,64], index: 16, kind: input, shape index: {}]
  %s17 = inlined_call_operand.vmem [shape: f32[64,32], index: 17, kind: input, shape index: {}]
  %s18 = inlined_call_operand.vmem [shape: f32[1,32], index: 18, kind: input, shape index: {}]
  %s19 = inlined_call_operand.vmem [shape: f32[1,32], index: 19, kind: input, shape index: {}]
  %s20 = inlined_call_operand.vmem [shape: f32[1,32], index: 20, kind: input, shape index: {}]
  %s21 = inlined_call_operand.hbm [shape: f32[2,8,32], index: 21, kind: output, shape index: {0}]
  %s22 = inlined_call_operand.hbm [shape: f32[2,8,32], index: 22, kind: output, shape index: {1}]
  %s23 = inlined_call_operand.hbm [shape: f32[2,8,64], index: 23, kind: output, shape index: {2}]
  %24 = xla_tuple %s21, %s22, %s23
  %s25 = sld [smem:[#allocation0]]
  $region185: #{tpu_custom_call.1} parent=0
    _
  %s27 = ssub.s32 1, %s25
  %s28 = scalar_select 0, %s27, %s25
  $region1: #{tpu_custom_call.1} parent=0
    #allocation2 [shape = 'u8[8192]{0}', space=vmem, size = 0x2000, scoped, tag = 'input window, operand 0']
    #allocation3 [shape = 's32[2]{0}', space=sflag, size = 0x8, scoped, tag = 'scoped memory for tpu_custom_call.1']
    #allocation4 [shape = 's32[2]{0}', space=sflag, size = 0x8, scoped, tag = 'scoped memory for tpu_custom_call.1']
    #allocation5 [shape = 'u8[8192]{0}', space=vmem, size = 0x2000, scoped, tag = 'input window, operand 1']
    #allocation6 [shape = 's32[2]{0}', space=sflag, size = 0x8, scoped, tag = 'scoped memory for tpu_custom_call.1']
    #allocation7 [shape = 'u8[16384]{0}', space=vmem, size = 0x4000, scoped, tag = 'input window, operand 5, single buffered']
    #allocation8 [shape = 'u8[16384]{0}', space=vmem, size = 0x4000, scoped, tag = 'input window, operand 6, single buffered']
    #allocation9 [shape = 's32[1]{0}', space=sflag, size = 0x4, scoped, tag = 'scoped memory for tpu_custom_call.1']
    #allocation10 [shape = 'u8[512]{0}', space=vmem, size = 0x400, scoped, tag = 'input window, operand 7, single buffered']
    #allocation11 [shape = 'u8[512]{0}', space=vmem, size = 0x400, scoped, tag = 'input window, operand 8, single buffered']
    #allocation12 [shape = 's32[1]{0}', space=sflag, size = 0x4, scoped, tag = 'scoped memory for tpu_custom_call.1']
    #allocation13 [shape = 'u8[16384]{0}', space=vmem, size = 0x4000, scoped, tag = 'input window, operand 10, single buffered']
    #allocation14 [shape = 'u8[16384]{0}', space=vmem, size = 0x4000, scoped, tag = 'input window, operand 11, single buffered']
    #allocation15 [shape = 's32[1]{0}', space=sflag, size = 0x4, scoped, tag = 'scoped memory for tpu_custom_call.1']
    #allocation16 [shape = 'u8[16384]{0}', space=vmem, size = 0x4000, scoped, tag = 'input window, operand 12, single buffered']
    #allocation17 [shape = 'u8[512]{0}', space=vmem, size = 0x400, scoped, tag = 'input window, operand 13, single buffered']
    #allocation18 [shape = 's32[1]{0}', space=sflag, size = 0x4, scoped, tag = 'scoped memory for tpu_custom_call.1']
    #allocation19 [shape = 'u8[512]{0}', space=vmem, size = 0x400, scoped, tag = 'input window, operand 14, single buffered']
    #allocation20 [shape = 'u8[16384]{0}', space=vmem, size = 0x4000, scoped, tag = 'input window, operand 15, single buffered']
    #allocation21 [shape = 's32[1]{0}', space=sflag, size = 0x4, scoped, tag = 'scoped memory for tpu_custom_call.1']
    #allocation22 [shape = 'u8[512]{0}', space=vmem, size = 0x400, scoped, tag = 'input window, operand 16, single buffered']
    #allocation23 [shape = 'u8[8192]{0}', space=vmem, size = 0x2000, scoped, tag = 'output window, operand 0']
    #allocation24 [shape = 'u8[8192]{0}', space=vmem, size = 0x2000, scoped, tag = 'output window, operand 1']
    #allocation25 [shape = 's32[2]{0}', space=sflag, size = 0x8, scoped, tag = 'scoped memory for tpu_custom_call.1']
    #allocation26 [shape = 'u8[8192]{0}', space=vmem, size = 0x2000, scoped, tag = 'output window, operand 2']
    %29 = vsyncpa [#allocation3], 0
    %s30 = scalar_lea.sflag [#allocation3], 1
    %31 = vsyncpa %s30, 0
    %32 = vsyncpa [#allocation6], 0
    %s33 = scalar_lea.sflag [#allocation6], 1
    %34 = vsyncpa %s33, 0
    %35 = vsyncpa [#allocation9], 0
    %36 = vsyncpa [#allocation12], 0
    %37 = vsyncpa [#allocation15], 0
    %38 = vsyncpa [#allocation18], 0
    %39 = vsyncpa [#allocation21], 0
    %40 = vsyncpa [#allocation4], 0
    %s41 = scalar_lea.sflag [#allocation4], 1
    %42 = vsyncpa %s41, 0
    %43 = vsyncpa [#allocation25], 0
    %s44 = scalar_lea.sflag [#allocation25], 1
    %45 = vsyncpa %s44, 0
    loop: start=0, step=1, limit=4
    $region2: #{tpu_custom_call.1} parent=1 // loop_pre_header
      _
    $region3: #{tpu_custom_call.1} parent=1 // loop_header
      %s47 = sphi 0, %s51
      %p48 = scmp.ge.s32.totalorder %s47, 4
      %s57 = sphi 0, %s59
      %s60 = sphi 0, %s57
      %s61 = sphi 0, %s60
      %s77 = sphi 0, %s61
      %s83 = sphi 0, %s85
      %s86 = sphi 0, %s83
      %s87 = sphi 0, %s86
      %s103 = sphi 0, %s87
      %s109 = sphi 0, %s111
      %s112 = sphi 0, %s109
      %s113 = sphi 0, %s112
      %s129 = sphi 0, %s113
      %s133 = sphi 0, %s133
      %s135 = sphi 0, %s133
      %s136 = sphi 0, %s135
      %s150 = sphi 0, %s136
      %s154 = sphi 0, %s154
      %s156 = sphi 0, %s154
      %s157 = sphi 0, %s156
      %s171 = sphi 0, %s157
      %s175 = sphi 0, %s175
      %s177 = sphi 0, %s175
      %s178 = sphi 0, %s177
      %s192 = sphi 0, %s178
      %s196 = sphi 0, %s196
      %s198 = sphi 0, %s196
      %s199 = sphi 0, %s198
      %s213 = sphi 0, %s199
      %s217 = sphi 0, %s217
      %s219 = sphi 0, %s217
      %s220 = sphi 0, %s219
      %s234 = sphi 0, %s220
      %s238 = sphi 0, %s238
      %s240 = sphi 0, %s238
      %s241 = sphi 0, %s240
      %s255 = sphi 0, %s241
      %s259 = sphi 0, %s259
      %s261 = sphi 0, %s259
      %s262 = sphi 0, %s261
      %s276 = sphi 0, %s262
      %s280 = sphi 0, %s280
      %s282 = sphi 0, %s280
      %s283 = sphi 0, %s282
      %s297 = sphi 0, %s283
      %s301 = sphi 0, %s301
      %s303 = sphi 0, %s301
      %s304 = sphi 0, %s303
      %s318 = sphi 0, %s304
      %s322 = sphi 0, %s322
      %s324 = sphi 0, %s322
      %s325 = sphi 0, %s324
      %s339 = sphi 0, %s325
      %s343 = sphi 0, %s343
      %s345 = sphi 0, %s343
      %s346 = sphi 0, %s345
      %s360 = sphi 0, %s346
      %s364 = sphi 0, %s364
      %s366 = sphi 0, %s364
      %s367 = sphi 0, %s366
      %s381 = sphi 0, %s367
      %s385 = sphi 0, %s385
      %s387 = sphi 0, %s385
      %s388 = sphi 0, %s387
      %s402 = sphi 0, %s388
      %s406 = sphi 0, %s406
      %s408 = sphi 0, %s406
      %s409 = sphi 0, %s408
      %s423 = sphi 0, %s409
      %s427 = sphi 0, %s427
      %s429 = sphi 0, %s427
      %s430 = sphi 0, %s429
      %s444 = sphi 0, %s430
      %s448 = sphi 0, %s448
      %s450 = sphi 0, %s448
      %s451 = sphi 0, %s450
      %s465 = sphi 0, %s451
      %s469 = sphi 0, %s469
      %s471 = sphi 0, %s469
      %s472 = sphi 0, %s471
      %s486 = sphi 0, %s472
      %s490 = sphi 0, %s490
      %s492 = sphi 0, %s490
      %s493 = sphi 0, %s492
      %s507 = sphi 0, %s493
      %s513 = sphi 0, %s515
      %s516 = sphi 0, %s513
      %s517 = sphi 0, %s516
      %s533 = sphi 0, %s517
      %s539 = sphi 0, %s541
      %s542 = sphi 0, %s539
      %s543 = sphi 0, %s542
      %s559 = sphi 0, %s543
      %s565 = sphi 0, %s567
      %s568 = sphi 0, %s565
      %s569 = sphi 0, %s568
      %s585 = sphi 0, %s569
    $region4: #{tpu_custom_call.1} parent=1 // loop_header_branch
      %50 = sbr.rel (%p48) target = $region8
    $region5: #{tpu_custom_call.1} parent=1 // loop_body
      %s52 = ssub.s32 %s47, 1
      %s53 = ssub.s32 %s47, 2
      %s54 = sadd.s32 %s47, 1
      %s55 = ssub.s32 %s47, %s54
      %p56 = scmp.eq.s32.totalorder %s55, 0
      %s58 = sadd.s32 %s57, 1
      %s59 = scalar_select %p56, %s57, %s58
      %p62 = pneg %p56
      %p63 = scmp.eq.s32.totalorder %s47, 1
      %p64 = por %p62, %p63
      %p65 = scmp.ne.s32.totalorder %s57, %s60
      %p66 = scmp.eq.s32.totalorder %s47, 0
      %p67 = por %p65, %p66
      %p68 = scmp.ne.s32.totalorder %s57, %s60
      %p69 = scmp.eq.s32.totalorder %s52, 1
      %p70 = por %p68, %p69
      %p71 = scmp.ne.s32.totalorder %s60, %s61
      %p72 = scmp.eq.s32.totalorder %s52, 0
      %p73 = por %p71, %p72
      %p74 = scmp.ne.s32.totalorder %s60, %s61
      %p75 = scmp.eq.s32.totalorder %s53, 1
      %p76 = por %p74, %p75
      %p78 = scmp.ne.s32.totalorder %s61, %s77
      %p79 = scmp.eq.s32.totalorder %s53, 0
      %p80 = por %p78, %p79
      %s81 = ssub.s32 %s47, %s54
      %p82 = scmp.eq.s32.totalorder %s81, 0
      %s84 = sadd.s32 %s83, 1
      %s85 = scalar_select %p82, %s83, %s84
      %p88 = pneg %p82
      %p89 = scmp.eq.s32.totalorder %s47, 1
      %p90 = por %p88, %p89
      %p91 = scmp.ne.s32.totalorder %s83, %s86
      %p92 = scmp.eq.s32.totalorder %s47, 0
      %p93 = por %p91, %p92
      %p94 = scmp.ne.s32.totalorder %s83, %s86
      %p95 = scmp.eq.s32.totalorder %s52, 1
      %p96 = por %p94, %p95
      %p97 = scmp.ne.s32.totalorder %s86, %s87
      %p98 = scmp.eq.s32.totalorder %s52, 0
      %p99 = por %p97, %p98
      %p100 = scmp.ne.s32.totalorder %s86, %s87
      %p101 = scmp.eq.s32.totalorder %s53, 1
      %p102 = por %p100, %p101
      %p104 = scmp.ne.s32.totalorder %s87, %s103
      %p105 = scmp.eq.s32.totalorder %s53, 0
      %p106 = por %p104, %p105
      %s107 = ssub.s32 %s47, %s54
      %p108 = scmp.eq.s32.totalorder %s107, 0
      %s110 = sadd.s32 %s109, 1
      %s111 = scalar_select %p108, %s109, %s110
      %p114 = pneg %p108
      %p115 = scmp.eq.s32.totalorder %s47, 1
      %p116 = por %p114, %p115
      %p117 = scmp.ne.s32.totalorder %s109, %s112
      %p118 = scmp.eq.s32.totalorder %s47, 0
      %p119 = por %p117, %p118
      %p120 = scmp.ne.s32.totalorder %s109, %s112
      %p121 = scmp.eq.s32.totalorder %s52, 1
      %p122 = por %p120, %p121
      %p123 = scmp.ne.s32.totalorder %s112, %s113
      %p124 = scmp.eq.s32.totalorder %s52, 0
      %p125 = por %p123, %p124
      %p126 = scmp.ne.s32.totalorder %s112, %s113
      %p127 = scmp.eq.s32.totalorder %s53, 1
      %p128 = por %p126, %p127
      %p130 = scmp.ne.s32.totalorder %s113, %s129
      %p131 = scmp.eq.s32.totalorder %s53, 0
      %p132 = por %p130, %p131
      %s134 = sadd.s32 %s133, 1
      %p137 = scmp.eq.s32.totalorder %s47, 1
      %p138 = scmp.ne.s32.totalorder %s133, %s135
      %p139 = scmp.eq.s32.totalorder %s47, 0
      %p140 = por %p138, %p139
      %p141 = scmp.ne.s32.totalorder %s133, %s135
      %p142 = scmp.eq.s32.totalorder %s52, 1
      %p143 = por %p141, %p142
      %p144 = scmp.ne.s32.totalorder %s135, %s136
      %p145 = scmp.eq.s32.totalorder %s52, 0
      %p146 = por %p144, %p145
      %p147 = scmp.ne.s32.totalorder %s135, %s136
      %p148 = scmp.eq.s32.totalorder %s53, 1
      %p149 = por %p147, %p148
      %p151 = scmp.ne.s32.totalorder %s136, %s150
      %p152 = scmp.eq.s32.totalorder %s53, 0
      %p153 = por %p151, %p152
      %s155 = sadd.s32 %s154, 1
      %p158 = scmp.eq.s32.totalorder %s47, 1
      %p159 = scmp.ne.s32.totalorder %s154, %s156
      %p160 = scmp.eq.s32.totalorder %s47, 0
      %p161 = por %p159, %p160
      %p162 = scmp.ne.s32.totalorder %s154, %s156
      %p163 = scmp.eq.s32.totalorder %s52, 1
      %p164 = por %p162, %p163
      %p165 = scmp.ne.s32.totalorder %s156, %s157
      %p166 = scmp.eq.s32.totalorder %s52, 0
      %p167 = por %p165, %p166
      %p168 = scmp.ne.s32.totalorder %s156, %s157
      %p169 = scmp.eq.s32.totalorder %s53, 1
      %p170 = por %p168, %p169
      %p172 = scmp.ne.s32.totalorder %s157, %s171
      %p173 = scmp.eq.s32.totalorder %s53, 0
      %p174 = por %p172, %p173
      %s176 = sadd.s32 %s175, 1
      %p179 = scmp.eq.s32.totalorder %s47, 1
      %p180 = scmp.ne.s32.totalorder %s175, %s177
      %p181 = scmp.eq.s32.totalorder %s47, 0
      %p182 = por %p180, %p181
      %p183 = scmp.ne.s32.totalorder %s175, %s177
      %p184 = scmp.eq.s32.totalorder %s52, 1
      %p185 = por %p183, %p184
      %p186 = scmp.ne.s32.totalorder %s177, %s178
      %p187 = scmp.eq.s32.totalorder %s52, 0
      %p188 = por %p186, %p187
      %p189 = scmp.ne.s32.totalorder %s177, %s178
      %p190 = scmp.eq.s32.totalorder %s53, 1
      %p191 = por %p189, %p190
      %p193 = scmp.ne.s32.totalorder %s178, %s192
      %p194 = scmp.eq.s32.totalorder %s53, 0
      %p195 = por %p193, %p194
      %s197 = sadd.s32 %s196, 1
      %p200 = scmp.eq.s32.totalorder %s47, 1
      %p201 = scmp.ne.s32.totalorder %s196, %s198
      %p202 = scmp.eq.s32.totalorder %s47, 0
      %p203 = por %p201, %p202
      %p204 = scmp.ne.s32.totalorder %s196, %s198
      %p205 = scmp.eq.s32.totalorder %s52, 1
      %p206 = por %p204, %p205
      %p207 = scmp.ne.s32.totalorder %s198, %s199
      %p208 = scmp.eq.s32.totalorder %s52, 0
      %p209 = por %p207, %p208
      %p210 = scmp.ne.s32.totalorder %s198, %s199
      %p211 = scmp.eq.s32.totalorder %s53, 1
      %p212 = por %p210, %p211
      %p214 = scmp.ne.s32.totalorder %s199, %s213
      %p215 = scmp.eq.s32.totalorder %s53, 0
      %p216 = por %p214, %p215
      %s218 = sadd.s32 %s217, 1
      %p221 = scmp.eq.s32.totalorder %s47, 1
      %p222 = scmp.ne.s32.totalorder %s217, %s219
      %p223 = scmp.eq.s32.totalorder %s47, 0
      %p224 = por %p222, %p223
      %p225 = scmp.ne.s32.totalorder %s217, %s219
      %p226 = scmp.eq.s32.totalorder %s52, 1
      %p227 = por %p225, %p226
      %p228 = scmp.ne.s32.totalorder %s219, %s220
      %p229 = scmp.eq.s32.totalorder %s52, 0
      %p230 = por %p228, %p229
      %p231 = scmp.ne.s32.totalorder %s219, %s220
      %p232 = scmp.eq.s32.totalorder %s53, 1
      %p233 = por %p231, %p232
      %p235 = scmp.ne.s32.totalorder %s220, %s234
      %p236 = scmp.eq.s32.totalorder %s53, 0
      %p237 = por %p235, %p236
      %s239 = sadd.s32 %s238, 1
      %p242 = scmp.eq.s32.totalorder %s47, 1
      %p243 = scmp.ne.s32.totalorder %s238, %s240
      %p244 = scmp.eq.s32.totalorder %s47, 0
      %p245 = por %p243, %p244
      %p246 = scmp.ne.s32.totalorder %s238, %s240
      %p247 = scmp.eq.s32.totalorder %s52, 1
      %p248 = por %p246, %p247
      %p249 = scmp.ne.s32.totalorder %s240, %s241
      %p250 = scmp.eq.s32.totalorder %s52, 0
      %p251 = por %p249, %p250
      %p252 = scmp.ne.s32.totalorder %s240, %s241
      %p253 = scmp.eq.s32.totalorder %s53, 1
      %p254 = por %p252, %p253
      %p256 = scmp.ne.s32.totalorder %s241, %s255
      %p257 = scmp.eq.s32.totalorder %s53, 0
      %p258 = por %p256, %p257
      %s260 = sadd.s32 %s259, 1
      %p263 = scmp.eq.s32.totalorder %s47, 1
      %p264 = scmp.ne.s32.totalorder %s259, %s261
      %p265 = scmp.eq.s32.totalorder %s47, 0
      %p266 = por %p264, %p265
      %p267 = scmp.ne.s32.totalorder %s259, %s261
      %p268 = scmp.eq.s32.totalorder %s52, 1
      %p269 = por %p267, %p268
      %p270 = scmp.ne.s32.totalorder %s261, %s262
      %p271 = scmp.eq.s32.totalorder %s52, 0
      %p272 = por %p270, %p271
      %p273 = scmp.ne.s32.totalorder %s261, %s262
      %p274 = scmp.eq.s32.totalorder %s53, 1
      %p275 = por %p273, %p274
      %p277 = scmp.ne.s32.totalorder %s262, %s276
      %p278 = scmp.eq.s32.totalorder %s53, 0
      %p279 = por %p277, %p278
      %s281 = sadd.s32 %s280, 1
      %p284 = scmp.eq.s32.totalorder %s47, 1
      %p285 = scmp.ne.s32.totalorder %s280, %s282
      %p286 = scmp.eq.s32.totalorder %s47, 0
      %p287 = por %p285, %p286
      %p288 = scmp.ne.s32.totalorder %s280, %s282
      %p289 = scmp.eq.s32.totalorder %s52, 1
      %p290 = por %p288, %p289
      %p291 = scmp.ne.s32.totalorder %s282, %s283
      %p292 = scmp.eq.s32.totalorder %s52, 0
      %p293 = por %p291, %p292
      %p294 = scmp.ne.s32.totalorder %s282, %s283
      %p295 = scmp.eq.s32.totalorder %s53, 1
      %p296 = por %p294, %p295
      %p298 = scmp.ne.s32.totalorder %s283, %s297
      %p299 = scmp.eq.s32.totalorder %s53, 0
      %p300 = por %p298, %p299
      %s302 = sadd.s32 %s301, 1
      %p305 = scmp.eq.s32.totalorder %s47, 1
      %p306 = scmp.ne.s32.totalorder %s301, %s303
      %p307 = scmp.eq.s32.totalorder %s47, 0
      %p308 = por %p306, %p307
      %p309 = scmp.ne.s32.totalorder %s301, %s303
      %p310 = scmp.eq.s32.totalorder %s52, 1
      %p311 = por %p309, %p310
      %p312 = scmp.ne.s32.totalorder %s303, %s304
      %p313 = scmp.eq.s32.totalorder %s52, 0
      %p314 = por %p312, %p313
      %p315 = scmp.ne.s32.totalorder %s303, %s304
      %p316 = scmp.eq.s32.totalorder %s53, 1
      %p317 = por %p315, %p316
      %p319 = scmp.ne.s32.totalorder %s304, %s318
      %p320 = scmp.eq.s32.totalorder %s53, 0
      %p321 = por %p319, %p320
      %s323 = sadd.s32 %s322, 1
      %p326 = scmp.eq.s32.totalorder %s47, 1
      %p327 = scmp.ne.s32.totalorder %s322, %s324
      %p328 = scmp.eq.s32.totalorder %s47, 0
      %p329 = por %p327, %p328
      %p330 = scmp.ne.s32.totalorder %s322, %s324
      %p331 = scmp.eq.s32.totalorder %s52, 1
      %p332 = por %p330, %p331
      %p333 = scmp.ne.s32.totalorder %s324, %s325
      %p334 = scmp.eq.s32.totalorder %s52, 0
      %p335 = por %p333, %p334
      %p336 = scmp.ne.s32.totalorder %s324, %s325
      %p337 = scmp.eq.s32.totalorder %s53, 1
      %p338 = por %p336, %p337
      %p340 = scmp.ne.s32.totalorder %s325, %s339
      %p341 = scmp.eq.s32.totalorder %s53, 0
      %p342 = por %p340, %p341
      %s344 = sadd.s32 %s343, 1
      %p347 = scmp.eq.s32.totalorder %s47, 1
      %p348 = scmp.ne.s32.totalorder %s343, %s345
      %p349 = scmp.eq.s32.totalorder %s47, 0
      %p350 = por %p348, %p349
      %p351 = scmp.ne.s32.totalorder %s343, %s345
      %p352 = scmp.eq.s32.totalorder %s52, 1
      %p353 = por %p351, %p352
      %p354 = scmp.ne.s32.totalorder %s345, %s346
      %p355 = scmp.eq.s32.totalorder %s52, 0
      %p356 = por %p354, %p355
      %p357 = scmp.ne.s32.totalorder %s345, %s346
      %p358 = scmp.eq.s32.totalorder %s53, 1
      %p359 = por %p357, %p358
      %p361 = scmp.ne.s32.totalorder %s346, %s360
      %p362 = scmp.eq.s32.totalorder %s53, 0
      %p363 = por %p361, %p362
      %s365 = sadd.s32 %s364, 1
      %p368 = scmp.eq.s32.totalorder %s47, 1
      %p369 = scmp.ne.s32.totalorder %s364, %s366
      %p370 = scmp.eq.s32.totalorder %s47, 0
      %p371 = por %p369, %p370
      %p372 = scmp.ne.s32.totalorder %s364, %s366
      %p373 = scmp.eq.s32.totalorder %s52, 1
      %p374 = por %p372, %p373
      %p375 = scmp.ne.s32.totalorder %s366, %s367
      %p376 = scmp.eq.s32.totalorder %s52, 0
      %p377 = por %p375, %p376
      %p378 = scmp.ne.s32.totalorder %s366, %s367
      %p379 = scmp.eq.s32.totalorder %s53, 1
      %p380 = por %p378, %p379
      %p382 = scmp.ne.s32.totalorder %s367, %s381
      %p383 = scmp.eq.s32.totalorder %s53, 0
      %p384 = por %p382, %p383
      %s386 = sadd.s32 %s385, 1
      %p389 = scmp.eq.s32.totalorder %s47, 1
      %p390 = scmp.ne.s32.totalorder %s385, %s387
      %p391 = scmp.eq.s32.totalorder %s47, 0
      %p392 = por %p390, %p391
      %p393 = scmp.ne.s32.totalorder %s385, %s387
      %p394 = scmp.eq.s32.totalorder %s52, 1
      %p395 = por %p393, %p394
      %p396 = scmp.ne.s32.totalorder %s387, %s388
      %p397 = scmp.eq.s32.totalorder %s52, 0
      %p398 = por %p396, %p397
      %p399 = scmp.ne.s32.totalorder %s387, %s388
      %p400 = scmp.eq.s32.totalorder %s53, 1
      %p401 = por %p399, %p400
      %p403 = scmp.ne.s32.totalorder %s388, %s402
      %p404 = scmp.eq.s32.totalorder %s53, 0
      %p405 = por %p403, %p404
      %s407 = sadd.s32 %s406, 1
      %p410 = scmp.eq.s32.totalorder %s47, 1
      %p411 = scmp.ne.s32.totalorder %s406, %s408
      %p412 = scmp.eq.s32.totalorder %s47, 0
      %p413 = por %p411, %p412
      %p414 = scmp.ne.s32.totalorder %s406, %s408
      %p415 = scmp.eq.s32.totalorder %s52, 1
      %p416 = por %p414, %p415
      %p417 = scmp.ne.s32.totalorder %s408, %s409
      %p418 = scmp.eq.s32.totalorder %s52, 0
      %p419 = por %p417, %p418
      %p420 = scmp.ne.s32.totalorder %s408, %s409
      %p421 = scmp.eq.s32.totalorder %s53, 1
      %p422 = por %p420, %p421
      %p424 = scmp.ne.s32.totalorder %s409, %s423
      %p425 = scmp.eq.s32.totalorder %s53, 0
      %p426 = por %p424, %p425
      %s428 = sadd.s32 %s427, 1
      %p431 = scmp.eq.s32.totalorder %s47, 1
      %p432 = scmp.ne.s32.totalorder %s427, %s429
      %p433 = scmp.eq.s32.totalorder %s47, 0
      %p434 = por %p432, %p433
      %p435 = scmp.ne.s32.totalorder %s427, %s429
      %p436 = scmp.eq.s32.totalorder %s52, 1
      %p437 = por %p435, %p436
      %p438 = scmp.ne.s32.totalorder %s429, %s430
      %p439 = scmp.eq.s32.totalorder %s52, 0
      %p440 = por %p438, %p439
      %p441 = scmp.ne.s32.totalorder %s429, %s430
      %p442 = scmp.eq.s32.totalorder %s53, 1
      %p443 = por %p441, %p442
      %p445 = scmp.ne.s32.totalorder %s430, %s444
      %p446 = scmp.eq.s32.totalorder %s53, 0
      %p447 = por %p445, %p446
      %s449 = sadd.s32 %s448, 1
      %p452 = scmp.eq.s32.totalorder %s47, 1
      %p453 = scmp.ne.s32.totalorder %s448, %s450
      %p454 = scmp.eq.s32.totalorder %s47, 0
      %p455 = por %p453, %p454
      %p456 = scmp.ne.s32.totalorder %s448, %s450
      %p457 = scmp.eq.s32.totalorder %s52, 1
      %p458 = por %p456, %p457
      %p459 = scmp.ne.s32.totalorder %s450, %s451
      %p460 = scmp.eq.s32.totalorder %s52, 0
      %p461 = por %p459, %p460
      %p462 = scmp.ne.s32.totalorder %s450, %s451
      %p463 = scmp.eq.s32.totalorder %s53, 1
      %p464 = por %p462, %p463
      %p466 = scmp.ne.s32.totalorder %s451, %s465
      %p467 = scmp.eq.s32.totalorder %s53, 0
      %p468 = por %p466, %p467
      %s470 = sadd.s32 %s469, 1
      %p473 = scmp.eq.s32.totalorder %s47, 1
      %p474 = scmp.ne.s32.totalorder %s469, %s471
      %p475 = scmp.eq.s32.totalorder %s47, 0
      %p476 = por %p474, %p475
      %p477 = scmp.ne.s32.totalorder %s469, %s471
      %p478 = scmp.eq.s32.totalorder %s52, 1
      %p479 = por %p477, %p478
      %p480 = scmp.ne.s32.totalorder %s471, %s472
      %p481 = scmp.eq.s32.totalorder %s52, 0
      %p482 = por %p480, %p481
      %p483 = scmp.ne.s32.totalorder %s471, %s472
      %p484 = scmp.eq.s32.totalorder %s53, 1
      %p485 = por %p483, %p484
      %p487 = scmp.ne.s32.totalorder %s472, %s486
      %p488 = scmp.eq.s32.totalorder %s53, 0
      %p489 = por %p487, %p488
      %s491 = sadd.s32 %s490, 1
      %p494 = scmp.eq.s32.totalorder %s47, 1
      %p495 = scmp.ne.s32.totalorder %s490, %s492
      %p496 = scmp.eq.s32.totalorder %s47, 0
      %p497 = por %p495, %p496
      %p498 = scmp.ne.s32.totalorder %s490, %s492
      %p499 = scmp.eq.s32.totalorder %s52, 1
      %p500 = por %p498, %p499
      %p501 = scmp.ne.s32.totalorder %s492, %s493
      %p502 = scmp.eq.s32.totalorder %s52, 0
      %p503 = por %p501, %p502
      %p504 = scmp.ne.s32.totalorder %s492, %s493
      %p505 = scmp.eq.s32.totalorder %s53, 1
      %p506 = por %p504, %p505
      %p508 = scmp.ne.s32.totalorder %s493, %s507
      %p509 = scmp.eq.s32.totalorder %s53, 0
      %p510 = por %p508, %p509
      %s511 = ssub.s32 %s47, %s54
      %p512 = scmp.eq.s32.totalorder %s511, 0
      %s514 = sadd.s32 %s513, 1
      %s515 = scalar_select %p512, %s513, %s514
      %p518 = pneg %p512
      %p519 = scmp.eq.s32.totalorder %s47, 1
      %p520 = por %p518, %p519
      %p521 = scmp.ne.s32.totalorder %s513, %s516
      %p522 = scmp.eq.s32.totalorder %s47, 0
      %p523 = por %p521, %p522
      %p524 = scmp.ne.s32.totalorder %s513, %s516
      %p525 = scmp.eq.s32.totalorder %s52, 1
      %p526 = por %p524, %p525
      %p527 = scmp.ne.s32.totalorder %s516, %s517
      %p528 = scmp.eq.s32.totalorder %s52, 0
      %p529 = por %p527, %p528
      %p530 = scmp.ne.s32.totalorder %s516, %s517
      %p531 = scmp.eq.s32.totalorder %s53, 1
      %p532 = por %p530, %p531
      %p534 = scmp.ne.s32.totalorder %s517, %s533
      %p535 = scmp.eq.s32.totalorder %s53, 0
      %p536 = por %p534, %p535
      %s537 = ssub.s32 %s47, %s54
      %p538 = scmp.eq.s32.totalorder %s537, 0
      %s540 = sadd.s32 %s539, 1
      %s541 = scalar_select %p538, %s539, %s540
      %p544 = pneg %p538
      %p545 = scmp.eq.s32.totalorder %s47, 1
      %p546 = por %p544, %p545
      %p547 = scmp.ne.s32.totalorder %s539, %s542
      %p548 = scmp.eq.s32.totalorder %s47, 0
      %p549 = por %p547, %p548
      %p550 = scmp.ne.s32.totalorder %s539, %s542
      %p551 = scmp.eq.s32.totalorder %s52, 1
      %p552 = por %p550, %p551
      %p553 = scmp.ne.s32.totalorder %s542, %s543
      %p554 = scmp.eq.s32.totalorder %s52, 0
      %p555 = por %p553, %p554
      %p556 = scmp.ne.s32.totalorder %s542, %s543
      %p557 = scmp.eq.s32.totalorder %s53, 1
      %p558 = por %p556, %p557
      %p560 = scmp.ne.s32.totalorder %s543, %s559
      %p561 = scmp.eq.s32.totalorder %s53, 0
      %p562 = por %p560, %p561
      %s563 = ssub.s32 %s47, %s54
      %p564 = scmp.eq.s32.totalorder %s563, 0
      %s566 = sadd.s32 %s565, 1
      %s567 = scalar_select %p564, %s565, %s566
      %p570 = pneg %p564
      %p571 = scmp.eq.s32.totalorder %s47, 1
      %p572 = por %p570, %p571
      %p573 = scmp.ne.s32.totalorder %s565, %s568
      %p574 = scmp.eq.s32.totalorder %s47, 0
      %p575 = por %p573, %p574
      %p576 = scmp.ne.s32.totalorder %s565, %s568
      %p577 = scmp.eq.s32.totalorder %s52, 1
      %p578 = por %p576, %p577
      %p579 = scmp.ne.s32.totalorder %s568, %s569
      %p580 = scmp.eq.s32.totalorder %s52, 0
      %p581 = por %p579, %p580
      %p582 = scmp.ne.s32.totalorder %s568, %s569
      %p583 = scmp.eq.s32.totalorder %s53, 1
      %p584 = por %p582, %p583
      %p586 = scmp.ne.s32.totalorder %s569, %s585
      %p587 = scmp.eq.s32.totalorder %s53, 0
      %p588 = por %p586, %p587
      %p589 = scmp.le.s32.totalorder 1, %s47
      %p590 = scmp.lt.s32.totalorder %s47, 3
      %p591 = pnand %p589, %p590
      %p592 = pneg %p591
      // Predicated region
      $region9: #{tpu_custom_call.1} parent=5 // pred_check
        _
      $region10: #{tpu_custom_call.1} parent=5 // pred_check_branch
        %594 = sbr.rel (%p591) target = $region12
      $region11: #{tpu_custom_call.1} parent=5 // pred_region
        %s595 = ssub.s32 %s47, 1
        // Predicated region
        $region13: #{tpu_custom_call.1} parent=11 // pred_check
          %p596 = pneg %p146
        $region14: #{tpu_custom_call.1} parent=11 // pred_check_branch
          %598 = sbr.rel (%p596) target = $region16
        $region15: #{tpu_custom_call.1} parent=11 // pred_region
          _
        $region16: #{tpu_custom_call.1} parent=11 // pred_fallthru
          _
        // Predicated region
        $region17: #{tpu_custom_call.1} parent=11 // pred_check
          %p599 = pneg %p167
        $region18: #{tpu_custom_call.1} parent=11 // pred_check_branch
          %601 = sbr.rel (%p599) target = $region20
        $region19: #{tpu_custom_call.1} parent=11 // pred_region
          _
        $region20: #{tpu_custom_call.1} parent=11 // pred_fallthru
          _
        // Predicated region
        $region21: #{tpu_custom_call.1} parent=11 // pred_check
          %p602 = pneg %p188
        $region22: #{tpu_custom_call.1} parent=11 // pred_check_branch
          %604 = sbr.rel (%p602) target = $region24
        $region23: #{tpu_custom_call.1} parent=11 // pred_region
          %s606 = ssub.s32 512, 512
          %607 = vsyncadd [#allocation6], %s606
          %s608 = sshll.u32 [#allocation7], 4
          %s609 = int_to_ptr.vmem [resolvable:$true] %s608
          %614 = dma.hbm_to_vmem [thread:$0]  %s5, 512, %s609, [#allocation6], 128, 128, 8
        $region24: #{tpu_custom_call.1} parent=11 // pred_fallthru
          _
        // Predicated region
        $region25: #{tpu_custom_call.1} parent=11 // pred_check
          %p615 = pneg %p209
        $region26: #{tpu_custom_call.1} parent=11 // pred_check_branch
          %617 = sbr.rel (%p615) target = $region28
        $region27: #{tpu_custom_call.1} parent=11 // pred_region
          %s619 = ssub.s32 512, 512
          %620 = vsyncadd [#allocation9], %s619
          %s621 = sshll.u32 [#allocation8], 4
          %s622 = int_to_ptr.vmem [resolvable:$true] %s621
          %627 = dma.hbm_to_vmem [thread:$0]  %s6, 512, %s622, [#allocation9], 128, 128, 8
        $region28: #{tpu_custom_call.1} parent=11 // pred_fallthru
          _
        // Predicated region
        $region29: #{tpu_custom_call.1} parent=11 // pred_check
          %p628 = pneg %p230
        $region30: #{tpu_custom_call.1} parent=11 // pred_check_branch
          %630 = sbr.rel (%p628) target = $region32
        $region31: #{tpu_custom_call.1} parent=11 // pred_region
          %s632 = ssub.s32 16, 16
          %633 = vsyncadd [#allocation9], %s632
          %s635 = sshll.u32 [#allocation10], 4
          %s636 = int_to_ptr.vmem [resolvable:$true] %s635
          %638 = dma.hbm_to_vmem [thread:$0]  %s7, 16, %s636, [#allocation9]
        $region32: #{tpu_custom_call.1} parent=11 // pred_fallthru
          _
        // Predicated region
        $region33: #{tpu_custom_call.1} parent=11 // pred_check
          %p639 = pneg %p251
        $region34: #{tpu_custom_call.1} parent=11 // pred_check_branch
          %641 = sbr.rel (%p639) target = $region36
        $region35: #{tpu_custom_call.1} parent=11 // pred_region
          %s643 = ssub.s32 16, 16
          %644 = vsyncadd [#allocation12], %s643
          %s646 = sshll.u32 [#allocation11], 4
          %s647 = int_to_ptr.vmem [resolvable:$true] %s646
          %649 = dma.hbm_to_vmem [thread:$0]  %s8, 16, %s647, [#allocation12]
        $region36: #{tpu_custom_call.1} parent=11 // pred_fallthru
          _
        // Predicated region
        $region37: #{tpu_custom_call.1} parent=11 // pred_check
          %p650 = pneg %p272
        $region38: #{tpu_custom_call.1} parent=11 // pred_check_branch
          %652 = sbr.rel (%p650) target = $region40
        $region39: #{tpu_custom_call.1} parent=11 // pred_region
          _
        $region40: #{tpu_custom_call.1} parent=11 // pred_fallthru
          _
        // Predicated region
        $region41: #{tpu_custom_call.1} parent=11 // pred_check
          %p653 = pneg %p293
        $region42: #{tpu_custom_call.1} parent=11 // pred_check_branch
          %655 = sbr.rel (%p653) target = $region44
        $region43: #{tpu_custom_call.1} parent=11 // pred_region
          %s657 = ssub.s32 512, 512
          %658 = vsyncadd [#allocation12], %s657
          %s659 = sshll.u32 [#allocation13], 4
          %s660 = int_to_ptr.vmem [resolvable:$true] %s659
          %665 = dma.hbm_to_vmem [thread:$0]  %s10, 512, %s660, [#allocation12], 128, 128, 8
        $region44: #{tpu_custom_call.1} parent=11 // pred_fallthru
          _
        // Predicated region
        $region45: #{tpu_custom_call.1} parent=11 // pred_check
          %p666 = pneg %p314
        $region46: #{tpu_custom_call.1} parent=11 // pred_check_branch
          %668 = sbr.rel (%p666) target = $region48
        $region47: #{tpu_custom_call.1} parent=11 // pred_region
          %s670 = ssub.s32 512, 512
          %671 = vsyncadd [#allocation15], %s670
          %s672 = sshll.u32 [#allocation14], 4
          %s673 = int_to_ptr.vmem [resolvable:$true] %s672
          %678 = dma.hbm_to_vmem [thread:$0]  %s11, 512, %s673, [#allocation15], 128, 128, 8
        $region48: #{tpu_custom_call.1} parent=11 // pred_fallthru
          _
        // Predicated region
        $region49: #{tpu_custom_call.1} parent=11 // pred_check
          %p679 = pneg %p335
        $region50: #{tpu_custom_call.1} parent=11 // pred_check_branch
          %681 = sbr.rel (%p679) target = $region52
        $region51: #{tpu_custom_call.1} parent=11 // pred_region
          %s683 = ssub.s32 512, 512
          %684 = vsyncadd [#allocation15], %s683
          %s685 = sshll.u32 [#allocation16], 4
          %s686 = int_to_ptr.vmem [resolvable:$true] %s685
          %691 = dma.hbm_to_vmem [thread:$0]  %s12, 512, %s686, [#allocation15], 128, 128, 8
        $region52: #{tpu_custom_call.1} parent=11 // pred_fallthru
          _
        // Predicated region
        $region53: #{tpu_custom_call.1} parent=11 // pred_check
          %p692 = pneg %p356
        $region54: #{tpu_custom_call.1} parent=11 // pred_check_branch
          %694 = sbr.rel (%p692) target = $region56
        $region55: #{tpu_custom_call.1} parent=11 // pred_region
          %s696 = ssub.s32 16, 16
          %697 = vsyncadd [#allocation18], %s696
          %s699 = sshll.u32 [#allocation17], 4
          %s700 = int_to_ptr.vmem [resolvable:$true] %s699
          %702 = dma.hbm_to_vmem [thread:$0]  %s13, 16, %s700, [#allocation18]
        $region56: #{tpu_custom_call.1} parent=11 // pred_fallthru
          _
        // Predicated region
        $region57: #{tpu_custom_call.1} parent=11 // pred_check
          %p703 = pneg %p377
        $region58: #{tpu_custom_call.1} parent=11 // pred_check_branch
          %705 = sbr.rel (%p703) target = $region60
        $region59: #{tpu_custom_call.1} parent=11 // pred_region
          %s707 = ssub.s32 16, 16
          %708 = vsyncadd [#allocation18], %s707
          %s710 = sshll.u32 [#allocation19], 4
          %s711 = int_to_ptr.vmem [resolvable:$true] %s710
          %713 = dma.hbm_to_vmem [thread:$0]  %s14, 16, %s711, [#allocation18]
        $region60: #{tpu_custom_call.1} parent=11 // pred_fallthru
          _
        // Predicated region
        $region61: #{tpu_custom_call.1} parent=11 // pred_check
          %p714 = pneg %p398
        $region62: #{tpu_custom_call.1} parent=11 // pred_check_branch
          %716 = sbr.rel (%p714) target = $region64
        $region63: #{tpu_custom_call.1} parent=11 // pred_region
          %s718 = ssub.s32 512, 512
          %719 = vsyncadd [#allocation21], %s718
          %s720 = sshll.u32 [#allocation20], 4
          %s721 = int_to_ptr.vmem [resolvable:$true] %s720
          %726 = dma.hbm_to_vmem [thread:$0]  %s15, 512, %s721, [#allocation21], 128, 128, 8
        $region64: #{tpu_custom_call.1} parent=11 // pred_fallthru
          _
        // Predicated region
        $region65: #{tpu_custom_call.1} parent=11 // pred_check
          %p727 = pneg %p419
        $region66: #{tpu_custom_call.1} parent=11 // pred_check_branch
          %729 = sbr.rel (%p727) target = $region68
        $region67: #{tpu_custom_call.1} parent=11 // pred_region
          %s731 = ssub.s32 16, 16
          %732 = vsyncadd [#allocation21], %s731
          %s734 = sshll.u32 [#allocation22], 4
          %s735 = int_to_ptr.vmem [resolvable:$true] %s734
          %737 = dma.hbm_to_vmem [thread:$0]  %s16, 16, %s735, [#allocation21]
        $region68: #{tpu_custom_call.1} parent=11 // pred_fallthru
          _
        // Predicated region
        $region69: #{tpu_custom_call.1} parent=11 // pred_check
          %p738 = pneg %p440
        $region70: #{tpu_custom_call.1} parent=11 // pred_check_branch
          %740 = sbr.rel (%p738) target = $region72
        $region71: #{tpu_custom_call.1} parent=11 // pred_region
          _
        $region72: #{tpu_custom_call.1} parent=11 // pred_fallthru
          _
        // Predicated region
        $region73: #{tpu_custom_call.1} parent=11 // pred_check
          %p741 = pneg %p461
        $region74: #{tpu_custom_call.1} parent=11 // pred_check_branch
          %743 = sbr.rel (%p741) target = $region76
        $region75: #{tpu_custom_call.1} parent=11 // pred_region
          _
        $region76: #{tpu_custom_call.1} parent=11 // pred_fallthru
          _
        // Predicated region
        $region77: #{tpu_custom_call.1} parent=11 // pred_check
          %p744 = pneg %p482
        $region78: #{tpu_custom_call.1} parent=11 // pred_check_branch
          %746 = sbr.rel (%p744) target = $region80
        $region79: #{tpu_custom_call.1} parent=11 // pred_region
          _
        $region80: #{tpu_custom_call.1} parent=11 // pred_fallthru
          _
        // Predicated region
        $region81: #{tpu_custom_call.1} parent=11 // pred_check
          %p747 = pneg %p503
        $region82: #{tpu_custom_call.1} parent=11 // pred_check_branch
          %749 = sbr.rel (%p747) target = $region84
        $region83: #{tpu_custom_call.1} parent=11 // pred_region
          _
        $region84: #{tpu_custom_call.1} parent=11 // pred_fallthru
          _
      $region12: #{tpu_custom_call.1} parent=5 // pred_fallthru
        _
      %p750 = scmp.lt.s32.totalorder %s47, 2
      // Predicated region
      $region85: #{tpu_custom_call.1} parent=5 // pred_check
        %p751 = pneg %p750
      $region86: #{tpu_custom_call.1} parent=5 // pred_check_branch
        %753 = sbr.rel (%p751) target = $region88
      $region87: #{tpu_custom_call.1} parent=5 // pred_region
        // Predicated region
        $region89: #{tpu_custom_call.1} parent=87 // pred_check
          %p754 = pneg %p67
        $region90: #{tpu_custom_call.1} parent=87 // pred_check_branch
          %756 = sbr.rel (%p754) target = $region92
        $region91: #{tpu_custom_call.1} parent=87 // pred_region
          %s757 = sand.u32 %s57, 1
          %s758 = scalar_lea.sflag [#allocation3], %s757
          %s759 = sand.u32 %s57, 1
          %s760 = smul.addr %s759, 8
          %s761 = scalar_lea.vmem [#allocation2], %s760
          %s763 = ssub.s32 128, 128
          %764 = vsyncadd %s758, %s763
          %s765 = smul.addr %s47, 128
          %s766 = scalar_lea.hbm %s0, %s765
          %s768 = sshll.u32 %s761, 4
          %s769 = int_to_ptr.vmem [resolvable:$true] %s768
          %771 = dma.hbm_to_vmem [thread:$0]  %s766, 128, %s769, %s758
        $region92: #{tpu_custom_call.1} parent=87 // pred_fallthru
          _
        // Predicated region
        $region93: #{tpu_custom_call.1} parent=87 // pred_check
          %p772 = pneg %p93
        $region94: #{tpu_custom_call.1} parent=87 // pred_check_branch
          %774 = sbr.rel (%p772) target = $region96
        $region95: #{tpu_custom_call.1} parent=87 // pred_region
          %s775 = sand.u32 %s47, 1
          %s776 = scalar_lea.sflag [#allocation6], %s775
          %s777 = sand.u32 %s83, 1
          %s778 = smul.addr %s777, 8
          %s779 = scalar_lea.vmem [#allocation5], %s778
          %s781 = ssub.s32 128, 128
          %782 = vsyncadd %s776, %s781
          %s783 = smul.addr %s47, 128
          %s784 = scalar_lea.hbm %s1, %s783
          %s786 = sshll.u32 %s779, 4
          %s787 = int_to_ptr.vmem [resolvable:$true] %s786
          %789 = dma.hbm_to_vmem [thread:$0]  %s784, 128, %s787, %s776
        $region96: #{tpu_custom_call.1} parent=87 // pred_fallthru
          _
        // Predicated region
        $region97: #{tpu_custom_call.1} parent=87 // pred_check
          %p790 = pneg %p119
        $region98: #{tpu_custom_call.1} parent=87 // pred_check_branch
          %792 = sbr.rel (%p790) target = $region100
        $region99: #{tpu_custom_call.1} parent=87 // pred_region
          %p793 = scmp.lt.s32.totalorder %s47, 1
          %s794 = scalar_select %p793, %s47, 1
          %s795 = smul.addr %s794, 2
          %s796 = smul.addr %s795, 8
          %s797 = scalar_lea.vmem %s2, %s796
        $region100: #{tpu_custom_call.1} parent=87 // pred_fallthru
          _
      $region88: #{tpu_custom_call.1} parent=5 // pred_fallthru
        _
      %p798 = scmp.le.s32.totalorder 1, %s47
      %p799 = scmp.lt.s32.totalorder %s47, 3
      %p800 = pnand %p798, %p799
      %p801 = pneg %p800
      // Predicated region
      $region101: #{tpu_custom_call.1} parent=5 // pred_check
        _
      $region102: #{tpu_custom_call.1} parent=5 // pred_check_branch
        %803 = sbr.rel (%p800) target = $region104
      $region103: #{tpu_custom_call.1} parent=5 // pred_region
        %s804 = ssub.s32 %s47, 1
        %s805 = sand.u32 %s60, 1
        %s806 = scalar_lea.sflag [#allocation3], %s805
        %s807 = sand.u32 %s60, 1
        %s808 = smul.addr %s807, 8
        %s809 = scalar_lea.vmem [#allocation2], %s808
        // Predicated region
        $region105: #{tpu_custom_call.1} parent=103 // pred_check
          %p810 = pneg %p73
        $region106: #{tpu_custom_call.1} parent=103 // pred_check_branch
          %812 = sbr.rel (%p810) target = $region108
        $region107: #{tpu_custom_call.1} parent=103 // pred_region
          %813 = dma.done %s806, 128
        $region108: #{tpu_custom_call.1} parent=103 // pred_fallthru
          _
        %s814 = sand.u32 %s52, 1
        %s815 = scalar_lea.sflag [#allocation6], %s814
        %s816 = sand.u32 %s86, 1
        %s817 = smul.addr %s816, 8
        %s818 = scalar_lea.vmem [#allocation5], %s817
        // Predicated region
        $region109: #{tpu_custom_call.1} parent=103 // pred_check
          %p819 = pneg %p99
        $region110: #{tpu_custom_call.1} parent=103 // pred_check_branch
          %821 = sbr.rel (%p819) target = $region112
        $region111: #{tpu_custom_call.1} parent=103 // pred_region
          %822 = dma.done %s815, 128
        $region112: #{tpu_custom_call.1} parent=103 // pred_fallthru
          _
        // Predicated region
        $region113: #{tpu_custom_call.1} parent=103 // pred_check
          %p823 = pneg %p188
        $region114: #{tpu_custom_call.1} parent=103 // pred_check_branch
          %825 = sbr.rel (%p823) target = $region116
        $region115: #{tpu_custom_call.1} parent=103 // pred_region
          %826 = dma.done [#allocation6], 512
        $region116: #{tpu_custom_call.1} parent=103 // pred_fallthru
          _
        // Predicated region
        $region117: #{tpu_custom_call.1} parent=103 // pred_check
          %p827 = pneg %p209
        $region118: #{tpu_custom_call.1} parent=103 // pred_check_branch
          %829 = sbr.rel (%p827) target = $region120
        $region119: #{tpu_custom_call.1} parent=103 // pred_region
          %830 = dma.done [#allocation9], 512
        $region120: #{tpu_custom_call.1} parent=103 // pred_fallthru
          _
        // Predicated region
        $region121: #{tpu_custom_call.1} parent=103 // pred_check
          %p831 = pneg %p230
        $region122: #{tpu_custom_call.1} parent=103 // pred_check_branch
          %833 = sbr.rel (%p831) target = $region124
        $region123: #{tpu_custom_call.1} parent=103 // pred_region
          %834 = dma.done [#allocation9], 16
        $region124: #{tpu_custom_call.1} parent=103 // pred_fallthru
          _
        // Predicated region
        $region125: #{tpu_custom_call.1} parent=103 // pred_check
          %p835 = pneg %p251
        $region126: #{tpu_custom_call.1} parent=103 // pred_check_branch
          %837 = sbr.rel (%p835) target = $region128
        $region127: #{tpu_custom_call.1} parent=103 // pred_region
          %838 = dma.done [#allocation12], 16
        $region128: #{tpu_custom_call.1} parent=103 // pred_fallthru
          _
        // Predicated region
        $region129: #{tpu_custom_call.1} parent=103 // pred_check
          %p839 = pneg %p293
        $region130: #{tpu_custom_call.1} parent=103 // pred_check_branch
          %841 = sbr.rel (%p839) target = $region132
        $region131: #{tpu_custom_call.1} parent=103 // pred_region
          %842 = dma.done [#allocation12], 512
        $region132: #{tpu_custom_call.1} parent=103 // pred_fallthru
          _
        // Predicated region
        $region133: #{tpu_custom_call.1} parent=103 // pred_check
          %p843 = pneg %p314
        $region134: #{tpu_custom_call.1} parent=103 // pred_check_branch
          %845 = sbr.rel (%p843) target = $region136
        $region135: #{tpu_custom_call.1} parent=103 // pred_region
          %846 = dma.done [#allocation15], 512
        $region136: #{tpu_custom_call.1} parent=103 // pred_fallthru
          _
        // Predicated region
        $region137: #{tpu_custom_call.1} parent=103 // pred_check
          %p847 = pneg %p335
        $region138: #{tpu_custom_call.1} parent=103 // pred_check_branch
          %849 = sbr.rel (%p847) target = $region140
        $region139: #{tpu_custom_call.1} parent=103 // pred_region
          %850 = dma.done [#allocation15], 512
        $region140: #{tpu_custom_call.1} parent=103 // pred_fallthru
          _
        // Predicated region
        $region141: #{tpu_custom_call.1} parent=103 // pred_check
          %p851 = pneg %p356
        $region142: #{tpu_custom_call.1} parent=103 // pred_check_branch
          %853 = sbr.rel (%p851) target = $region144
        $region143: #{tpu_custom_call.1} parent=103 // pred_region
          %854 = dma.done [#allocation18], 16
        $region144: #{tpu_custom_call.1} parent=103 // pred_fallthru
          _
        // Predicated region
        $region145: #{tpu_custom_call.1} parent=103 // pred_check
          %p855 = pneg %p377
        $region146: #{tpu_custom_call.1} parent=103 // pred_check_branch
          %857 = sbr.rel (%p855) target = $region148
        $region147: #{tpu_custom_call.1} parent=103 // pred_region
          %858 = dma.done [#allocation18], 16
        $region148: #{tpu_custom_call.1} parent=103 // pred_fallthru
          _
        // Predicated region
        $region149: #{tpu_custom_call.1} parent=103 // pred_check
          %p859 = pneg %p398
        $region150: #{tpu_custom_call.1} parent=103 // pred_check_branch
          %861 = sbr.rel (%p859) target = $region152
        $region151: #{tpu_custom_call.1} parent=103 // pred_region
          %862 = dma.done [#allocation21], 512
        $region152: #{tpu_custom_call.1} parent=103 // pred_fallthru
          _
        // Predicated region
        $region153: #{tpu_custom_call.1} parent=103 // pred_check
          %p863 = pneg %p419
        $region154: #{tpu_custom_call.1} parent=103 // pred_check_branch
          %865 = sbr.rel (%p863) target = $region156
        $region155: #{tpu_custom_call.1} parent=103 // pred_region
          %866 = dma.done [#allocation21], 16
        $region156: #{tpu_custom_call.1} parent=103 // pred_fallthru
          _
        %s867 = sand.u32 %s60, 1
        %s868 = scalar_lea.sflag [#allocation3], %s867
        %s869 = sand.u32 %s60, 1
        %s870 = smul.addr %s869, 8
        %s871 = scalar_lea.vmem [#allocation2], %s870
        %p872 = pneg %p73
        %p873 = pneg %p70
        %s874 = sand.u32 %s52, 1
        %s875 = scalar_lea.sflag [#allocation6], %s874
        %s876 = sand.u32 %s86, 1
        %s877 = smul.addr %s876, 8
        %s878 = scalar_lea.vmem [#allocation5], %s877
        %p879 = pneg %p99
        %p880 = pneg %p96
        %p881 = scmp.lt.s32.totalorder %s52, 1
        %s882 = scalar_select %p881, %s52, 1
        %s883 = smul.addr %s882, 2
        %s884 = smul.addr %s883, 8
        %s885 = scalar_lea.vmem %s2, %s884
        %p886 = pneg %p125
        %p887 = pneg %p122
        %p888 = pneg %p146
        %p889 = pneg %p143
        %p890 = pneg %p167
        %p891 = pneg %p164
        %p892 = pneg %p188
        %p893 = pneg %p185
        %p894 = pneg %p209
        %p895 = pneg %p206
        %p896 = pneg %p230
        %p897 = pneg %p227
        %p898 = pneg %p251
        %p899 = pneg %p248
        %p900 = pneg %p272
        %p901 = pneg %p269
        %p902 = pneg %p293
        %p903 = pneg %p290
        %p904 = pneg %p314
        %p905 = pneg %p311
        %p906 = pneg %p335
        %p907 = pneg %p332
        %p908 = pneg %p356
        %p909 = pneg %p353
        %p910 = pneg %p377
        %p911 = pneg %p374
        %p912 = pneg %p398
        %p913 = pneg %p395
        %p914 = pneg %p419
        %p915 = pneg %p416
        %p916 = pneg %p440
        %p917 = pneg %p437
        %p918 = pneg %p461
        %p919 = pneg %p458
        %p920 = pneg %p482
        %p921 = pneg %p479
        %p922 = pneg %p503
        %p923 = pneg %p500
        %p924 = pneg %p529
        %p925 = pneg %p526
        %s926 = sand.u32 %s516, 1
        %s927 = scalar_lea.sflag [#allocation4], %s926
        %s928 = sand.u32 %s516, 1
        %s929 = smul.addr %s928, 8
        %s930 = scalar_lea.vmem [#allocation23], %s929
        %p931 = pneg %p555
        %p932 = pneg %p552
        %s933 = sand.u32 %s52, 1
        %s934 = scalar_lea.sflag [#allocation25], %s933
        %s935 = sand.u32 %s542, 1
        %s936 = smul.addr %s935, 8
        %s937 = scalar_lea.vmem [#allocation24], %s936
        %p938 = pneg %p581
        %p939 = pneg %p578
        %s940 = sand.u32 %s52, 1
        %s941 = scalar_lea.sflag [#allocation25], %s940
        %s942 = sand.u32 %s568, 1
        %s943 = smul.addr %s942, 8
        %s944 = scalar_lea.vmem [#allocation26], %s943
        %p945 = scmp.lt.s32.totalorder %s52, 1
        %s946 = scalar_select %p945, %s52, 1
        %s947 = smul.addr %s946, 2
        %s948 = smul.addr %s947, 8
        %s949 = scalar_lea.vmem %s2, %s948
        %v950 = vld [vmem:[%s809] sm:$0xff]
        %v951 = vld [vmem:[%s949] sm:$0xff]
        %v952 = vld [vmem:[%s949 + $0x8] sm:$0xff]
        %v953 = vld [vmem:[%s818] sm:$0xff]
        %v954 = vadd.f32 %v950, %v953
        %v955 = vld [vmem:[%s3] sm:$0xff]
        %v956 = vld [vmem:[%s3 + $0x8] sm:$0xff]
        %v957 = vld [vmem:[%s3 + $0x10] sm:$0xff]
        %v958 = vld [vmem:[%s3 + $0x18] sm:$0xff]
        %v959 = vld [vmem:[%s4] sm:$0xff]
        %v960 = vld [vmem:[%s4 + $0x8] sm:$0xff]
        %v961 = vld [vmem:[%s4 + $0x10] sm:$0xff]
        %v962 = vld [vmem:[%s4 + $0x18] sm:$0xff]
        %v963 = vld [vmem:[#allocation7] sm:$0xff]
        %v964 = vld [vmem:[#allocation7 + $0x8] sm:$0xff]
        %v965 = vld [vmem:[#allocation7 + $0x10] sm:$0xff]
        %v966 = vld [vmem:[#allocation7 + $0x18] sm:$0xff]
        %v967 = vld [vmem:[#allocation8] sm:$0xff]
        %v968 = vld [vmem:[#allocation8 + $0x8] sm:$0xff]
        %v969 = vld [vmem:[#allocation8 + $0x10] sm:$0xff]
        %v970 = vld [vmem:[#allocation8 + $0x18] sm:$0xff]
        %v971 = vld [vmem:[#allocation10] sm:$0x1]
        %v972 = vld [vmem:[#allocation11] sm:$0x1]
        %vm973 = vcmask 261120
        %v975 = vsel %vm973, %v954, 0
        %977 = vmatprep.subr.mxu0 0.0
        %978 = vmatpush1.msra.mxu0 %v955
        %979 = vmatprep.subr.mxu0 0.0
        %980 = vmatpush1.msra.mxu0 %v956
        %981 = vmatprep.subr.mxu0 0.0
        %982 = vmatpush1.msra.mxu0 %v957
        %983 = vmatprep.subr.mxu0 0.0
        %984 = vmatpush1.msra.mxu0 %v958
        %985 = vmatprep.subr.mxu0 0.0
        %986 = vmatpush1.msra.mxu0 0.0
        %987 = vmatprep.subr.mxu0 0.0
        %988 = vmatpush1.msra.mxu0 0.0
        %989 = vmatprep.subr.mxu0 0.0
        %990 = vmatpush1.msra.mxu0 0.0
        %991 = vmatprep.subr.mxu0 0.0
        %992 = vmatpush1.msra.mxu0 0.0
        %993 = vmatprep.subr.mxu0 0.0
        %994 = vmatpush1.msra.mxu0 0.0
        %995 = vmatprep.subr.mxu0 0.0
        %996 = vmatpush1.msra.mxu0 0.0
        %997 = vmatprep.subr.mxu0 0.0
        %998 = vmatpush1.msra.mxu0 0.0
        %999 = vmatprep.subr.mxu0 0.0
        %1000 = vmatpush1.msra.mxu0 0.0
        %1001 = vmatprep.subr.mxu0 0.0
        %1002 = vmatpush1.msra.mxu0 0.0
        %1003 = vmatprep.subr.mxu0 0.0
        %1004 = vmatpush1.msra.mxu0 0.0
        %1005 = vmatprep.subr.mxu0 0.0
        %1006 = vmatpush1.msra.mxu0 0.0
        %1007 = vmatprep.subr.mxu0 0.0
        %1008 = vmatpush1.msra.mxu0 0.0
        %1009 = vmatprep.subr.mxu0 0.0
        %1010 = vmatpush1.msra.mxu0 0.0
        %1011 = vmatprep.subr.mxu0 0.0
        %1012 = vmatpush1.msra.mxu0 0.0
        %1013 = vmatprep.subr.mxu0 0.0
        %1014 = vmatpush1.msra.mxu0 0.0
        %1015 = vmatprep.subr.mxu0 0.0
        %1016 = vmatpush1.msra.mxu0 0.0
        %1017 = vmatprep.subr.mxu0 0.0
        %1018 = vmatpush1.msra.mxu0 0.0
        %1019 = vmatprep.subr.mxu0 0.0
        %1020 = vmatpush1.msra.mxu0 0.0
        %1021 = vmatprep.subr.mxu0 0.0
        %1022 = vmatpush1.msra.mxu0 0.0
        %1023 = vmatprep.subr.mxu0 0.0
        %1024 = vmatpush1.msra.mxu0 0.0
        %1025 = vmatprep.subr.mxu0 0.0
        %1026 = vmatpush1.msra.mxu0 0.0
        %1027 = vmatprep.subr.mxu0 0.0
        %1028 = vmatpush1.msra.mxu0 0.0
        %1029 = vmatprep.subr.mxu0 0.0
        %1030 = vmatpush1.msra.mxu0 0.0
        %1031 = vmatprep.subr.mxu0 0.0
        %1032 = vmatpush1.msra.mxu0 0.0
        %1033 = vmatprep.subr.mxu0 0.0
        %1034 = vmatpush1.msra.mxu0 0.0
        %1035 = vmatprep.subr.mxu0 0.0
        %1036 = vmatpush1.msra.mxu0 0.0
        %1037 = vmatprep.subr.mxu0 0.0
        %1038 = vmatpush1.msra.mxu0 0.0
        %1039 = vmatprep.subr.mxu0 0.0
        %1040 = vmatpush1.msra.mxu0 0.0
        %1041 = vmatprep.mubr.f32.mxu0 0.0
        %1042 = vmatmul.mubr.f32.gmra.mrb[0].mxu0 %v975
        %v1043 = vpop.f32.mrb[0].mxu0
        %v1044 = vadd.f32 0.0, %v1043
        %v1045 = vpop.f32.mrb[0].mxu0
        %1046 = vdwg.mxu0
        %1047 = vmatprep.subr.mxu0 0.0
        %1048 = vmatpush1.msra.mxu0 %v959
        %1049 = vmatprep.subr.mxu0 0.0
        %1050 = vmatpush1.msra.mxu0 %v960
        %1051 = vmatprep.subr.mxu0 0.0
        %1052 = vmatpush1.msra.mxu0 %v961
        %1053 = vmatprep.subr.mxu0 0.0
        %1054 = vmatpush1.msra.mxu0 %v962
        %1055 = vmatprep.subr.mxu0 0.0
        %1056 = vmatpush1.msra.mxu0 0.0
        %1057 = vmatprep.subr.mxu0 0.0
        %1058 = vmatpush1.msra.mxu0 0.0
        %1059 = vmatprep.subr.mxu0 0.0
        %1060 = vmatpush1.msra.mxu0 0.0
        %1061 = vmatprep.subr.mxu0 0.0
        %1062 = vmatpush1.msra.mxu0 0.0
        %1063 = vmatprep.subr.mxu0 0.0
        %1064 = vmatpush1.msra.mxu0 0.0
        %1065 = vmatprep.subr.mxu0 0.0
        %1066 = vmatpush1.msra.mxu0 0.0
        %1067 = vmatprep.subr.mxu0 0.0
        %1068 = vmatpush1.msra.mxu0 0.0
        %1069 = vmatprep.subr.mxu0 0.0
        %1070 = vmatpush1.msra.mxu0 0.0
        %1071 = vmatprep.subr.mxu0 0.0
        %1072 = vmatpush1.msra.mxu0 0.0
        %1073 = vmatprep.subr.mxu0 0.0
        %1074 = vmatpush1.msra.mxu0 0.0
        %1075 = vmatprep.subr.mxu0 0.0
        %1076 = vmatpush1.msra.mxu0 0.0
        %1077 = vmatprep.subr.mxu0 0.0
        %1078 = vmatpush1.msra.mxu0 0.0
        %1079 = vmatprep.subr.mxu0 0.0
        %1080 = vmatpush1.msra.mxu0 0.0
        %1081 = vmatprep.subr.mxu0 0.0
        %1082 = vmatpush1.msra.mxu0 0.0
        %1083 = vmatprep.subr.mxu0 0.0
        %1084 = vmatpush1.msra.mxu0 0.0
        %1085 = vmatprep.subr.mxu0 0.0
        %1086 = vmatpush1.msra.mxu0 0.0
        %1087 = vmatprep.subr.mxu0 0.0
        %1088 = vmatpush1.msra.mxu0 0.0
        %1089 = vmatprep.subr.mxu0 0.0
        %1090 = vmatpush1.msra.mxu0 0.0
        %1091 = vmatprep.subr.mxu0 0.0
        %1092 = vmatpush1.msra.mxu0 0.0
        %1093 = vmatprep.subr.mxu0 0.0
        %1094 = vmatpush1.msra.mxu0 0.0
        %1095 = vmatprep.subr.mxu0 0.0
        %1096 = vmatpush1.msra.mxu0 0.0
        %1097 = vmatprep.subr.mxu0 0.0
        %1098 = vmatpush1.msra.mxu0 0.0
        %1099 = vmatprep.subr.mxu0 0.0
        %1100 = vmatpush1.msra.mxu0 0.0
        %1101 = vmatprep.subr.mxu0 0.0
        %1102 = vmatpush1.msra.mxu0 0.0
        %1103 = vmatprep.subr.mxu0 0.0
        %1104 = vmatpush1.msra.mxu0 0.0
        %1105 = vmatprep.subr.mxu0 0.0
        %1106 = vmatpush1.msra.mxu0 0.0
        %1107 = vmatprep.subr.mxu0 0.0
        %1108 = vmatpush1.msra.mxu0 0.0
        %1109 = vmatprep.subr.mxu0 0.0
        %1110 = vmatpush1.msra.mxu0 0.0
        %1111 = vmatprep.mubr.f32.mxu0 0.0
        %1112 = vmatmul.mubr.f32.gmra.mrb[0].mxu0 %v975
        %v1113 = vpop.f32.mrb[0].mxu0
        %v1114 = vadd.f32 0.0, %v1113
        %v1115 = vpop.f32.mrb[0].mxu0
        %1116 = vdwg.mxu0
        %v1118 = vsel %vm973, %v950, 0
        %1120 = vmatprep.subr.mxu0 0.0
        %1121 = vmatpush1.msra.mxu0 %v963
        %1122 = vmatprep.subr.mxu0 0.0
        %1123 = vmatpush1.msra.mxu0 %v964
        %1124 = vmatprep.subr.mxu0 0.0
        %1125 = vmatpush1.msra.mxu0 %v965
        %1126 = vmatprep.subr.mxu0 0.0
        %1127 = vmatpush1.msra.mxu0 %v966
        %1128 = vmatprep.subr.mxu0 0.0
        %1129 = vmatpush1.msra.mxu0 0.0
        %1130 = vmatprep.subr.mxu0 0.0
        %1131 = vmatpush1.msra.mxu0 0.0
        %1132 = vmatprep.subr.mxu0 0.0
        %1133 = vmatpush1.msra.mxu0 0.0
        %1134 = vmatprep.subr.mxu0 0.0
        %1135 = vmatpush1.msra.mxu0 0.0
        %1136 = vmatprep.subr.mxu0 0.0
        %1137 = vmatpush1.msra.mxu0 0.0
        %1138 = vmatprep.subr.mxu0 0.0
        %1139 = vmatpush1.msra.mxu0 0.0
        %1140 = vmatprep.subr.mxu0 0.0
        %1141 = vmatpush1.msra.mxu0 0.0
        %1142 = vmatprep.subr.mxu0 0.0
        %1143 = vmatpush1.msra.mxu0 0.0
        %1144 = vmatprep.subr.mxu0 0.0
        %1145 = vmatpush1.msra.mxu0 0.0
        %1146 = vmatprep.subr.mxu0 0.0
        %1147 = vmatpush1.msra.mxu0 0.0
        %1148 = vmatprep.subr.mxu0 0.0
        %1149 = vmatpush1.msra.mxu0 0.0
        %1150 = vmatprep.subr.mxu0 0.0
        %1151 = vmatpush1.msra.mxu0 0.0
        %1152 = vmatprep.subr.mxu0 0.0
        %1153 = vmatpush1.msra.mxu0 0.0
        %1154 = vmatprep.subr.mxu0 0.0
        %1155 = vmatpush1.msra.mxu0 0.0
        %1156 = vmatprep.subr.mxu0 0.0
        %1157 = vmatpush1.msra.mxu0 0.0
        %1158 = vmatprep.subr.mxu0 0.0
        %1159 = vmatpush1.msra.mxu0 0.0
        %1160 = vmatprep.subr.mxu0 0.0
        %1161 = vmatpush1.msra.mxu0 0.0
        %1162 = vmatprep.subr.mxu0 0.0
        %1163 = vmatpush1.msra.mxu0 0.0
        %1164 = vmatprep.subr.mxu0 0.0
        %1165 = vmatpush1.msra.mxu0 0.0
        %1166 = vmatprep.subr.mxu0 0.0
        %1167 = vmatpush1.msra.mxu0 0.0
        %1168 = vmatprep.subr.mxu0 0.0
        %1169 = vmatpush1.msra.mxu0 0.0
        %1170 = vmatprep.subr.mxu0 0.0
        %1171 = vmatpush1.msra.mxu0 0.0
        %1172 = vmatprep.subr.mxu0 0.0
        %1173 = vmatpush1.msra.mxu0 0.0
        %1174 = vmatprep.subr.mxu0 0.0
        %1175 = vmatpush1.msra.mxu0 0.0
        %1176 = vmatprep.subr.mxu0 0.0
        %1177 = vmatpush1.msra.mxu0 0.0
        %1178 = vmatprep.subr.mxu0 0.0
        %1179 = vmatpush1.msra.mxu0 0.0
        %1180 = vmatprep.subr.mxu0 0.0
        %1181 = vmatpush1.msra.mxu0 0.0
        %1182 = vmatprep.subr.mxu0 0.0
        %1183 = vmatpush1.msra.mxu0 0.0
        %1184 = vmatprep.mubr.f32.mxu0 0.0
        %1185 = vmatmul.mubr.f32.gmra.mrb[0].mxu0 %v1118
        %v1186 = vpop.f32.mrb[0].mxu0
        %v1187 = vadd.f32 0.0, %v1186
        %v1188 = vpop.f32.mrb[0].mxu0
        %1189 = vdwg.mxu0
        %v1190 = vmul.f32 %v1044, 0.35355338
        %vm1191 = vcmask 64512
        %v1193 = vsel %vm1191, %v1190, 0
        %v1196 = vsel %vm1191, %v1114, 0
        %1198 = vmatprep.subr.mxu0 0.0
        %1199 = vmatpush1.xpose.msra.mxu0 %v1196
        %1200 = vmatprep.subr.mxu0 0.0
        %1201 = vmatpush1.xpose.msra.mxu0 0.0
        %1202 = vmatprep.subr.mxu0 0.0
        %1203 = vmatpush1.xpose.msra.mxu0 0.0
        %1204 = vmatprep.subr.mxu0 0.0
        %1205 = vmatpush1.xpose.msra.mxu0 0.0
        %1206 = vmatprep.subr.mxu0 0.0
        %1207 = vmatpush1.xpose.msra.mxu0 0.0
        %1208 = vmatprep.subr.mxu0 0.0
        %1209 = vmatpush1.xpose.msra.mxu0 0.0
        %1210 = vmatprep.subr.mxu0 0.0
        %1211 = vmatpush1.xpose.msra.mxu0 0.0
        %1212 = vmatprep.subr.mxu0 0.0
        %1213 = vmatpush1.xpose.msra.mxu0 0.0
        %1214 = vmatprep.subr.mxu0 0.0
        %1215 = vmatpush1.xpose.msra.mxu0 0.0
        %1216 = vmatprep.subr.mxu0 0.0
        %1217 = vmatpush1.xpose.msra.mxu0 0.0
        %1218 = vmatprep.subr.mxu0 0.0
        %1219 = vmatpush1.xpose.msra.mxu0 0.0
        %1220 = vmatprep.subr.mxu0 0.0
        %1221 = vmatpush1.xpose.msra.mxu0 0.0
        %1222 = vmatprep.subr.mxu0 0.0
        %1223 = vmatpush1.xpose.msra.mxu0 0.0
        %1224 = vmatprep.subr.mxu0 0.0
        %1225 = vmatpush1.xpose.msra.mxu0 0.0
        %1226 = vmatprep.subr.mxu0 0.0
        %1227 = vmatpush1.xpose.msra.mxu0 0.0
        %1228 = vmatprep.subr.mxu0 0.0
        %1229 = vmatpush1.xpose.msra.mxu0 0.0
        %1230 = vmatprep.subr.mxu0 0.0
        %1231 = vmatpush1.xpose.msra.mxu0 0.0
        %1232 = vmatprep.subr.mxu0 0.0
        %1233 = vmatpush1.xpose.msra.mxu0 0.0
        %1234 = vmatprep.subr.mxu0 0.0
        %1235 = vmatpush1.xpose.msra.mxu0 0.0
        %1236 = vmatprep.subr.mxu0 0.0
        %1237 = vmatpush1.xpose.msra.mxu0 0.0
        %1238 = vmatprep.subr.mxu0 0.0
        %1239 = vmatpush1.xpose.msra.mxu0 0.0
        %1240 = vmatprep.subr.mxu0 0.0
        %1241 = vmatpush1.xpose.msra.mxu0 0.0
        %1242 = vmatprep.subr.mxu0 0.0
        %1243 = vmatpush1.xpose.msra.mxu0 0.0
        %1244 = vmatprep.subr.mxu0 0.0
        %1245 = vmatpush1.xpose.msra.mxu0 0.0
        %1246 = vmatprep.subr.mxu0 0.0
        %1247 = vmatpush1.xpose.msra.mxu0 0.0
        %1248 = vmatprep.subr.mxu0 0.0
        %1249 = vmatpush1.xpose.msra.mxu0 0.0
        %1250 = vmatprep.subr.mxu0 0.0
        %1251 = vmatpush1.xpose.msra.mxu0 0.0
        %1252 = vmatprep.subr.mxu0 0.0
        %1253 = vmatpush1.xpose.msra.mxu0 0.0
        %1254 = vmatprep.subr.mxu0 0.0
        %1255 = vmatpush1.xpose.msra.mxu0 0.0
        %1256 = vmatprep.subr.mxu0 0.0
        %1257 = vmatpush1.xpose.msra.mxu0 0.0
        %1258 = vmatprep.subr.mxu0 0.0
        %1259 = vmatpush1.xpose.msra.mxu0 0.0
        %1260 = vmatprep.subr.mxu0 0.0
        %1261 = vmatpush1.xpose.msra.mxu0 0.0
        %1262 = vmatprep.mubr.f32.mxu0 0.0
        %1263 = vmatmul.mubr.f32.gmra.mrb[0].mxu0 %v1193
        %v1264 = vpop.f32.mrb[0].mxu0
        %v1265 = vadd.f32 0.0, %v1264
        %v1266 = vpop.f32.mrb[0].mxu0
        %1267 = vdwg.mxu0
        %v1268 = vsel %vm1191, %v1265, -inf
        %1269 = vmax.xlane.f32.xlu0 %v1268
        %v1270 = vpop.xlane.xlu0 %1269
        %v1271 = vsub.f32 %v1265, %v1270
        %v1272 = vmul.f32 %v1271, 1.442695
        %v1273 = vpow.pop %v1272
        %v1274 = vsel %vm1191, %v1273, 0.0
        %1275 = vadd.xlane.f32.xlu0 %v1274
        %v1276 = vpop.xlane.xlu0 %1275
        %v1277 = vrcp.pop %v1276
        %v1278 = vmul.f32 %v1273, %v1277
        %v1280 = vsel %vm1191, %v1278, 0
        %1282 = vmatprep.subr.mxu0 0.0
        %1283 = vmatpush1.msra.mxu0 %v1187
        %1284 = vmatprep.subr.mxu0 0.0
        %1285 = vmatpush1.msra.mxu0 0.0
        %1286 = vmatprep.subr.mxu0 0.0
        %1287 = vmatpush1.msra.mxu0 0.0
        %1288 = vmatprep.subr.mxu0 0.0
        %1289 = vmatpush1.msra.mxu0 0.0
        %1290 = vmatprep.subr.mxu0 0.0
        %1291 = vmatpush1.msra.mxu0 0.0
        %1292 = vmatprep.subr.mxu0 0.0
        %1293 = vmatpush1.msra.mxu0 0.0
        %1294 = vmatprep.subr.mxu0 0.0
        %1295 = vmatpush1.msra.mxu0 0.0
        %1296 = vmatprep.subr.mxu0 0.0
        %1297 = vmatpush1.msra.mxu0 0.0
        %1298 = vmatprep.subr.mxu0 0.0
        %1299 = vmatpush1.msra.mxu0 0.0
        %1300 = vmatprep.subr.mxu0 0.0
        %1301 = vmatpush1.msra.mxu0 0.0
        %1302 = vmatprep.subr.mxu0 0.0
        %1303 = vmatpush1.msra.mxu0 0.0
        %1304 = vmatprep.subr.mxu0 0.0
        %1305 = vmatpush1.msra.mxu0 0.0
        %1306 = vmatprep.subr.mxu0 0.0
        %1307 = vmatpush1.msra.mxu0 0.0
        %1308 = vmatprep.subr.mxu0 0.0
        %1309 = vmatpush1.msra.mxu0 0.0
        %1310 = vmatprep.subr.mxu0 0.0
        %1311 = vmatpush1.msra.mxu0 0.0
        %1312 = vmatprep.subr.mxu0 0.0
        %1313 = vmatpush1.msra.mxu0 0.0
        %1314 = vmatprep.subr.mxu0 0.0
        %1315 = vmatpush1.msra.mxu0 0.0
        %1316 = vmatprep.subr.mxu0 0.0
        %1317 = vmatpush1.msra.mxu0 0.0
        %1318 = vmatprep.subr.mxu0 0.0
        %1319 = vmatpush1.msra.mxu0 0.0
        %1320 = vmatprep.subr.mxu0 0.0
        %1321 = vmatpush1.msra.mxu0 0.0
        %1322 = vmatprep.subr.mxu0 0.0
        %1323 = vmatpush1.msra.mxu0 0.0
        %1324 = vmatprep.subr.mxu0 0.0
        %1325 = vmatpush1.msra.mxu0 0.0
        %1326 = vmatprep.subr.mxu0 0.0
        %1327 = vmatpush1.msra.mxu0 0.0
        %1328 = vmatprep.subr.mxu0 0.0
        %1329 = vmatpush1.msra.mxu0 0.0
        %1330 = vmatprep.subr.mxu0 0.0
        %1331 = vmatpush1.msra.mxu0 0.0
        %1332 = vmatprep.subr.mxu0 0.0
        %1333 = vmatpush1.msra.mxu0 0.0
        %1334 = vmatprep.subr.mxu0 0.0
        %1335 = vmatpush1.msra.mxu0 0.0
        %1336 = vmatprep.subr.mxu0 0.0
        %1337 = vmatpush1.msra.mxu0 0.0
        %1338 = vmatprep.subr.mxu0 0.0
        %1339 = vmatpush1.msra.mxu0 0.0
        %1340 = vmatprep.subr.mxu0 0.0
        %1341 = vmatpush1.msra.mxu0 0.0
        %1342 = vmatprep.subr.mxu0 0.0
        %1343 = vmatpush1.msra.mxu0 0.0
        %1344 = vmatprep.subr.mxu0 0.0
        %1345 = vmatpush1.msra.mxu0 0.0
        %1346 = vmatprep.mubr.f32.mxu0 0.0
        %1347 = vmatmul.mubr.f32.gmra.mrb[0].mxu0 %v1280
        %v1348 = vpop.f32.mrb[0].mxu0
        %v1349 = vadd.f32 0.0, %v1348
        %v1350 = vpop.f32.mrb[0].mxu0
        %1351 = vdwg.mxu0
        %1352 = vrot.lane.b32.xlu0 %v1190, 120
        %v1353 = vpop.permute.xlu0 %1352
        %1354 = vrot.lane.b32.xlu0 %v1114, 120
        %v1355 = vpop.permute.xlu0 %1354
        %v1356 = vsel %vm1191, %v1353, 0
        %v1358 = vsel %vm1191, %v1355, 0
        %1360 = vmatprep.subr.mxu0 0.0
        %1361 = vmatpush1.xpose.msra.mxu0 %v1358
        %1362 = vmatprep.subr.mxu0 0.0
        %1363 = vmatpush1.xpose.msra.mxu0 0.0
        %1364 = vmatprep.subr.mxu0 0.0
        %1365 = vmatpush1.xpose.msra.mxu0 0.0
        %1366 = vmatprep.subr.mxu0 0.0
        %1367 = vmatpush1.xpose.msra.mxu0 0.0
        %1368 = vmatprep.subr.mxu0 0.0
        %1369 = vmatpush1.xpose.msra.mxu0 0.0
        %1370 = vmatprep.subr.mxu0 0.0
        %1371 = vmatpush1.xpose.msra.mxu0 0.0
        %1372 = vmatprep.subr.mxu0 0.0
        %1373 = vmatpush1.xpose.msra.mxu0 0.0
        %1374 = vmatprep.subr.mxu0 0.0
        %1375 = vmatpush1.xpose.msra.mxu0 0.0
        %1376 = vmatprep.subr.mxu0 0.0
        %1377 = vmatpush1.xpose.msra.mxu0 0.0
        %1378 = vmatprep.subr.mxu0 0.0
        %1379 = vmatpush1.xpose.msra.mxu0 0.0
        %1380 = vmatprep.subr.mxu0 0.0
        %1381 = vmatpush1.xpose.msra.mxu0 0.0
        %1382 = vmatprep.subr.mxu0 0.0
        %1383 = vmatpush1.xpose.msra.mxu0 0.0
        %1384 = vmatprep.subr.mxu0 0.0
        %1385 = vmatpush1.xpose.msra.mxu0 0.0
        %1386 = vmatprep.subr.mxu0 0.0
        %1387 = vmatpush1.xpose.msra.mxu0 0.0
        %1388 = vmatprep.subr.mxu0 0.0
        %1389 = vmatpush1.xpose.msra.mxu0 0.0
        %1390 = vmatprep.subr.mxu0 0.0
        %1391 = vmatpush1.xpose.msra.mxu0 0.0
        %1392 = vmatprep.subr.mxu0 0.0
        %1393 = vmatpush1.xpose.msra.mxu0 0.0
        %1394 = vmatprep.subr.mxu0 0.0
        %1395 = vmatpush1.xpose.msra.mxu0 0.0
        %1396 = vmatprep.subr.mxu0 0.0
        %1397 = vmatpush1.xpose.msra.mxu0 0.0
        %1398 = vmatprep.subr.mxu0 0.0
        %1399 = vmatpush1.xpose.msra.mxu0 0.0
        %1400 = vmatprep.subr.mxu0 0.0
        %1401 = vmatpush1.xpose.msra.mxu0 0.0
        %1402 = vmatprep.subr.mxu0 0.0
        %1403 = vmatpush1.xpose.msra.mxu0 0.0
        %1404 = vmatprep.subr.mxu0 0.0
        %1405 = vmatpush1.xpose.msra.mxu0 0.0
        %1406 = vmatprep.subr.mxu0 0.0
        %1407 = vmatpush1.xpose.msra.mxu0 0.0
        %1408 = vmatprep.subr.mxu0 0.0
        %1409 = vmatpush1.xpose.msra.mxu0 0.0
        %1410 = vmatprep.subr.mxu0 0.0
        %1411 = vmatpush1.xpose.msra.mxu0 0.0
        %1412 = vmatprep.subr.mxu0 0.0
        %1413 = vmatpush1.xpose.msra.mxu0 0.0
        %1414 = vmatprep.subr.mxu0 0.0
        %1415 = vmatpush1.xpose.msra.mxu0 0.0
        %1416 = vmatprep.subr.mxu0 0.0
        %1417 = vmatpush1.xpose.msra.mxu0 0.0
        %1418 = vmatprep.subr.mxu0 0.0
        %1419 = vmatpush1.xpose.msra.mxu0 0.0
        %1420 = vmatprep.subr.mxu0 0.0
        %1421 = vmatpush1.xpose.msra.mxu0 0.0
        %1422 = vmatprep.subr.mxu0 0.0
        %1423 = vmatpush1.xpose.msra.mxu0 0.0
        %1424 = vmatprep.mubr.f32.mxu0 0.0
        %1425 = vmatmul.mubr.f32.gmra.mrb[0].mxu0 %v1356
        %v1426 = vpop.f32.mrb[0].mxu0
        %v1427 = vadd.f32 0.0, %v1426
        %v1428 = vpop.f32.mrb[0].mxu0
        %1429 = vdwg.mxu0
        %v1430 = vsel %vm1191, %v1427, -inf
        %1431 = vmax.xlane.f32.xlu0 %v1430
        %v1432 = vpop.xlane.xlu0 %1431
        %v1433 = vsub.f32 %v1427, %v1432
        %v1434 = vmul.f32 %v1433, 1.442695
        %v1435 = vpow.pop %v1434
        %v1436 = vsel %vm1191, %v1435, 0.0
        %1437 = vadd.xlane.f32.xlu0 %v1436
        %v1438 = vpop.xlane.xlu0 %1437
        %v1439 = vrcp.pop %v1438
        %v1440 = vmul.f32 %v1435, %v1439
        %1442 = vrot.lane.b32.xlu0 %v1187, 120
        %v1443 = vpop.permute.xlu0 %1442
        %v1446 = vsel %vm1191, %v1440, 0
        %1448 = vmatprep.subr.mxu0 0.0
        %1449 = vmatpush1.msra.mxu0 %v1443
        %1450 = vmatprep.subr.mxu0 0.0
        %1451 = vmatpush1.msra.mxu0 0.0
        %1452 = vmatprep.subr.mxu0 0.0
        %1453 = vmatpush1.msra.mxu0 0.0
        %1454 = vmatprep.subr.mxu0 0.0
        %1455 = vmatpush1.msra.mxu0 0.0
        %1456 = vmatprep.subr.mxu0 0.0
        %1457 = vmatpush1.msra.mxu0 0.0
        %1458 = vmatprep.subr.mxu0 0.0
        %1459 = vmatpush1.msra.mxu0 0.0
        %1460 = vmatprep.subr.mxu0 0.0
        %1461 = vmatpush1.msra.mxu0 0.0
        %1462 = vmatprep.subr.mxu0 0.0
        %1463 = vmatpush1.msra.mxu0 0.0
        %1464 = vmatprep.subr.mxu0 0.0
        %1465 = vmatpush1.msra.mxu0 0.0
        %1466 = vmatprep.subr.mxu0 0.0
        %1467 = vmatpush1.msra.mxu0 0.0
        %1468 = vmatprep.subr.mxu0 0.0
        %1469 = vmatpush1.msra.mxu0 0.0
        %1470 = vmatprep.subr.mxu0 0.0
        %1471 = vmatpush1.msra.mxu0 0.0
        %1472 = vmatprep.subr.mxu0 0.0
        %1473 = vmatpush1.msra.mxu0 0.0
        %1474 = vmatprep.subr.mxu0 0.0
        %1475 = vmatpush1.msra.mxu0 0.0
        %1476 = vmatprep.subr.mxu0 0.0
        %1477 = vmatpush1.msra.mxu0 0.0
        %1478 = vmatprep.subr.mxu0 0.0
        %1479 = vmatpush1.msra.mxu0 0.0
        %1480 = vmatprep.subr.mxu0 0.0
        %1481 = vmatpush1.msra.mxu0 0.0
        %1482 = vmatprep.subr.mxu0 0.0
        %1483 = vmatpush1.msra.mxu0 0.0
        %1484 = vmatprep.subr.mxu0 0.0
        %1485 = vmatpush1.msra.mxu0 0.0
        %1486 = vmatprep.subr.mxu0 0.0
        %1487 = vmatpush1.msra.mxu0 0.0
        %1488 = vmatprep.subr.mxu0 0.0
        %1489 = vmatpush1.msra.mxu0 0.0
        %1490 = vmatprep.subr.mxu0 0.0
        %1491 = vmatpush1.msra.mxu0 0.0
        %1492 = vmatprep.subr.mxu0 0.0
        %1493 = vmatpush1.msra.mxu0 0.0
        %1494 = vmatprep.subr.mxu0 0.0
        %1495 = vmatpush1.msra.mxu0 0.0
        %1496 = vmatprep.subr.mxu0 0.0
        %1497 = vmatpush1.msra.mxu0 0.0
        %1498 = vmatprep.subr.mxu0 0.0
        %1499 = vmatpush1.msra.mxu0 0.0
        %1500 = vmatprep.subr.mxu0 0.0
        %1501 = vmatpush1.msra.mxu0 0.0
        %1502 = vmatprep.subr.mxu0 0.0
        %1503 = vmatpush1.msra.mxu0 0.0
        %1504 = vmatprep.subr.mxu0 0.0
        %1505 = vmatpush1.msra.mxu0 0.0
        %1506 = vmatprep.subr.mxu0 0.0
        %1507 = vmatpush1.msra.mxu0 0.0
        %1508 = vmatprep.subr.mxu0 0.0
        %1509 = vmatpush1.msra.mxu0 0.0
        %1510 = vmatprep.subr.mxu0 0.0
        %1511 = vmatpush1.msra.mxu0 0.0
        %1512 = vmatprep.mubr.f32.mxu0 0.0
        %1513 = vmatmul.mubr.f32.gmra.mrb[0].mxu0 %v1446
        %v1514 = vpop.f32.mrb[0].mxu0
        %v1515 = vadd.f32 0.0, %v1514
        %v1516 = vpop.f32.mrb[0].mxu0
        %1517 = vdwg.mxu0
        %1518 = vrot.lane.b32.xlu0 %v1190, 112
        %v1519 = vpop.permute.xlu0 %1518
        %1520 = vrot.lane.b32.xlu0 %v1114, 112
        %v1521 = vpop.permute.xlu0 %1520
        %v1522 = vsel %vm1191, %v1519, 0
        %v1524 = vsel %vm1191, %v1521, 0
        %1526 = vmatprep.subr.mxu0 0.0
        %1527 = vmatpush1.xpose.msra.mxu0 %v1524
        %1528 = vmatprep.subr.mxu0 0.0
        %1529 = vmatpush1.xpose.msra.mxu0 0.0
        %1530 = vmatprep.subr.mxu0 0.0
        %1531 = vmatpush1.xpose.msra.mxu0 0.0
        %1532 = vmatprep.subr.mxu0 0.0
        %1533 = vmatpush1.xpose.msra.mxu0 0.0
        %1534 = vmatprep.subr.mxu0 0.0
        %1535 = vmatpush1.xpose.msra.mxu0 0.0
        %1536 = vmatprep.subr.mxu0 0.0
        %1537 = vmatpush1.xpose.msra.mxu0 0.0
        %1538 = vmatprep.subr.mxu0 0.0
        %1539 = vmatpush1.xpose.msra.mxu0 0.0
        %1540 = vmatprep.subr.mxu0 0.0
        %1541 = vmatpush1.xpose.msra.mxu0 0.0
        %1542 = vmatprep.subr.mxu0 0.0
        %1543 = vmatpush1.xpose.msra.mxu0 0.0
        %1544 = vmatprep.subr.mxu0 0.0
        %1545 = vmatpush1.xpose.msra.mxu0 0.0
        %1546 = vmatprep.subr.mxu0 0.0
        %1547 = vmatpush1.xpose.msra.mxu0 0.0
        %1548 = vmatprep.subr.mxu0 0.0
        %1549 = vmatpush1.xpose.msra.mxu0 0.0
        %1550 = vmatprep.subr.mxu0 0.0
        %1551 = vmatpush1.xpose.msra.mxu0 0.0
        %1552 = vmatprep.subr.mxu0 0.0
        %1553 = vmatpush1.xpose.msra.mxu0 0.0
        %1554 = vmatprep.subr.mxu0 0.0
        %1555 = vmatpush1.xpose.msra.mxu0 0.0
        %1556 = vmatprep.subr.mxu0 0.0
        %1557 = vmatpush1.xpose.msra.mxu0 0.0
        %1558 = vmatprep.subr.mxu0 0.0
        %1559 = vmatpush1.xpose.msra.mxu0 0.0
        %1560 = vmatprep.subr.mxu0 0.0
        %1561 = vmatpush1.xpose.msra.mxu0 0.0
        %1562 = vmatprep.subr.mxu0 0.0
        %1563 = vmatpush1.xpose.msra.mxu0 0.0
        %1564 = vmatprep.subr.mxu0 0.0
        %1565 = vmatpush1.xpose.msra.mxu0 0.0
        %1566 = vmatprep.subr.mxu0 0.0
        %1567 = vmatpush1.xpose.msra.mxu0 0.0
        %1568 = vmatprep.subr.mxu0 0.0
        %1569 = vmatpush1.xpose.msra.mxu0 0.0
        %1570 = vmatprep.subr.mxu0 0.0
        %1571 = vmatpush1.xpose.msra.mxu0 0.0
        %1572 = vmatprep.subr.mxu0 0.0
        %1573 = vmatpush1.xpose.msra.mxu0 0.0
        %1574 = vmatprep.subr.mxu0 0.0
        %1575 = vmatpush1.xpose.msra.mxu0 0.0
        %1576 = vmatprep.subr.mxu0 0.0
        %1577 = vmatpush1.xpose.msra.mxu0 0.0
        %1578 = vmatprep.subr.mxu0 0.0
        %1579 = vmatpush1.xpose.msra.mxu0 0.0
        %1580 = vmatprep.subr.mxu0 0.0
        %1581 = vmatpush1.xpose.msra.mxu0 0.0
        %1582 = vmatprep.subr.mxu0 0.0
        %1583 = vmatpush1.xpose.msra.mxu0 0.0
        %1584 = vmatprep.subr.mxu0 0.0
        %1585 = vmatpush1.xpose.msra.mxu0 0.0
        %1586 = vmatprep.subr.mxu0 0.0
        %1587 = vmatpush1.xpose.msra.mxu0 0.0
        %1588 = vmatprep.subr.mxu0 0.0
        %1589 = vmatpush1.xpose.msra.mxu0 0.0
        %1590 = vmatprep.mubr.f32.mxu0 0.0
        %1591 = vmatmul.mubr.f32.gmra.mrb[0].mxu0 %v1522
        %v1592 = vpop.f32.mrb[0].mxu0
        %v1593 = vadd.f32 0.0, %v1592
        %v1594 = vpop.f32.mrb[0].mxu0
        %1595 = vdwg.mxu0
        %v1596 = vsel %vm1191, %v1593, -inf
        %1597 = vmax.xlane.f32.xlu0 %v1596
        %v1598 = vpop.xlane.xlu0 %1597
        %v1599 = vsub.f32 %v1593, %v1598
        %v1600 = vmul.f32 %v1599, 1.442695
        %v1601 = vpow.pop %v1600
        %v1602 = vsel %vm1191, %v1601, 0.0
        %1603 = vadd.xlane.f32.xlu0 %v1602
        %v1604 = vpop.xlane.xlu0 %1603
        %v1605 = vrcp.pop %v1604
        %v1606 = vmul.f32 %v1601, %v1605
        %1607 = vrot.lane.b32.xlu0 %v1187, 112
        %v1608 = vpop.permute.xlu0 %1607
        %v1611 = vsel %vm1191, %v1606, 0
        %1613 = vmatprep.subr.mxu0 0.0
        %1614 = vmatpush1.msra.mxu0 %v1608
        %1615 = vmatprep.subr.mxu0 0.0
        %1616 = vmatpush1.msra.mxu0 0.0
        %1617 = vmatprep.subr.mxu0 0.0
        %1618 = vmatpush1.msra.mxu0 0.0
        %1619 = vmatprep.subr.mxu0 0.0
        %1620 = vmatpush1.msra.mxu0 0.0
        %1621 = vmatprep.subr.mxu0 0.0
        %1622 = vmatpush1.msra.mxu0 0.0
        %1623 = vmatprep.subr.mxu0 0.0
        %1624 = vmatpush1.msra.mxu0 0.0
        %1625 = vmatprep.subr.mxu0 0.0
        %1626 = vmatpush1.msra.mxu0 0.0
        %1627 = vmatprep.subr.mxu0 0.0
        %1628 = vmatpush1.msra.mxu0 0.0
        %1629 = vmatprep.subr.mxu0 0.0
        %1630 = vmatpush1.msra.mxu0 0.0
        %1631 = vmatprep.subr.mxu0 0.0
        %1632 = vmatpush1.msra.mxu0 0.0
        %1633 = vmatprep.subr.mxu0 0.0
        %1634 = vmatpush1.msra.mxu0 0.0
        %1635 = vmatprep.subr.mxu0 0.0
        %1636 = vmatpush1.msra.mxu0 0.0
        %1637 = vmatprep.subr.mxu0 0.0
        %1638 = vmatpush1.msra.mxu0 0.0
        %1639 = vmatprep.subr.mxu0 0.0
        %1640 = vmatpush1.msra.mxu0 0.0
        %1641 = vmatprep.subr.mxu0 0.0
        %1642 = vmatpush1.msra.mxu0 0.0
        %1643 = vmatprep.subr.mxu0 0.0
        %1644 = vmatpush1.msra.mxu0 0.0
        %1645 = vmatprep.subr.mxu0 0.0
        %1646 = vmatpush1.msra.mxu0 0.0
        %1647 = vmatprep.subr.mxu0 0.0
        %1648 = vmatpush1.msra.mxu0 0.0
        %1649 = vmatprep.subr.mxu0 0.0
        %1650 = vmatpush1.msra.mxu0 0.0
        %1651 = vmatprep.subr.mxu0 0.0
        %1652 = vmatpush1.msra.mxu0 0.0
        %1653 = vmatprep.subr.mxu0 0.0
        %1654 = vmatpush1.msra.mxu0 0.0
        %1655 = vmatprep.subr.mxu0 0.0
        %1656 = vmatpush1.msra.mxu0 0.0
        %1657 = vmatprep.subr.mxu0 0.0
        %1658 = vmatpush1.msra.mxu0 0.0
        %1659 = vmatprep.subr.mxu0 0.0
        %1660 = vmatpush1.msra.mxu0 0.0
        %1661 = vmatprep.subr.mxu0 0.0
        %1662 = vmatpush1.msra.mxu0 0.0
        %1663 = vmatprep.subr.mxu0 0.0
        %1664 = vmatpush1.msra.mxu0 0.0
        %1665 = vmatprep.subr.mxu0 0.0
        %1666 = vmatpush1.msra.mxu0 0.0
        %1667 = vmatprep.subr.mxu0 0.0
        %1668 = vmatpush1.msra.mxu0 0.0
        %1669 = vmatprep.subr.mxu0 0.0
        %1670 = vmatpush1.msra.mxu0 0.0
        %1671 = vmatprep.subr.mxu0 0.0
        %1672 = vmatpush1.msra.mxu0 0.0
        %1673 = vmatprep.subr.mxu0 0.0
        %1674 = vmatpush1.msra.mxu0 0.0
        %1675 = vmatprep.subr.mxu0 0.0
        %1676 = vmatpush1.msra.mxu0 0.0
        %1677 = vmatprep.mubr.f32.mxu0 0.0
        %1678 = vmatmul.mubr.f32.gmra.mrb[0].mxu0 %v1611
        %v1679 = vpop.f32.mrb[0].mxu0
        %v1680 = vadd.f32 0.0, %v1679
        %v1681 = vpop.f32.mrb[0].mxu0
        %1682 = vdwg.mxu0
        %1683 = vrot.lane.b32.xlu0 %v1190, 104
        %v1684 = vpop.permute.xlu0 %1683
        %1685 = vrot.lane.b32.xlu0 %v1114, 104
        %v1686 = vpop.permute.xlu0 %1685
        %v1687 = vsel %vm1191, %v1684, 0
        %v1689 = vsel %vm1191, %v1686, 0
        %1691 = vmatprep.subr.mxu0 0.0
        %1692 = vmatpush1.xpose.msra.mxu0 %v1689
        %1693 = vmatprep.subr.mxu0 0.0
        %1694 = vmatpush1.xpose.msra.mxu0 0.0
        %1695 = vmatprep.subr.mxu0 0.0
        %1696 = vmatpush1.xpose.msra.mxu0 0.0
        %1697 = vmatprep.subr.mxu0 0.0
        %1698 = vmatpush1.xpose.msra.mxu0 0.0
        %1699 = vmatprep.subr.mxu0 0.0
        %1700 = vmatpush1.xpose.msra.mxu0 0.0
        %1701 = vmatprep.subr.mxu0 0.0
        %1702 = vmatpush1.xpose.msra.mxu0 0.0
        %1703 = vmatprep.subr.mxu0 0.0
        %1704 = vmatpush1.xpose.msra.mxu0 0.0
        %1705 = vmatprep.subr.mxu0 0.0
        %1706 = vmatpush1.xpose.msra.mxu0 0.0
        %1707 = vmatprep.subr.mxu0 0.0
        %1708 = vmatpush1.xpose.msra.mxu0 0.0
        %1709 = vmatprep.subr.mxu0 0.0
        %1710 = vmatpush1.xpose.msra.mxu0 0.0
        %1711 = vmatprep.subr.mxu0 0.0
        %1712 = vmatpush1.xpose.msra.mxu0 0.0
        %1713 = vmatprep.subr.mxu0 0.0
        %1714 = vmatpush1.xpose.msra.mxu0 0.0
        %1715 = vmatprep.subr.mxu0 0.0
        %1716 = vmatpush1.xpose.msra.mxu0 0.0
        %1717 = vmatprep.subr.mxu0 0.0
        %1718 = vmatpush1.xpose.msra.mxu0 0.0
        %1719 = vmatprep.subr.mxu0 0.0
        %1720 = vmatpush1.xpose.msra.mxu0 0.0
        %1721 = vmatprep.subr.mxu0 0.0
        %1722 = vmatpush1.xpose.msra.mxu0 0.0
        %1723 = vmatprep.subr.mxu0 0.0
        %1724 = vmatpush1.xpose.msra.mxu0 0.0
        %1725 = vmatprep.subr.mxu0 0.0
        %1726 = vmatpush1.xpose.msra.mxu0 0.0
        %1727 = vmatprep.subr.mxu0 0.0
        %1728 = vmatpush1.xpose.msra.mxu0 0.0
        %1729 = vmatprep.subr.mxu0 0.0
        %1730 = vmatpush1.xpose.msra.mxu0 0.0
        %1731 = vmatprep.subr.mxu0 0.0
        %1732 = vmatpush1.xpose.msra.mxu0 0.0
        %1733 = vmatprep.subr.mxu0 0.0
        %1734 = vmatpush1.xpose.msra.mxu0 0.0
        %1735 = vmatprep.subr.mxu0 0.0
        %1736 = vmatpush1.xpose.msra.mxu0 0.0
        %1737 = vmatprep.subr.mxu0 0.0
        %1738 = vmatpush1.xpose.msra.mxu0 0.0
        %1739 = vmatprep.subr.mxu0 0.0
        %1740 = vmatpush1.xpose.msra.mxu0 0.0
        %1741 = vmatprep.subr.mxu0 0.0
        %1742 = vmatpush1.xpose.msra.mxu0 0.0
        %1743 = vmatprep.subr.mxu0 0.0
        %1744 = vmatpush1.xpose.msra.mxu0 0.0
        %1745 = vmatprep.subr.mxu0 0.0
        %1746 = vmatpush1.xpose.msra.mxu0 0.0
        %1747 = vmatprep.subr.mxu0 0.0
        %1748 = vmatpush1.xpose.msra.mxu0 0.0
        %1749 = vmatprep.subr.mxu0 0.0
        %1750 = vmatpush1.xpose.msra.mxu0 0.0
        %1751 = vmatprep.subr.mxu0 0.0
        %1752 = vmatpush1.xpose.msra.mxu0 0.0
        %1753 = vmatprep.subr.mxu0 0.0
        %1754 = vmatpush1.xpose.msra.mxu0 0.0
        %1755 = vmatprep.mubr.f32.mxu0 0.0
        %1756 = vmatmul.mubr.f32.gmra.mrb[0].mxu0 %v1687
        %v1757 = vpop.f32.mrb[0].mxu0
        %v1758 = vadd.f32 0.0, %v1757
        %v1759 = vpop.f32.mrb[0].mxu0
        %1760 = vdwg.mxu0
        %v1761 = vsel %vm1191, %v1758, -inf
        %1762 = vmax.xlane.f32.xlu0 %v1761
        %v1763 = vpop.xlane.xlu0 %1762
        %v1764 = vsub.f32 %v1758, %v1763
        %v1765 = vmul.f32 %v1764, 1.442695
        %v1766 = vpow.pop %v1765
        %v1767 = vsel %vm1191, %v1766, 0.0
        %1768 = vadd.xlane.f32.xlu0 %v1767
        %v1769 = vpop.xlane.xlu0 %1768
        %v1770 = vrcp.pop %v1769
        %v1771 = vmul.f32 %v1766, %v1770
        %1772 = vrot.lane.b32.xlu0 %v1187, 104
        %v1773 = vpop.permute.xlu0 %1772
        %v1776 = vsel %vm1191, %v1771, 0
        %1778 = vmatprep.subr.mxu0 0.0
        %1779 = vmatpush1.msra.mxu0 %v1773
        %1780 = vmatprep.subr.mxu0 0.0
        %1781 = vmatpush1.msra.mxu0 0.0
        %1782 = vmatprep.subr.mxu0 0.0
        %1783 = vmatpush1.msra.mxu0 0.0
        %1784 = vmatprep.subr.mxu0 0.0
        %1785 = vmatpush1.msra.mxu0 0.0
        %1786 = vmatprep.subr.mxu0 0.0
        %1787 = vmatpush1.msra.mxu0 0.0
        %1788 = vmatprep.subr.mxu0 0.0
        %1789 = vmatpush1.msra.mxu0 0.0
        %1790 = vmatprep.subr.mxu0 0.0
        %1791 = vmatpush1.msra.mxu0 0.0
        %1792 = vmatprep.subr.mxu0 0.0
        %1793 = vmatpush1.msra.mxu0 0.0
        %1794 = vmatprep.subr.mxu0 0.0
        %1795 = vmatpush1.msra.mxu0 0.0
        %1796 = vmatprep.subr.mxu0 0.0
        %1797 = vmatpush1.msra.mxu0 0.0
        %1798 = vmatprep.subr.mxu0 0.0
        %1799 = vmatpush1.msra.mxu0 0.0
        %1800 = vmatprep.subr.mxu0 0.0
        %1801 = vmatpush1.msra.mxu0 0.0
        %1802 = vmatprep.subr.mxu0 0.0
        %1803 = vmatpush1.msra.mxu0 0.0
        %1804 = vmatprep.subr.mxu0 0.0
        %1805 = vmatpush1.msra.mxu0 0.0
        %1806 = vmatprep.subr.mxu0 0.0
        %1807 = vmatpush1.msra.mxu0 0.0
        %1808 = vmatprep.subr.mxu0 0.0
        %1809 = vmatpush1.msra.mxu0 0.0
        %1810 = vmatprep.subr.mxu0 0.0
        %1811 = vmatpush1.msra.mxu0 0.0
        %1812 = vmatprep.subr.mxu0 0.0
        %1813 = vmatpush1.msra.mxu0 0.0
        %1814 = vmatprep.subr.mxu0 0.0
        %1815 = vmatpush1.msra.mxu0 0.0
        %1816 = vmatprep.subr.mxu0 0.0
        %1817 = vmatpush1.msra.mxu0 0.0
        %1818 = vmatprep.subr.mxu0 0.0
        %1819 = vmatpush1.msra.mxu0 0.0
        %1820 = vmatprep.subr.mxu0 0.0
        %1821 = vmatpush1.msra.mxu0 0.0
        %1822 = vmatprep.subr.mxu0 0.0
        %1823 = vmatpush1.msra.mxu0 0.0
        %1824 = vmatprep.subr.mxu0 0.0
        %1825 = vmatpush1.msra.mxu0 0.0
        %1826 = vmatprep.subr.mxu0 0.0
        %1827 = vmatpush1.msra.mxu0 0.0
        %1828 = vmatprep.subr.mxu0 0.0
        %1829 = vmatpush1.msra.mxu0 0.0
        %1830 = vmatprep.subr.mxu0 0.0
        %1831 = vmatpush1.msra.mxu0 0.0
        %1832 = vmatprep.subr.mxu0 0.0
        %1833 = vmatpush1.msra.mxu0 0.0
        %1834 = vmatprep.subr.mxu0 0.0
        %1835 = vmatpush1.msra.mxu0 0.0
        %1836 = vmatprep.subr.mxu0 0.0
        %1837 = vmatpush1.msra.mxu0 0.0
        %1838 = vmatprep.subr.mxu0 0.0
        %1839 = vmatpush1.msra.mxu0 0.0
        %1840 = vmatprep.subr.mxu0 0.0
        %1841 = vmatpush1.msra.mxu0 0.0
        %1842 = vmatprep.mubr.f32.mxu0 0.0
        %1843 = vmatmul.mubr.f32.gmra.mrb[0].mxu0 %v1776
        %v1844 = vpop.f32.mrb[0].mxu0
        %v1845 = vadd.f32 0.0, %v1844
        %v1846 = vpop.f32.mrb[0].mxu0
        %1847 = vdwg.mxu0
        %1848 = vrot.lane.b32.xlu0 %v1440, 8
        %v1849 = vpop.permute.xlu0 %1848
        %1851 = vrot.lane.b32.xlu0 %v1606, 16
        %v1852 = vpop.permute.xlu0 %1851
        %1854 = vrot.lane.b32.xlu0 %v1771, 24
        %v1855 = vpop.permute.xlu0 %1854
        %v1857 = vsel %vm1191, %v1278, %v1849
        %vm1858 = vcmask 130048
        %v1859 = vsel %vm1858, %v1857, %v1852
        %vm1860 = vcmask 195584
        %v1861 = vsel %vm1860, %v1859, %v1855
        %1862 = vst.msk [vmem:[%s937] sm:$0xff] %vm973, %v1861
        %1864 = vrot.lane.b32.xlu0 %v1515, 8
        %v1865 = vpop.permute.xlu0 %1864
        %1868 = vrot.lane.b32.xlu0 %v1680, 16
        %v1869 = vpop.permute.xlu0 %1868
        %1872 = vrot.lane.b32.xlu0 %v1845, 24
        %v1873 = vpop.permute.xlu0 %1872
        %v1875 = vsel %vm1191, %v1349, %v1865
        %v1876 = vsel %vm1858, %v1875, %v1869
        %v1877 = vsel %vm1860, %v1876, %v1873
        %v1879 = vsel %vm973, %v1877, 0
        %1881 = vmatprep.subr.mxu0 0.0
        %1882 = vmatpush1.msra.mxu0 %v967
        %1883 = vmatprep.subr.mxu0 0.0
        %1884 = vmatpush1.msra.mxu0 %v968
        %1885 = vmatprep.subr.mxu0 0.0
        %1886 = vmatpush1.msra.mxu0 %v969
        %1887 = vmatprep.subr.mxu0 0.0
        %1888 = vmatpush1.msra.mxu0 %v970
        %1889 = vmatprep.subr.mxu0 0.0
        %1890 = vmatpush1.msra.mxu0 0.0
        %1891 = vmatprep.subr.mxu0 0.0
        %1892 = vmatpush1.msra.mxu0 0.0
        %1893 = vmatprep.subr.mxu0 0.0
        %1894 = vmatpush1.msra.mxu0 0.0
        %1895 = vmatprep.subr.mxu0 0.0
        %1896 = vmatpush1.msra.mxu0 0.0
        %1897 = vmatprep.subr.mxu0 0.0
        %1898 = vmatpush1.msra.mxu0 0.0
        %1899 = vmatprep.subr.mxu0 0.0
        %1900 = vmatpush1.msra.mxu0 0.0
        %1901 = vmatprep.subr.mxu0 0.0
        %1902 = vmatpush1.msra.mxu0 0.0
        %1903 = vmatprep.subr.mxu0 0.0
        %1904 = vmatpush1.msra.mxu0 0.0
        %1905 = vmatprep.subr.mxu0 0.0
        %1906 = vmatpush1.msra.mxu0 0.0
        %1907 = vmatprep.subr.mxu0 0.0
        %1908 = vmatpush1.msra.mxu0 0.0
        %1909 = vmatprep.subr.mxu0 0.0
        %1910 = vmatpush1.msra.mxu0 0.0
        %1911 = vmatprep.subr.mxu0 0.0
        %1912 = vmatpush1.msra.mxu0 0.0
        %1913 = vmatprep.subr.mxu0 0.0
        %1914 = vmatpush1.msra.mxu0 0.0
        %1915 = vmatprep.subr.mxu0 0.0
        %1916 = vmatpush1.msra.mxu0 0.0
        %1917 = vmatprep.subr.mxu0 0.0
        %1918 = vmatpush1.msra.mxu0 0.0
        %1919 = vmatprep.subr.mxu0 0.0
        %1920 = vmatpush1.msra.mxu0 0.0
        %1921 = vmatprep.subr.mxu0 0.0
        %1922 = vmatpush1.msra.mxu0 0.0
        %1923 = vmatprep.subr.mxu0 0.0
        %1924 = vmatpush1.msra.mxu0 0.0
        %1925 = vmatprep.subr.mxu0 0.0
        %1926 = vmatpush1.msra.mxu0 0.0
        %1927 = vmatprep.subr.mxu0 0.0
        %1928 = vmatpush1.msra.mxu0 0.0
        %1929 = vmatprep.subr.mxu0 0.0
        %1930 = vmatpush1.msra.mxu0 0.0
        %1931 = vmatprep.subr.mxu0 0.0
        %1932 = vmatpush1.msra.mxu0 0.0
        %1933 = vmatprep.subr.mxu0 0.0
        %1934 = vmatpush1.msra.mxu0 0.0
        %1935 = vmatprep.subr.mxu0 0.0
        %1936 = vmatpush1.msra.mxu0 0.0
        %1937 = vmatprep.subr.mxu0 0.0
        %1938 = vmatpush1.msra.mxu0 0.0
        %1939 = vmatprep.subr.mxu0 0.0
        %1940 = vmatpush1.msra.mxu0 0.0
        %1941 = vmatprep.subr.mxu0 0.0
        %1942 = vmatpush1.msra.mxu0 0.0
        %1943 = vmatprep.subr.mxu0 0.0
        %1944 = vmatpush1.msra.mxu0 0.0
        %1945 = vmatprep.mubr.f32.mxu0 0.0
        %1946 = vmatmul.mubr.f32.gmra.mrb[0].mxu0 %v1879
        %v1947 = vpop.f32.mrb[0].mxu0
        %v1948 = vadd.f32 %v954, %v1947
        %v1949 = vpop.f32.mrb[0].mxu0
        %1950 = vdwg.mxu0
        %v1951 = vsel %vm973, %v1948, 0.0
        %1952 = vadd.xlane.f32.xlu0 %v1951
        %v1953 = vpop.xlane.xlu0 %1952
        %v1954 = vrcp.pop 32.0
        %v1955 = vmul.f32 %v1953, %v1954
        %v1956 = vsub.f32 %v1948, %v1955
        %v1957 = vmul.f32 %v1956, %v1956
        %v1958 = vsel %vm973, %v1957, 0.0
        %1959 = vadd.xlane.f32.xlu0 %v1958
        %v1960 = vpop.xlane.xlu0 %1959
        %v1961 = vmul.f32 %v1960, %v1954
        %v1962 = vadd.f32 %v1961, 1e-06
        %v1963 = vrsqrt.pop %v1962
        %v1964 = vmul.f32 %v1956, %v1963
        %v1966 = vlaneseq
        %v1967 = vshrl.u32 %v1966, 7
        %v1968 = vsub.s32 0, %v1967
        %v1969 = vrot.slane %v971, %v1968
        %v1971 = vmul.f32 %v1964, %v1969
        %v1973 = vlaneseq
        %v1974 = vshrl.u32 %v1973, 7
        %v1975 = vsub.s32 0, %v1974
        %v1976 = vrot.slane %v972, %v1975
        %v1978 = vadd.f32 %v1971, %v1976
        %v1979 = vld [vmem:[%s9] sm:$0xff]
        %v1980 = vld [vmem:[%s9 + $0x8] sm:$0xff]
        %v1981 = vld [vmem:[%s9 + $0x10] sm:$0xff]
        %v1982 = vld [vmem:[%s9 + $0x18] sm:$0xff]
        %v1983 = vld [vmem:[#allocation13] sm:$0xff]
        %v1984 = vld [vmem:[#allocation13 + $0x8] sm:$0xff]
        %v1985 = vld [vmem:[#allocation13 + $0x10] sm:$0xff]
        %v1986 = vld [vmem:[#allocation13 + $0x18] sm:$0xff]
        %v1987 = vld [vmem:[#allocation14] sm:$0xff]
        %v1988 = vld [vmem:[#allocation14 + $0x8] sm:$0xff]
        %v1989 = vld [vmem:[#allocation14 + $0x10] sm:$0xff]
        %v1990 = vld [vmem:[#allocation14 + $0x18] sm:$0xff]
        %v1991 = vld [vmem:[#allocation16] sm:$0xff]
        %v1992 = vld [vmem:[#allocation16 + $0x8] sm:$0xff]
        %v1993 = vld [vmem:[#allocation16 + $0x10] sm:$0xff]
        %v1994 = vld [vmem:[#allocation16 + $0x18] sm:$0xff]
        %v1995 = vld [vmem:[#allocation17] sm:$0x1]
        %v1996 = vld [vmem:[#allocation19] sm:$0x1]
        %v1998 = vsel %vm973, %v1978, 0
        %2000 = vmatprep.subr.mxu0 0.0
        %2001 = vmatpush1.msra.mxu0 %v1979
        %2002 = vmatprep.subr.mxu0 0.0
        %2003 = vmatpush1.msra.mxu0 %v1980
        %2004 = vmatprep.subr.mxu0 0.0
        %2005 = vmatpush1.msra.mxu0 %v1981
        %2006 = vmatprep.subr.mxu0 0.0
        %2007 = vmatpush1.msra.mxu0 %v1982
        %2008 = vmatprep.subr.mxu0 0.0
        %2009 = vmatpush1.msra.mxu0 0.0
        %2010 = vmatprep.subr.mxu0 0.0
        %2011 = vmatpush1.msra.mxu0 0.0
        %2012 = vmatprep.subr.mxu0 0.0
        %2013 = vmatpush1.msra.mxu0 0.0
        %2014 = vmatprep.subr.mxu0 0.0
        %2015 = vmatpush1.msra.mxu0 0.0
        %2016 = vmatprep.subr.mxu0 0.0
        %2017 = vmatpush1.msra.mxu0 0.0
        %2018 = vmatprep.subr.mxu0 0.0
        %2019 = vmatpush1.msra.mxu0 0.0
        %2020 = vmatprep.subr.mxu0 0.0
        %2021 = vmatpush1.msra.mxu0 0.0
        %2022 = vmatprep.subr.mxu0 0.0
        %2023 = vmatpush1.msra.mxu0 0.0
        %2024 = vmatprep.subr.mxu0 0.0
        %2025 = vmatpush1.msra.mxu0 0.0
        %2026 = vmatprep.subr.mxu0 0.0
        %2027 = vmatpush1.msra.mxu0 0.0
        %2028 = vmatprep.subr.mxu0 0.0
        %2029 = vmatpush1.msra.mxu0 0.0
        %2030 = vmatprep.subr.mxu0 0.0
        %2031 = vmatpush1.msra.mxu0 0.0
        %2032 = vmatprep.subr.mxu0 0.0
        %2033 = vmatpush1.msra.mxu0 0.0
        %2034 = vmatprep.subr.mxu0 0.0
        %2035 = vmatpush1.msra.mxu0 0.0
        %2036 = vmatprep.subr.mxu0 0.0
        %2037 = vmatpush1.msra.mxu0 0.0
        %2038 = vmatprep.subr.mxu0 0.0
        %2039 = vmatpush1.msra.mxu0 0.0
        %2040 = vmatprep.subr.mxu0 0.0
        %2041 = vmatpush1.msra.mxu0 0.0
        %2042 = vmatprep.subr.mxu0 0.0
        %2043 = vmatpush1.msra.mxu0 0.0
        %2044 = vmatprep.subr.mxu0 0.0
        %2045 = vmatpush1.msra.mxu0 0.0
        %2046 = vmatprep.subr.mxu0 0.0
        %2047 = vmatpush1.msra.mxu0 0.0
        %2048 = vmatprep.subr.mxu0 0.0
        %2049 = vmatpush1.msra.mxu0 0.0
        %2050 = vmatprep.subr.mxu0 0.0
        %2051 = vmatpush1.msra.mxu0 0.0
        %2052 = vmatprep.subr.mxu0 0.0
        %2053 = vmatpush1.msra.mxu0 0.0
        %2054 = vmatprep.subr.mxu0 0.0
        %2055 = vmatpush1.msra.mxu0 0.0
        %2056 = vmatprep.subr.mxu0 0.0
        %2057 = vmatpush1.msra.mxu0 0.0
        %2058 = vmatprep.subr.mxu0 0.0
        %2059 = vmatpush1.msra.mxu0 0.0
        %2060 = vmatprep.subr.mxu0 0.0
        %2061 = vmatpush1.msra.mxu0 0.0
        %2062 = vmatprep.subr.mxu0 0.0
        %2063 = vmatpush1.msra.mxu0 0.0
        %2064 = vmatprep.mubr.f32.mxu0 0.0
        %2065 = vmatmul.mubr.f32.gmra.mrb[0].mxu0 %v1998
        %v2066 = vpop.f32.mrb[0].mxu0
        %v2067 = vadd.f32 0.0, %v2066
        %v2068 = vpop.f32.mrb[0].mxu0
        %2069 = vdwg.mxu0
        %v2071 = vsel %vm973, %v951, 0
        %v2074 = vsel %vm973, %v952, 0
        %2076 = vmatprep.subr.mxu0 0.0
        %2077 = vmatpush1.msra.mxu0 %v1983
        %2078 = vmatprep.subr.mxu0 0.0
        %2079 = vmatpush1.msra.mxu0 %v1984
        %2080 = vmatprep.subr.mxu0 0.0
        %2081 = vmatpush1.msra.mxu0 %v1985
        %2082 = vmatprep.subr.mxu0 0.0
        %2083 = vmatpush1.msra.mxu0 %v1986
        %2084 = vmatprep.subr.mxu0 0.0
        %2085 = vmatpush1.msra.mxu0 0.0
        %2086 = vmatprep.subr.mxu0 0.0
        %2087 = vmatpush1.msra.mxu0 0.0
        %2088 = vmatprep.subr.mxu0 0.0
        %2089 = vmatpush1.msra.mxu0 0.0
        %2090 = vmatprep.subr.mxu0 0.0
        %2091 = vmatpush1.msra.mxu0 0.0
        %2092 = vmatprep.subr.mxu0 0.0
        %2093 = vmatpush1.msra.mxu0 0.0
        %2094 = vmatprep.subr.mxu0 0.0
        %2095 = vmatpush1.msra.mxu0 0.0
        %2096 = vmatprep.subr.mxu0 0.0
        %2097 = vmatpush1.msra.mxu0 0.0
        %2098 = vmatprep.subr.mxu0 0.0
        %2099 = vmatpush1.msra.mxu0 0.0
        %2100 = vmatprep.subr.mxu0 0.0
        %2101 = vmatpush1.msra.mxu0 0.0
        %2102 = vmatprep.subr.mxu0 0.0
        %2103 = vmatpush1.msra.mxu0 0.0
        %2104 = vmatprep.subr.mxu0 0.0
        %2105 = vmatpush1.msra.mxu0 0.0
        %2106 = vmatprep.subr.mxu0 0.0
        %2107 = vmatpush1.msra.mxu0 0.0
        %2108 = vmatprep.subr.mxu0 0.0
        %2109 = vmatpush1.msra.mxu0 0.0
        %2110 = vmatprep.subr.mxu0 0.0
        %2111 = vmatpush1.msra.mxu0 0.0
        %2112 = vmatprep.subr.mxu0 0.0
        %2113 = vmatpush1.msra.mxu0 0.0
        %2114 = vmatprep.subr.mxu0 0.0
        %2115 = vmatpush1.msra.mxu0 0.0
        %2116 = vmatprep.subr.mxu0 0.0
        %2117 = vmatpush1.msra.mxu0 0.0
        %2118 = vmatprep.subr.mxu0 0.0
        %2119 = vmatpush1.msra.mxu0 0.0
        %2120 = vmatprep.subr.mxu0 0.0
        %2121 = vmatpush1.msra.mxu0 0.0
        %2122 = vmatprep.subr.mxu0 0.0
        %2123 = vmatpush1.msra.mxu0 0.0
        %2124 = vmatprep.subr.mxu0 0.0
        %2125 = vmatpush1.msra.mxu0 0.0
        %2126 = vmatprep.subr.mxu0 0.0
        %2127 = vmatpush1.msra.mxu0 0.0
        %2128 = vmatprep.subr.mxu0 0.0
        %2129 = vmatpush1.msra.mxu0 0.0
        %2130 = vmatprep.subr.mxu0 0.0
        %2131 = vmatpush1.msra.mxu0 0.0
        %2132 = vmatprep.subr.mxu0 0.0
        %2133 = vmatpush1.msra.mxu0 0.0
        %2134 = vmatprep.subr.mxu0 0.0
        %2135 = vmatpush1.msra.mxu0 0.0
        %2136 = vmatprep.subr.mxu0 0.0
        %2137 = vmatpush1.msra.mxu0 0.0
        %2138 = vmatprep.subr.mxu0 0.0
        %2139 = vmatpush1.msra.mxu0 0.0
        %2140 = vmatprep.mubr.f32.mxu0 0.0
        %2141 = vmatmul.mubr.f32.gmra.mrb[0].mxu0 %v2071
        %v2142 = vpop.f32.mrb[0].mxu0
        %v2143 = vadd.f32 0.0, %v2142
        %v2144 = vpop.f32.mrb[0].mxu0
        %2145 = vmatprep.mubr.f32.mxu0 0.0
        %2146 = vmatmul.mubr.f32.gmra.mrb[0].mxu0 %v2074
        %v2147 = vpop.f32.mrb[0].mxu0
        %v2148 = vadd.f32 0.0, %v2147
        %v2149 = vpop.f32.mrb[0].mxu0
        %2150 = vdwg.mxu0
        %2151 = vmatprep.subr.mxu0 0.0
        %2152 = vmatpush1.msra.mxu0 %v1987
        %2153 = vmatprep.subr.mxu0 0.0
        %2154 = vmatpush1.msra.mxu0 %v1988
        %2155 = vmatprep.subr.mxu0 0.0
        %2156 = vmatpush1.msra.mxu0 %v1989
        %2157 = vmatprep.subr.mxu0 0.0
        %2158 = vmatpush1.msra.mxu0 %v1990
        %2159 = vmatprep.subr.mxu0 0.0
        %2160 = vmatpush1.msra.mxu0 0.0
        %2161 = vmatprep.subr.mxu0 0.0
        %2162 = vmatpush1.msra.mxu0 0.0
        %2163 = vmatprep.subr.mxu0 0.0
        %2164 = vmatpush1.msra.mxu0 0.0
        %2165 = vmatprep.subr.mxu0 0.0
        %2166 = vmatpush1.msra.mxu0 0.0
        %2167 = vmatprep.subr.mxu0 0.0
        %2168 = vmatpush1.msra.mxu0 0.0
        %2169 = vmatprep.subr.mxu0 0.0
        %2170 = vmatpush1.msra.mxu0 0.0
        %2171 = vmatprep.subr.mxu0 0.0
        %2172 = vmatpush1.msra.mxu0 0.0
        %2173 = vmatprep.subr.mxu0 0.0
        %2174 = vmatpush1.msra.mxu0 0.0
        %2175 = vmatprep.subr.mxu0 0.0
        %2176 = vmatpush1.msra.mxu0 0.0
        %2177 = vmatprep.subr.mxu0 0.0
        %2178 = vmatpush1.msra.mxu0 0.0
        %2179 = vmatprep.subr.mxu0 0.0
        %2180 = vmatpush1.msra.mxu0 0.0
        %2181 = vmatprep.subr.mxu0 0.0
        %2182 = vmatpush1.msra.mxu0 0.0
        %2183 = vmatprep.subr.mxu0 0.0
        %2184 = vmatpush1.msra.mxu0 0.0
        %2185 = vmatprep.subr.mxu0 0.0
        %2186 = vmatpush1.msra.mxu0 0.0
        %2187 = vmatprep.subr.mxu0 0.0
        %2188 = vmatpush1.msra.mxu0 0.0
        %2189 = vmatprep.subr.mxu0 0.0
        %2190 = vmatpush1.msra.mxu0 0.0
        %2191 = vmatprep.subr.mxu0 0.0
        %2192 = vmatpush1.msra.mxu0 0.0
        %2193 = vmatprep.subr.mxu0 0.0
        %2194 = vmatpush1.msra.mxu0 0.0
        %2195 = vmatprep.subr.mxu0 0.0
        %2196 = vmatpush1.msra.mxu0 0.0
        %2197 = vmatprep.subr.mxu0 0.0
        %2198 = vmatpush1.msra.mxu0 0.0
        %2199 = vmatprep.subr.mxu0 0.0
        %2200 = vmatpush1.msra.mxu0 0.0
        %2201 = vmatprep.subr.mxu0 0.0
        %2202 = vmatpush1.msra.mxu0 0.0
        %2203 = vmatprep.subr.mxu0 0.0
        %2204 = vmatpush1.msra.mxu0 0.0
        %2205 = vmatprep.subr.mxu0 0.0
        %2206 = vmatpush1.msra.mxu0 0.0
        %2207 = vmatprep.subr.mxu0 0.0
        %2208 = vmatpush1.msra.mxu0 0.0
        %2209 = vmatprep.subr.mxu0 0.0
        %2210 = vmatpush1.msra.mxu0 0.0
        %2211 = vmatprep.subr.mxu0 0.0
        %2212 = vmatpush1.msra.mxu0 0.0
        %2213 = vmatprep.subr.mxu0 0.0
        %2214 = vmatpush1.msra.mxu0 0.0
        %2215 = vmatprep.mubr.f32.mxu0 0.0
        %2216 = vmatmul.mubr.f32.gmra.mrb[0].mxu0 %v2071
        %v2217 = vpop.f32.mrb[0].mxu0
        %v2218 = vadd.f32 0.0, %v2217
        %v2219 = vpop.f32.mrb[0].mxu0
        %2220 = vmatprep.mubr.f32.mxu0 0.0
        %2221 = vmatmul.mubr.f32.gmra.mrb[0].mxu0 %v2074
        %v2222 = vpop.f32.mrb[0].mxu0
        %v2223 = vadd.f32 0.0, %v2222
        %v2224 = vpop.f32.mrb[0].mxu0
        %2225 = vdwg.mxu0
        %v2226 = vmul.f32 %v2067, 0.35355338
        %v2228 = vsel %vm1191, %v2226, 0
        %v2231 = vsel %vm1191, %v2143, 0
        %v2234 = vsel %vm1191, %v2148, 0
        %2236 = vmatprep.subr.mxu0 0.0
        %2237 = vmatpush1.xpose.msra.mxu0 %v2231
        %2238 = vmatprep.subr.mxu0 0.0
        %2239 = vmatpush1.xpose.msra.mxu0 %v2234
        %2240 = vmatprep.subr.mxu0 0.0
        %2241 = vmatpush1.xpose.msra.mxu0 0.0
        %2242 = vmatprep.subr.mxu0 0.0
        %2243 = vmatpush1.xpose.msra.mxu0 0.0
        %2244 = vmatprep.subr.mxu0 0.0
        %2245 = vmatpush1.xpose.msra.mxu0 0.0
        %2246 = vmatprep.subr.mxu0 0.0
        %2247 = vmatpush1.xpose.msra.mxu0 0.0
        %2248 = vmatprep.subr.mxu0 0.0
        %2249 = vmatpush1.xpose.msra.mxu0 0.0
        %2250 = vmatprep.subr.mxu0 0.0
        %2251 = vmatpush1.xpose.msra.mxu0 0.0
        %2252 = vmatprep.subr.mxu0 0.0
        %2253 = vmatpush1.xpose.msra.mxu0 0.0
        %2254 = vmatprep.subr.mxu0 0.0
        %2255 = vmatpush1.xpose.msra.mxu0 0.0
        %2256 = vmatprep.subr.mxu0 0.0
        %2257 = vmatpush1.xpose.msra.mxu0 0.0
        %2258 = vmatprep.subr.mxu0 0.0
        %2259 = vmatpush1.xpose.msra.mxu0 0.0
        %2260 = vmatprep.subr.mxu0 0.0
        %2261 = vmatpush1.xpose.msra.mxu0 0.0
        %2262 = vmatprep.subr.mxu0 0.0
        %2263 = vmatpush1.xpose.msra.mxu0 0.0
        %2264 = vmatprep.subr.mxu0 0.0
        %2265 = vmatpush1.xpose.msra.mxu0 0.0
        %2266 = vmatprep.subr.mxu0 0.0
        %2267 = vmatpush1.xpose.msra.mxu0 0.0
        %2268 = vmatprep.subr.mxu0 0.0
        %2269 = vmatpush1.xpose.msra.mxu0 0.0
        %2270 = vmatprep.subr.mxu0 0.0
        %2271 = vmatpush1.xpose.msra.mxu0 0.0
        %2272 = vmatprep.subr.mxu0 0.0
        %2273 = vmatpush1.xpose.msra.mxu0 0.0
        %2274 = vmatprep.subr.mxu0 0.0
        %2275 = vmatpush1.xpose.msra.mxu0 0.0
        %2276 = vmatprep.subr.mxu0 0.0
        %2277 = vmatpush1.xpose.msra.mxu0 0.0
        %2278 = vmatprep.subr.mxu0 0.0
        %2279 = vmatpush1.xpose.msra.mxu0 0.0
        %2280 = vmatprep.subr.mxu0 0.0
        %2281 = vmatpush1.xpose.msra.mxu0 0.0
        %2282 = vmatprep.subr.mxu0 0.0
        %2283 = vmatpush1.xpose.msra.mxu0 0.0
        %2284 = vmatprep.subr.mxu0 0.0
        %2285 = vmatpush1.xpose.msra.mxu0 0.0
        %2286 = vmatprep.subr.mxu0 0.0
        %2287 = vmatpush1.xpose.msra.mxu0 0.0
        %2288 = vmatprep.subr.mxu0 0.0
        %2289 = vmatpush1.xpose.msra.mxu0 0.0
        %2290 = vmatprep.subr.mxu0 0.0
        %2291 = vmatpush1.xpose.msra.mxu0 0.0
        %2292 = vmatprep.subr.mxu0 0.0
        %2293 = vmatpush1.xpose.msra.mxu0 0.0
        %2294 = vmatprep.subr.mxu0 0.0
        %2295 = vmatpush1.xpose.msra.mxu0 0.0
        %2296 = vmatprep.subr.mxu0 0.0
        %2297 = vmatpush1.xpose.msra.mxu0 0.0
        %2298 = vmatprep.subr.mxu0 0.0
        %2299 = vmatpush1.xpose.msra.mxu0 0.0
        %2300 = vmatprep.mubr.f32.mxu0 0.0
        %2301 = vmatmul.mubr.f32.gmra.mrb[0].mxu0 %v2228
        %v2302 = vpop.f32.mrb[0].mxu0
        %v2303 = vadd.f32 0.0, %v2302
        %v2304 = vpop.f32.mrb[0].mxu0
        %2305 = vdwg.mxu0
        %v2306 = vsel %vm1858, %v2303, -inf
        %2307 = vmax.xlane.f32.xlu0 %v2306
        %v2308 = vpop.xlane.xlu0 %2307
        %v2309 = vsub.f32 %v2303, %v2308
        %v2310 = vmul.f32 %v2309, 1.442695
        %v2311 = vpow.pop %v2310
        %v2312 = vsel %vm1858, %v2311, 0.0
        %2313 = vadd.xlane.f32.xlu0 %v2312
        %v2314 = vpop.xlane.xlu0 %2313
        %v2315 = vrcp.pop %v2314
        %v2316 = vmul.f32 %v2311, %v2315
        %v2318 = vsel %vm1858, %v2316, 0
        %2320 = vmatprep.subr.mxu0 0.0
        %2321 = vmatpush1.msra.mxu0 %v2218
        %2322 = vmatprep.subr.mxu0 0.0
        %2323 = vmatpush1.msra.mxu0 %v2223
        %2324 = vmatprep.subr.mxu0 0.0
        %2325 = vmatpush1.msra.mxu0 0.0
        %2326 = vmatprep.subr.mxu0 0.0
        %2327 = vmatpush1.msra.mxu0 0.0
        %2328 = vmatprep.subr.mxu0 0.0
        %2329 = vmatpush1.msra.mxu0 0.0
        %2330 = vmatprep.subr.mxu0 0.0
        %2331 = vmatpush1.msra.mxu0 0.0
        %2332 = vmatprep.subr.mxu0 0.0
        %2333 = vmatpush1.msra.mxu0 0.0
        %2334 = vmatprep.subr.mxu0 0.0
        %2335 = vmatpush1.msra.mxu0 0.0
        %2336 = vmatprep.subr.mxu0 0.0
        %2337 = vmatpush1.msra.mxu0 0.0
        %2338 = vmatprep.subr.mxu0 0.0
        %2339 = vmatpush1.msra.mxu0 0.0
        %2340 = vmatprep.subr.mxu0 0.0
        %2341 = vmatpush1.msra.mxu0 0.0
        %2342 = vmatprep.subr.mxu0 0.0
        %2343 = vmatpush1.msra.mxu0 0.0
        %2344 = vmatprep.subr.mxu0 0.0
        %2345 = vmatpush1.msra.mxu0 0.0
        %2346 = vmatprep.subr.mxu0 0.0
        %2347 = vmatpush1.msra.mxu0 0.0
        %2348 = vmatprep.subr.mxu0 0.0
        %2349 = vmatpush1.msra.mxu0 0.0
        %2350 = vmatprep.subr.mxu0 0.0
        %2351 = vmatpush1.msra.mxu0 0.0
        %2352 = vmatprep.subr.mxu0 0.0
        %2353 = vmatpush1.msra.mxu0 0.0
        %2354 = vmatprep.subr.mxu0 0.0
        %2355 = vmatpush1.msra.mxu0 0.0
        %2356 = vmatprep.subr.mxu0 0.0
        %2357 = vmatpush1.msra.mxu0 0.0
        %2358 = vmatprep.subr.mxu0 0.0
        %2359 = vmatpush1.msra.mxu0 0.0
        %2360 = vmatprep.subr.mxu0 0.0
        %2361 = vmatpush1.msra.mxu0 0.0
        %2362 = vmatprep.subr.mxu0 0.0
        %2363 = vmatpush1.msra.mxu0 0.0
        %2364 = vmatprep.subr.mxu0 0.0
        %2365 = vmatpush1.msra.mxu0 0.0
        %2366 = vmatprep.subr.mxu0 0.0
        %2367 = vmatpush1.msra.mxu0 0.0
        %2368 = vmatprep.subr.mxu0 0.0
        %2369 = vmatpush1.msra.mxu0 0.0
        %2370 = vmatprep.subr.mxu0 0.0
        %2371 = vmatpush1.msra.mxu0 0.0
        %2372 = vmatprep.subr.mxu0 0.0
        %2373 = vmatpush1.msra.mxu0 0.0
        %2374 = vmatprep.subr.mxu0 0.0
        %2375 = vmatpush1.msra.mxu0 0.0
        %2376 = vmatprep.subr.mxu0 0.0
        %2377 = vmatpush1.msra.mxu0 0.0
        %2378 = vmatprep.subr.mxu0 0.0
        %2379 = vmatpush1.msra.mxu0 0.0
        %2380 = vmatprep.subr.mxu0 0.0
        %2381 = vmatpush1.msra.mxu0 0.0
        %2382 = vmatprep.subr.mxu0 0.0
        %2383 = vmatpush1.msra.mxu0 0.0
        %2384 = vmatprep.mubr.f32.mxu0 0.0
        %2385 = vmatmul.mubr.f32.gmra.mrb[0].mxu0 %v2318
        %v2386 = vpop.f32.mrb[0].mxu0
        %v2387 = vadd.f32 0.0, %v2386
        %v2388 = vpop.f32.mrb[0].mxu0
        %2389 = vdwg.mxu0
        %2390 = vrot.lane.b32.xlu0 %v2226, 120
        %v2391 = vpop.permute.xlu0 %2390
        %2392 = vrot.lane.b32.xlu0 %v2143, 120
        %v2393 = vpop.permute.xlu0 %2392
        %2394 = vrot.lane.b32.xlu0 %v2148, 120
        %v2395 = vpop.permute.xlu0 %2394
        %v2396 = vsel %vm1191, %v2391, 0
        %v2398 = vsel %vm1191, %v2393, 0
        %v2400 = vsel %vm1191, %v2395, 0
        %2402 = vmatprep.subr.mxu0 0.0
        %2403 = vmatpush1.xpose.msra.mxu0 %v2398
        %2404 = vmatprep.subr.mxu0 0.0
        %2405 = vmatpush1.xpose.msra.mxu0 %v2400
        %2406 = vmatprep.subr.mxu0 0.0
        %2407 = vmatpush1.xpose.msra.mxu0 0.0
        %2408 = vmatprep.subr.mxu0 0.0
        %2409 = vmatpush1.xpose.msra.mxu0 0.0
        %2410 = vmatprep.subr.mxu0 0.0
        %2411 = vmatpush1.xpose.msra.mxu0 0.0
        %2412 = vmatprep.subr.mxu0 0.0
        %2413 = vmatpush1.xpose.msra.mxu0 0.0
        %2414 = vmatprep.subr.mxu0 0.0
        %2415 = vmatpush1.xpose.msra.mxu0 0.0
        %2416 = vmatprep.subr.mxu0 0.0
        %2417 = vmatpush1.xpose.msra.mxu0 0.0
        %2418 = vmatprep.subr.mxu0 0.0
        %2419 = vmatpush1.xpose.msra.mxu0 0.0
        %2420 = vmatprep.subr.mxu0 0.0
        %2421 = vmatpush1.xpose.msra.mxu0 0.0
        %2422 = vmatprep.subr.mxu0 0.0
        %2423 = vmatpush1.xpose.msra.mxu0 0.0
        %2424 = vmatprep.subr.mxu0 0.0
        %2425 = vmatpush1.xpose.msra.mxu0 0.0
        %2426 = vmatprep.subr.mxu0 0.0
        %2427 = vmatpush1.xpose.msra.mxu0 0.0
        %2428 = vmatprep.subr.mxu0 0.0
        %2429 = vmatpush1.xpose.msra.mxu0 0.0
        %2430 = vmatprep.subr.mxu0 0.0
        %2431 = vmatpush1.xpose.msra.mxu0 0.0
        %2432 = vmatprep.subr.mxu0 0.0
        %2433 = vmatpush1.xpose.msra.mxu0 0.0
        %2434 = vmatprep.subr.mxu0 0.0
        %2435 = vmatpush1.xpose.msra.mxu0 0.0
        %2436 = vmatprep.subr.mxu0 0.0
        %2437 = vmatpush1.xpose.msra.mxu0 0.0
        %2438 = vmatprep.subr.mxu0 0.0
        %2439 = vmatpush1.xpose.msra.mxu0 0.0
        %2440 = vmatprep.subr.mxu0 0.0
        %2441 = vmatpush1.xpose.msra.mxu0 0.0
        %2442 = vmatprep.subr.mxu0 0.0
        %2443 = vmatpush1.xpose.msra.mxu0 0.0
        %2444 = vmatprep.subr.mxu0 0.0
        %2445 = vmatpush1.xpose.msra.mxu0 0.0
        %2446 = vmatprep.subr.mxu0 0.0
        %2447 = vmatpush1.xpose.msra.mxu0 0.0
        %2448 = vmatprep.subr.mxu0 0.0
        %2449 = vmatpush1.xpose.msra.mxu0 0.0
        %2450 = vmatprep.subr.mxu0 0.0
        %2451 = vmatpush1.xpose.msra.mxu0 0.0
        %2452 = vmatprep.subr.mxu0 0.0
        %2453 = vmatpush1.xpose.msra.mxu0 0.0
        %2454 = vmatprep.subr.mxu0 0.0
        %2455 = vmatpush1.xpose.msra.mxu0 0.0
        %2456 = vmatprep.subr.mxu0 0.0
        %2457 = vmatpush1.xpose.msra.mxu0 0.0
        %2458 = vmatprep.subr.mxu0 0.0
        %2459 = vmatpush1.xpose.msra.mxu0 0.0
        %2460 = vmatprep.subr.mxu0 0.0
        %2461 = vmatpush1.xpose.msra.mxu0 0.0
        %2462 = vmatprep.subr.mxu0 0.0
        %2463 = vmatpush1.xpose.msra.mxu0 0.0
        %2464 = vmatprep.subr.mxu0 0.0
        %2465 = vmatpush1.xpose.msra.mxu0 0.0
        %2466 = vmatprep.mubr.f32.mxu0 0.0
        %2467 = vmatmul.mubr.f32.gmra.mrb[0].mxu0 %v2396
        %v2468 = vpop.f32.mrb[0].mxu0
        %v2469 = vadd.f32 0.0, %v2468
        %v2470 = vpop.f32.mrb[0].mxu0
        %2471 = vdwg.mxu0
        %v2472 = vsel %vm1858, %v2469, -inf
        %2473 = vmax.xlane.f32.xlu0 %v2472
        %v2474 = vpop.xlane.xlu0 %2473
        %v2475 = vsub.f32 %v2469, %v2474
        %v2476 = vmul.f32 %v2475, 1.442695
        %v2477 = vpow.pop %v2476
        %v2478 = vsel %vm1858, %v2477, 0.0
        %2479 = vadd.xlane.f32.xlu0 %v2478
        %v2480 = vpop.xlane.xlu0 %2479
        %v2481 = vrcp.pop %v2480
        %v2482 = vmul.f32 %v2477, %v2481
        %2485 = vrot.lane.b32.xlu0 %v2218, 120
        %v2486 = vpop.permute.xlu0 %2485
        %2487 = vrot.lane.b32.xlu0 %v2223, 120
        %v2488 = vpop.permute.xlu0 %2487
        %v2492 = vsel %vm1858, %v2482, 0
        %2494 = vmatprep.subr.mxu0 0.0
        %2495 = vmatpush1.msra.mxu0 %v2486
        %2496 = vmatprep.subr.mxu0 0.0
        %2497 = vmatpush1.msra.mxu0 %v2488
        %2498 = vmatprep.subr.mxu0 0.0
        %2499 = vmatpush1.msra.mxu0 0.0
        %2500 = vmatprep.subr.mxu0 0.0
        %2501 = vmatpush1.msra.mxu0 0.0
        %2502 = vmatprep.subr.mxu0 0.0
        %2503 = vmatpush1.msra.mxu0 0.0
        %2504 = vmatprep.subr.mxu0 0.0
        %2505 = vmatpush1.msra.mxu0 0.0
        %2506 = vmatprep.subr.mxu0 0.0
        %2507 = vmatpush1.msra.mxu0 0.0
        %2508 = vmatprep.subr.mxu0 0.0
        %2509 = vmatpush1.msra.mxu0 0.0
        %2510 = vmatprep.subr.mxu0 0.0
        %2511 = vmatpush1.msra.mxu0 0.0
        %2512 = vmatprep.subr.mxu0 0.0
        %2513 = vmatpush1.msra.mxu0 0.0
        %2514 = vmatprep.subr.mxu0 0.0
        %2515 = vmatpush1.msra.mxu0 0.0
        %2516 = vmatprep.subr.mxu0 0.0
        %2517 = vmatpush1.msra.mxu0 0.0
        %2518 = vmatprep.subr.mxu0 0.0
        %2519 = vmatpush1.msra.mxu0 0.0
        %2520 = vmatprep.subr.mxu0 0.0
        %2521 = vmatpush1.msra.mxu0 0.0
        %2522 = vmatprep.subr.mxu0 0.0
        %2523 = vmatpush1.msra.mxu0 0.0
        %2524 = vmatprep.subr.mxu0 0.0
        %2525 = vmatpush1.msra.mxu0 0.0
        %2526 = vmatprep.subr.mxu0 0.0
        %2527 = vmatpush1.msra.mxu0 0.0
        %2528 = vmatprep.subr.mxu0 0.0
        %2529 = vmatpush1.msra.mxu0 0.0
        %2530 = vmatprep.subr.mxu0 0.0
        %2531 = vmatpush1.msra.mxu0 0.0
        %2532 = vmatprep.subr.mxu0 0.0
        %2533 = vmatpush1.msra.mxu0 0.0
        %2534 = vmatprep.subr.mxu0 0.0
        %2535 = vmatpush1.msra.mxu0 0.0
        %2536 = vmatprep.subr.mxu0 0.0
        %2537 = vmatpush1.msra.mxu0 0.0
        %2538 = vmatprep.subr.mxu0 0.0
        %2539 = vmatpush1.msra.mxu0 0.0
        %2540 = vmatprep.subr.mxu0 0.0
        %2541 = vmatpush1.msra.mxu0 0.0
        %2542 = vmatprep.subr.mxu0 0.0
        %2543 = vmatpush1.msra.mxu0 0.0
        %2544 = vmatprep.subr.mxu0 0.0
        %2545 = vmatpush1.msra.mxu0 0.0
        %2546 = vmatprep.subr.mxu0 0.0
        %2547 = vmatpush1.msra.mxu0 0.0
        %2548 = vmatprep.subr.mxu0 0.0
        %2549 = vmatpush1.msra.mxu0 0.0
        %2550 = vmatprep.subr.mxu0 0.0
        %2551 = vmatpush1.msra.mxu0 0.0
        %2552 = vmatprep.subr.mxu0 0.0
        %2553 = vmatpush1.msra.mxu0 0.0
        %2554 = vmatprep.subr.mxu0 0.0
        %2555 = vmatpush1.msra.mxu0 0.0
        %2556 = vmatprep.subr.mxu0 0.0
        %2557 = vmatpush1.msra.mxu0 0.0
        %2558 = vmatprep.mubr.f32.mxu0 0.0
        %2559 = vmatmul.mubr.f32.gmra.mrb[0].mxu0 %v2492
        %v2560 = vpop.f32.mrb[0].mxu0
        %v2561 = vadd.f32 0.0, %v2560
        %v2562 = vpop.f32.mrb[0].mxu0
        %2563 = vdwg.mxu0
        %2564 = vrot.lane.b32.xlu0 %v2226, 112
        %v2565 = vpop.permute.xlu0 %2564
        %2566 = vrot.lane.b32.xlu0 %v2143, 112
        %v2567 = vpop.permute.xlu0 %2566
        %2568 = vrot.lane.b32.xlu0 %v2148, 112
        %v2569 = vpop.permute.xlu0 %2568
        %v2570 = vsel %vm1191, %v2565, 0
        %v2572 = vsel %vm1191, %v2567, 0
        %v2574 = vsel %vm1191, %v2569, 0
        %2576 = vmatprep.subr.mxu0 0.0
        %2577 = vmatpush1.xpose.msra.mxu0 %v2572
        %2578 = vmatprep.subr.mxu0 0.0
        %2579 = vmatpush1.xpose.msra.mxu0 %v2574
        %2580 = vmatprep.subr.mxu0 0.0
        %2581 = vmatpush1.xpose.msra.mxu0 0.0
        %2582 = vmatprep.subr.mxu0 0.0
        %2583 = vmatpush1.xpose.msra.mxu0 0.0
        %2584 = vmatprep.subr.mxu0 0.0
        %2585 = vmatpush1.xpose.msra.mxu0 0.0
        %2586 = vmatprep.subr.mxu0 0.0
        %2587 = vmatpush1.xpose.msra.mxu0 0.0
        %2588 = vmatprep.subr.mxu0 0.0
        %2589 = vmatpush1.xpose.msra.mxu0 0.0
        %2590 = vmatprep.subr.mxu0 0.0
        %2591 = vmatpush1.xpose.msra.mxu0 0.0
        %2592 = vmatprep.subr.mxu0 0.0
        %2593 = vmatpush1.xpose.msra.mxu0 0.0
        %2594 = vmatprep.subr.mxu0 0.0
        %2595 = vmatpush1.xpose.msra.mxu0 0.0
        %2596 = vmatprep.subr.mxu0 0.0
        %2597 = vmatpush1.xpose.msra.mxu0 0.0
        %2598 = vmatprep.subr.mxu0 0.0
        %2599 = vmatpush1.xpose.msra.mxu0 0.0
        %2600 = vmatprep.subr.mxu0 0.0
        %2601 = vmatpush1.xpose.msra.mxu0 0.0
        %2602 = vmatprep.subr.mxu0 0.0
        %2603 = vmatpush1.xpose.msra.mxu0 0.0
        %2604 = vmatprep.subr.mxu0 0.0
        %2605 = vmatpush1.xpose.msra.mxu0 0.0
        %2606 = vmatprep.subr.mxu0 0.0
        %2607 = vmatpush1.xpose.msra.mxu0 0.0
        %2608 = vmatprep.subr.mxu0 0.0
        %2609 = vmatpush1.xpose.msra.mxu0 0.0
        %2610 = vmatprep.subr.mxu0 0.0
        %2611 = vmatpush1.xpose.msra.mxu0 0.0
        %2612 = vmatprep.subr.mxu0 0.0
        %2613 = vmatpush1.xpose.msra.mxu0 0.0
        %2614 = vmatprep.subr.mxu0 0.0
        %2615 = vmatpush1.xpose.msra.mxu0 0.0
        %2616 = vmatprep.subr.mxu0 0.0
        %2617 = vmatpush1.xpose.msra.mxu0 0.0
        %2618 = vmatprep.subr.mxu0 0.0
        %2619 = vmatpush1.xpose.msra.mxu0 0.0
        %2620 = vmatprep.subr.mxu0 0.0
        %2621 = vmatpush1.xpose.msra.mxu0 0.0
        %2622 = vmatprep.subr.mxu0 0.0
        %2623 = vmatpush1.xpose.msra.mxu0 0.0
        %2624 = vmatprep.subr.mxu0 0.0
        %2625 = vmatpush1.xpose.msra.mxu0 0.0
        %2626 = vmatprep.subr.mxu0 0.0
        %2627 = vmatpush1.xpose.msra.mxu0 0.0
        %2628 = vmatprep.subr.mxu0 0.0
        %2629 = vmatpush1.xpose.msra.mxu0 0.0
        %2630 = vmatprep.subr.mxu0 0.0
        %2631 = vmatpush1.xpose.msra.mxu0 0.0
        %2632 = vmatprep.subr.mxu0 0.0
        %2633 = vmatpush1.xpose.msra.mxu0 0.0
        %2634 = vmatprep.subr.mxu0 0.0
        %2635 = vmatpush1.xpose.msra.mxu0 0.0
        %2636 = vmatprep.subr.mxu0 0.0
        %2637 = vmatpush1.xpose.msra.mxu0 0.0
        %2638 = vmatprep.subr.mxu0 0.0
        %2639 = vmatpush1.xpose.msra.mxu0 0.0
        %2640 = vmatprep.mubr.f32.mxu0 0.0
        %2641 = vmatmul.mubr.f32.gmra.mrb[0].mxu0 %v2570
        %v2642 = vpop.f32.mrb[0].mxu0
        %v2643 = vadd.f32 0.0, %v2642
        %v2644 = vpop.f32.mrb[0].mxu0
        %2645 = vdwg.mxu0
        %v2646 = vsel %vm1858, %v2643, -inf
        %2647 = vmax.xlane.f32.xlu0 %v2646
        %v2648 = vpop.xlane.xlu0 %2647
        %v2649 = vsub.f32 %v2643, %v2648
        %v2650 = vmul.f32 %v2649, 1.442695
        %v2651 = vpow.pop %v2650
        %v2652 = vsel %vm1858, %v2651, 0.0
        %2653 = vadd.xlane.f32.xlu0 %v2652
        %v2654 = vpop.xlane.xlu0 %2653
        %v2655 = vrcp.pop %v2654
        %v2656 = vmul.f32 %v2651, %v2655
        %2657 = vrot.lane.b32.xlu0 %v2218, 112
        %v2658 = vpop.permute.xlu0 %2657
        %2659 = vrot.lane.b32.xlu0 %v2223, 112
        %v2660 = vpop.permute.xlu0 %2659
        %v2664 = vsel %vm1858, %v2656, 0
        %2666 = vmatprep.subr.mxu0 0.0
        %2667 = vmatpush1.msra.mxu0 %v2658
        %2668 = vmatprep.subr.mxu0 0.0
        %2669 = vmatpush1.msra.mxu0 %v2660
        %2670 = vmatprep.subr.mxu0 0.0
        %2671 = vmatpush1.msra.mxu0 0.0
        %2672 = vmatprep.subr.mxu0 0.0
        %2673 = vmatpush1.msra.mxu0 0.0
        %2674 = vmatprep.subr.mxu0 0.0
        %2675 = vmatpush1.msra.mxu0 0.0
        %2676 = vmatprep.subr.mxu0 0.0
        %2677 = vmatpush1.msra.mxu0 0.0
        %2678 = vmatprep.subr.mxu0 0.0
        %2679 = vmatpush1.msra.mxu0 0.0
        %2680 = vmatprep.subr.mxu0 0.0
        %2681 = vmatpush1.msra.mxu0 0.0
        %2682 = vmatprep.subr.mxu0 0.0
        %2683 = vmatpush1.msra.mxu0 0.0
        %2684 = vmatprep.subr.mxu0 0.0
        %2685 = vmatpush1.msra.mxu0 0.0
        %2686 = vmatprep.subr.mxu0 0.0
        %2687 = vmatpush1.msra.mxu0 0.0
        %2688 = vmatprep.subr.mxu0 0.0
        %2689 = vmatpush1.msra.mxu0 0.0
        %2690 = vmatprep.subr.mxu0 0.0
        %2691 = vmatpush1.msra.mxu0 0.0
        %2692 = vmatprep.subr.mxu0 0.0
        %2693 = vmatpush1.msra.mxu0 0.0
        %2694 = vmatprep.subr.mxu0 0.0
        %2695 = vmatpush1.msra.mxu0 0.0
        %2696 = vmatprep.subr.mxu0 0.0
        %2697 = vmatpush1.msra.mxu0 0.0
        %2698 = vmatprep.subr.mxu0 0.0
        %2699 = vmatpush1.msra.mxu0 0.0
        %2700 = vmatprep.subr.mxu0 0.0
        %2701 = vmatpush1.msra.mxu0 0.0
        %2702 = vmatprep.subr.mxu0 0.0
        %2703 = vmatpush1.msra.mxu0 0.0
        %2704 = vmatprep.subr.mxu0 0.0
        %2705 = vmatpush1.msra.mxu0 0.0
        %2706 = vmatprep.subr.mxu0 0.0
        %2707 = vmatpush1.msra.mxu0 0.0
        %2708 = vmatprep.subr.mxu0 0.0
        %2709 = vmatpush1.msra.mxu0 0.0
        %2710 = vmatprep.subr.mxu0 0.0
        %2711 = vmatpush1.msra.mxu0 0.0
        %2712 = vmatprep.subr.mxu0 0.0
        %2713 = vmatpush1.msra.mxu0 0.0
        %2714 = vmatprep.subr.mxu0 0.0
        %2715 = vmatpush1.msra.mxu0 0.0
        %2716 = vmatprep.subr.mxu0 0.0
        %2717 = vmatpush1.msra.mxu0 0.0
        %2718 = vmatprep.subr.mxu0 0.0
        %2719 = vmatpush1.msra.mxu0 0.0
        %2720 = vmatprep.subr.mxu0 0.0
        %2721 = vmatpush1.msra.mxu0 0.0
        %2722 = vmatprep.subr.mxu0 0.0
        %2723 = vmatpush1.msra.mxu0 0.0
        %2724 = vmatprep.subr.mxu0 0.0
        %2725 = vmatpush1.msra.mxu0 0.0
        %2726 = vmatprep.subr.mxu0 0.0
        %2727 = vmatpush1.msra.mxu0 0.0
        %2728 = vmatprep.subr.mxu0 0.0
        %2729 = vmatpush1.msra.mxu0 0.0
        %2730 = vmatprep.mubr.f32.mxu0 0.0
        %2731 = vmatmul.mubr.f32.gmra.mrb[0].mxu0 %v2664
        %v2732 = vpop.f32.mrb[0].mxu0
        %v2733 = vadd.f32 0.0, %v2732
        %v2734 = vpop.f32.mrb[0].mxu0
        %2735 = vdwg.mxu0
        %2736 = vrot.lane.b32.xlu0 %v2226, 104
        %v2737 = vpop.permute.xlu0 %2736
        %2738 = vrot.lane.b32.xlu0 %v2143, 104
        %v2739 = vpop.permute.xlu0 %2738
        %2740 = vrot.lane.b32.xlu0 %v2148, 104
        %v2741 = vpop.permute.xlu0 %2740
        %v2742 = vsel %vm1191, %v2737, 0
        %v2744 = vsel %vm1191, %v2739, 0
        %v2746 = vsel %vm1191, %v2741, 0
        %2748 = vmatprep.subr.mxu0 0.0
        %2749 = vmatpush1.xpose.msra.mxu0 %v2744
        %2750 = vmatprep.subr.mxu0 0.0
        %2751 = vmatpush1.xpose.msra.mxu0 %v2746
        %2752 = vmatprep.subr.mxu0 0.0
        %2753 = vmatpush1.xpose.msra.mxu0 0.0
        %2754 = vmatprep.subr.mxu0 0.0
        %2755 = vmatpush1.xpose.msra.mxu0 0.0
        %2756 = vmatprep.subr.mxu0 0.0
        %2757 = vmatpush1.xpose.msra.mxu0 0.0
        %2758 = vmatprep.subr.mxu0 0.0
        %2759 = vmatpush1.xpose.msra.mxu0 0.0
        %2760 = vmatprep.subr.mxu0 0.0
        %2761 = vmatpush1.xpose.msra.mxu0 0.0
        %2762 = vmatprep.subr.mxu0 0.0
        %2763 = vmatpush1.xpose.msra.mxu0 0.0
        %2764 = vmatprep.subr.mxu0 0.0
        %2765 = vmatpush1.xpose.msra.mxu0 0.0
        %2766 = vmatprep.subr.mxu0 0.0
        %2767 = vmatpush1.xpose.msra.mxu0 0.0
        %2768 = vmatprep.subr.mxu0 0.0
        %2769 = vmatpush1.xpose.msra.mxu0 0.0
        %2770 = vmatprep.subr.mxu0 0.0
        %2771 = vmatpush1.xpose.msra.mxu0 0.0
        %2772 = vmatprep.subr.mxu0 0.0
        %2773 = vmatpush1.xpose.msra.mxu0 0.0
        %2774 = vmatprep.subr.mxu0 0.0
        %2775 = vmatpush1.xpose.msra.mxu0 0.0
        %2776 = vmatprep.subr.mxu0 0.0
        %2777 = vmatpush1.xpose.msra.mxu0 0.0
        %2778 = vmatprep.subr.mxu0 0.0
        %2779 = vmatpush1.xpose.msra.mxu0 0.0
        %2780 = vmatprep.subr.mxu0 0.0
        %2781 = vmatpush1.xpose.msra.mxu0 0.0
        %2782 = vmatprep.subr.mxu0 0.0
        %2783 = vmatpush1.xpose.msra.mxu0 0.0
        %2784 = vmatprep.subr.mxu0 0.0
        %2785 = vmatpush1.xpose.msra.mxu0 0.0
        %2786 = vmatprep.subr.mxu0 0.0
        %2787 = vmatpush1.xpose.msra.mxu0 0.0
        %2788 = vmatprep.subr.mxu0 0.0
        %2789 = vmatpush1.xpose.msra.mxu0 0.0
        %2790 = vmatprep.subr.mxu0 0.0
        %2791 = vmatpush1.xpose.msra.mxu0 0.0
        %2792 = vmatprep.subr.mxu0 0.0
        %2793 = vmatpush1.xpose.msra.mxu0 0.0
        %2794 = vmatprep.subr.mxu0 0.0
        %2795 = vmatpush1.xpose.msra.mxu0 0.0
        %2796 = vmatprep.subr.mxu0 0.0
        %2797 = vmatpush1.xpose.msra.mxu0 0.0
        %2798 = vmatprep.subr.mxu0 0.0
        %2799 = vmatpush1.xpose.msra.mxu0 0.0
        %2800 = vmatprep.subr.mxu0 0.0
        %2801 = vmatpush1.xpose.msra.mxu0 0.0
        %2802 = vmatprep.subr.mxu0 0.0
        %2803 = vmatpush1.xpose.msra.mxu0 0.0
        %2804 = vmatprep.subr.mxu0 0.0
        %2805 = vmatpush1.xpose.msra.mxu0 0.0
        %2806 = vmatprep.subr.mxu0 0.0
        %2807 = vmatpush1.xpose.msra.mxu0 0.0
        %2808 = vmatprep.subr.mxu0 0.0
        %2809 = vmatpush1.xpose.msra.mxu0 0.0
        %2810 = vmatprep.subr.mxu0 0.0
        %2811 = vmatpush1.xpose.msra.mxu0 0.0
        %2812 = vmatprep.mubr.f32.mxu0 0.0
        %2813 = vmatmul.mubr.f32.gmra.mrb[0].mxu0 %v2742
        %v2814 = vpop.f32.mrb[0].mxu0
        %v2815 = vadd.f32 0.0, %v2814
        %v2816 = vpop.f32.mrb[0].mxu0
        %2817 = vdwg.mxu0
        %v2818 = vsel %vm1858, %v2815, -inf
        %2819 = vmax.xlane.f32.xlu0 %v2818
        %v2820 = vpop.xlane.xlu0 %2819
        %v2821 = vsub.f32 %v2815, %v2820
        %v2822 = vmul.f32 %v2821, 1.442695
        %v2823 = vpow.pop %v2822
        %v2824 = vsel %vm1858, %v2823, 0.0
        %2825 = vadd.xlane.f32.xlu0 %v2824
        %v2826 = vpop.xlane.xlu0 %2825
        %v2827 = vrcp.pop %v2826
        %v2828 = vmul.f32 %v2823, %v2827
        %2829 = vrot.lane.b32.xlu0 %v2218, 104
        %v2830 = vpop.permute.xlu0 %2829
        %2831 = vrot.lane.b32.xlu0 %v2223, 104
        %v2832 = vpop.permute.xlu0 %2831
        %v2836 = vsel %vm1858, %v2828, 0
        %2838 = vmatprep.subr.mxu0 0.0
        %2839 = vmatpush1.msra.mxu0 %v2830
        %2840 = vmatprep.subr.mxu0 0.0
        %2841 = vmatpush1.msra.mxu0 %v2832
        %2842 = vmatprep.subr.mxu0 0.0
        %2843 = vmatpush1.msra.mxu0 0.0
        %2844 = vmatprep.subr.mxu0 0.0
        %2845 = vmatpush1.msra.mxu0 0.0
        %2846 = vmatprep.subr.mxu0 0.0
        %2847 = vmatpush1.msra.mxu0 0.0
        %2848 = vmatprep.subr.mxu0 0.0
        %2849 = vmatpush1.msra.mxu0 0.0
        %2850 = vmatprep.subr.mxu0 0.0
        %2851 = vmatpush1.msra.mxu0 0.0
        %2852 = vmatprep.subr.mxu0 0.0
        %2853 = vmatpush1.msra.mxu0 0.0
        %2854 = vmatprep.subr.mxu0 0.0
        %2855 = vmatpush1.msra.mxu0 0.0
        %2856 = vmatprep.subr.mxu0 0.0
        %2857 = vmatpush1.msra.mxu0 0.0
        %2858 = vmatprep.subr.mxu0 0.0
        %2859 = vmatpush1.msra.mxu0 0.0
        %2860 = vmatprep.subr.mxu0 0.0
        %2861 = vmatpush1.msra.mxu0 0.0
        %2862 = vmatprep.subr.mxu0 0.0
        %2863 = vmatpush1.msra.mxu0 0.0
        %2864 = vmatprep.subr.mxu0 0.0
        %2865 = vmatpush1.msra.mxu0 0.0
        %2866 = vmatprep.subr.mxu0 0.0
        %2867 = vmatpush1.msra.mxu0 0.0
        %2868 = vmatprep.subr.mxu0 0.0
        %2869 = vmatpush1.msra.mxu0 0.0
        %2870 = vmatprep.subr.mxu0 0.0
        %2871 = vmatpush1.msra.mxu0 0.0
        %2872 = vmatprep.subr.mxu0 0.0
        %2873 = vmatpush1.msra.mxu0 0.0
        %2874 = vmatprep.subr.mxu0 0.0
        %2875 = vmatpush1.msra.mxu0 0.0
        %2876 = vmatprep.subr.mxu0 0.0
        %2877 = vmatpush1.msra.mxu0 0.0
        %2878 = vmatprep.subr.mxu0 0.0
        %2879 = vmatpush1.msra.mxu0 0.0
        %2880 = vmatprep.subr.mxu0 0.0
        %2881 = vmatpush1.msra.mxu0 0.0
        %2882 = vmatprep.subr.mxu0 0.0
        %2883 = vmatpush1.msra.mxu0 0.0
        %2884 = vmatprep.subr.mxu0 0.0
        %2885 = vmatpush1.msra.mxu0 0.0
        %2886 = vmatprep.subr.mxu0 0.0
        %2887 = vmatpush1.msra.mxu0 0.0
        %2888 = vmatprep.subr.mxu0 0.0
        %2889 = vmatpush1.msra.mxu0 0.0
        %2890 = vmatprep.subr.mxu0 0.0
        %2891 = vmatpush1.msra.mxu0 0.0
        %2892 = vmatprep.subr.mxu0 0.0
        %2893 = vmatpush1.msra.mxu0 0.0
        %2894 = vmatprep.subr.mxu0 0.0
        %2895 = vmatpush1.msra.mxu0 0.0
        %2896 = vmatprep.subr.mxu0 0.0
        %2897 = vmatpush1.msra.mxu0 0.0
        %2898 = vmatprep.subr.mxu0 0.0
        %2899 = vmatpush1.msra.mxu0 0.0
        %2900 = vmatprep.subr.mxu0 0.0
        %2901 = vmatpush1.msra.mxu0 0.0
        %2902 = vmatprep.mubr.f32.mxu0 0.0
        %2903 = vmatmul.mubr.f32.gmra.mrb[0].mxu0 %v2836
        %v2904 = vpop.f32.mrb[0].mxu0
        %v2905 = vadd.f32 0.0, %v2904
        %v2906 = vpop.f32.mrb[0].mxu0
        %2907 = vdwg.mxu0
        %2908 = vrot.lane.b32.xlu0 %v2482, 16
        %v2909 = vpop.permute.xlu0 %2908
        %2911 = vrot.lane.b32.xlu0 %v2656, 32
        %v2912 = vpop.permute.xlu0 %2911
        %2914 = vrot.lane.b32.xlu0 %v2828, 48
        %v2915 = vpop.permute.xlu0 %2914
        %v2917 = vsel %vm1858, %v2316, %v2909
        %v2918 = vsel %vm973, %v2917, %v2912
        %vm2919 = vcmask 392192
        %v2920 = vsel %vm2919, %v2918, %v2915
        %vm2921 = vcmask 523264
        %2922 = vst.msk [vmem:[%s944] sm:$0xff] %vm2921, %v2920
        %2924 = vrot.lane.b32.xlu0 %v2561, 8
        %v2925 = vpop.permute.xlu0 %2924
        %2928 = vrot.lane.b32.xlu0 %v2733, 16
        %v2929 = vpop.permute.xlu0 %2928
        %2932 = vrot.lane.b32.xlu0 %v2905, 24
        %v2933 = vpop.permute.xlu0 %2932
        %v2935 = vsel %vm1191, %v2387, %v2925
        %v2936 = vsel %vm1858, %v2935, %v2929
        %v2937 = vsel %vm1860, %v2936, %v2933
        %v2939 = vsel %vm973, %v2937, 0
        %2941 = vmatprep.subr.mxu0 0.0
        %2942 = vmatpush1.msra.mxu0 %v1991
        %2943 = vmatprep.subr.mxu0 0.0
        %2944 = vmatpush1.msra.mxu0 %v1992
        %2945 = vmatprep.subr.mxu0 0.0
        %2946 = vmatpush1.msra.mxu0 %v1993
        %2947 = vmatprep.subr.mxu0 0.0
        %2948 = vmatpush1.msra.mxu0 %v1994
        %2949 = vmatprep.subr.mxu0 0.0
        %2950 = vmatpush1.msra.mxu0 0.0
        %2951 = vmatprep.subr.mxu0 0.0
        %2952 = vmatpush1.msra.mxu0 0.0
        %2953 = vmatprep.subr.mxu0 0.0
        %2954 = vmatpush1.msra.mxu0 0.0
        %2955 = vmatprep.subr.mxu0 0.0
        %2956 = vmatpush1.msra.mxu0 0.0
        %2957 = vmatprep.subr.mxu0 0.0
        %2958 = vmatpush1.msra.mxu0 0.0
        %2959 = vmatprep.subr.mxu0 0.0
        %2960 = vmatpush1.msra.mxu0 0.0
        %2961 = vmatprep.subr.mxu0 0.0
        %2962 = vmatpush1.msra.mxu0 0.0
        %2963 = vmatprep.subr.mxu0 0.0
        %2964 = vmatpush1.msra.mxu0 0.0
        %2965 = vmatprep.subr.mxu0 0.0
        %2966 = vmatpush1.msra.mxu0 0.0
        %2967 = vmatprep.subr.mxu0 0.0
        %2968 = vmatpush1.msra.mxu0 0.0
        %2969 = vmatprep.subr.mxu0 0.0
        %2970 = vmatpush1.msra.mxu0 0.0
        %2971 = vmatprep.subr.mxu0 0.0
        %2972 = vmatpush1.msra.mxu0 0.0
        %2973 = vmatprep.subr.mxu0 0.0
        %2974 = vmatpush1.msra.mxu0 0.0
        %2975 = vmatprep.subr.mxu0 0.0
        %2976 = vmatpush1.msra.mxu0 0.0
        %2977 = vmatprep.subr.mxu0 0.0
        %2978 = vmatpush1.msra.mxu0 0.0
        %2979 = vmatprep.subr.mxu0 0.0
        %2980 = vmatpush1.msra.mxu0 0.0
        %2981 = vmatprep.subr.mxu0 0.0
        %2982 = vmatpush1.msra.mxu0 0.0
        %2983 = vmatprep.subr.mxu0 0.0
        %2984 = vmatpush1.msra.mxu0 0.0
        %2985 = vmatprep.subr.mxu0 0.0
        %2986 = vmatpush1.msra.mxu0 0.0
        %2987 = vmatprep.subr.mxu0 0.0
        %2988 = vmatpush1.msra.mxu0 0.0
        %2989 = vmatprep.subr.mxu0 0.0
        %2990 = vmatpush1.msra.mxu0 0.0
        %2991 = vmatprep.subr.mxu0 0.0
        %2992 = vmatpush1.msra.mxu0 0.0
        %2993 = vmatprep.subr.mxu0 0.0
        %2994 = vmatpush1.msra.mxu0 0.0
        %2995 = vmatprep.subr.mxu0 0.0
        %2996 = vmatpush1.msra.mxu0 0.0
        %2997 = vmatprep.subr.mxu0 0.0
        %2998 = vmatpush1.msra.mxu0 0.0
        %2999 = vmatprep.subr.mxu0 0.0
        %3000 = vmatpush1.msra.mxu0 0.0
        %3001 = vmatprep.subr.mxu0 0.0
        %3002 = vmatpush1.msra.mxu0 0.0
        %3003 = vmatprep.subr.mxu0 0.0
        %3004 = vmatpush1.msra.mxu0 0.0
        %3005 = vmatprep.mubr.f32.mxu0 0.0
        %3006 = vmatmul.mubr.f32.gmra.mrb[0].mxu0 %v2939
        %v3007 = vpop.f32.mrb[0].mxu0
        %v3008 = vadd.f32 %v1978, %v3007
        %v3009 = vpop.f32.mrb[0].mxu0
        %3010 = vdwg.mxu0
        %v3011 = vsel %vm973, %v3008, 0.0
        %3012 = vadd.xlane.f32.xlu0 %v3011
        %v3013 = vpop.xlane.xlu0 %3012
        %v3014 = vmul.f32 %v3013, %v1954
        %v3015 = vsub.f32 %v3008, %v3014
        %v3016 = vmul.f32 %v3015, %v3015
        %v3017 = vsel %vm973, %v3016, 0.0
        %3018 = vadd.xlane.f32.xlu0 %v3017
        %v3019 = vpop.xlane.xlu0 %3018
        %v3020 = vmul.f32 %v3019, %v1954
        %v3021 = vadd.f32 %v3020, 1e-06
        %v3022 = vrsqrt.pop %v3021
        %v3023 = vmul.f32 %v3015, %v3022
        %v3025 = vlaneseq
        %v3026 = vshrl.u32 %v3025, 7
        %v3027 = vsub.s32 0, %v3026
        %v3028 = vrot.slane %v1995, %v3027
        %v3030 = vmul.f32 %v3023, %v3028
        %v3032 = vlaneseq
        %v3033 = vshrl.u32 %v3032, 7
        %v3034 = vsub.s32 0, %v3033
        %v3035 = vrot.slane %v1996, %v3034
        %v3037 = vadd.f32 %v3030, %v3035
        %v3038 = vld [vmem:[#allocation20] sm:$0xff]
        %v3039 = vld [vmem:[#allocation20 + $0x8] sm:$0xff]
        %v3040 = vld [vmem:[#allocation20 + $0x10] sm:$0xff]
        %v3041 = vld [vmem:[#allocation20 + $0x18] sm:$0xff]
        %v3042 = vld [vmem:[#allocation22] sm:$0x1]
        %v3044 = vlaneseq
        %v3045 = vshrl.u32 %v3044, 7
        %v3046 = vsub.s32 0, %v3045
        %v3047 = vrot.slane %v3042, %v3046
        %v3050 = vsel %vm973, %v3037, 0
        %3052 = vmatprep.subr.mxu0 0.0
        %3053 = vmatpush1.msra.mxu0 %v3038
        %3054 = vmatprep.subr.mxu0 0.0
        %3055 = vmatpush1.msra.mxu0 %v3039
        %3056 = vmatprep.subr.mxu0 0.0
        %3057 = vmatpush1.msra.mxu0 %v3040
        %3058 = vmatprep.subr.mxu0 0.0
        %3059 = vmatpush1.msra.mxu0 %v3041
        %3060 = vmatprep.subr.mxu0 0.0
        %3061 = vmatpush1.msra.mxu0 0.0
        %3062 = vmatprep.subr.mxu0 0.0
        %3063 = vmatpush1.msra.mxu0 0.0
        %3064 = vmatprep.subr.mxu0 0.0
        %3065 = vmatpush1.msra.mxu0 0.0
        %3066 = vmatprep.subr.mxu0 0.0
        %3067 = vmatpush1.msra.mxu0 0.0
        %3068 = vmatprep.subr.mxu0 0.0
        %3069 = vmatpush1.msra.mxu0 0.0
        %3070 = vmatprep.subr.mxu0 0.0
        %3071 = vmatpush1.msra.mxu0 0.0
        %3072 = vmatprep.subr.mxu0 0.0
        %3073 = vmatpush1.msra.mxu0 0.0
        %3074 = vmatprep.subr.mxu0 0.0
        %3075 = vmatpush1.msra.mxu0 0.0
        %3076 = vmatprep.subr.mxu0 0.0
        %3077 = vmatpush1.msra.mxu0 0.0
        %3078 = vmatprep.subr.mxu0 0.0
        %3079 = vmatpush1.msra.mxu0 0.0
        %3080 = vmatprep.subr.mxu0 0.0
        %3081 = vmatpush1.msra.mxu0 0.0
        %3082 = vmatprep.subr.mxu0 0.0
        %3083 = vmatpush1.msra.mxu0 0.0
        %3084 = vmatprep.subr.mxu0 0.0
        %3085 = vmatpush1.msra.mxu0 0.0
        %3086 = vmatprep.subr.mxu0 0.0
        %3087 = vmatpush1.msra.mxu0 0.0
        %3088 = vmatprep.subr.mxu0 0.0
        %3089 = vmatpush1.msra.mxu0 0.0
        %3090 = vmatprep.subr.mxu0 0.0
        %3091 = vmatpush1.msra.mxu0 0.0
        %3092 = vmatprep.subr.mxu0 0.0
        %3093 = vmatpush1.msra.mxu0 0.0
        %3094 = vmatprep.subr.mxu0 0.0
        %3095 = vmatpush1.msra.mxu0 0.0
        %3096 = vmatprep.subr.mxu0 0.0
        %3097 = vmatpush1.msra.mxu0 0.0
        %3098 = vmatprep.subr.mxu0 0.0
        %3099 = vmatpush1.msra.mxu0 0.0
        %3100 = vmatprep.subr.mxu0 0.0
        %3101 = vmatpush1.msra.mxu0 0.0
        %3102 = vmatprep.subr.mxu0 0.0
        %3103 = vmatpush1.msra.mxu0 0.0
        %3104 = vmatprep.subr.mxu0 0.0
        %3105 = vmatpush1.msra.mxu0 0.0
        %3106 = vmatprep.subr.mxu0 0.0
        %3107 = vmatpush1.msra.mxu0 0.0
        %3108 = vmatprep.subr.mxu0 0.0
        %3109 = vmatpush1.msra.mxu0 0.0
        %3110 = vmatprep.subr.mxu0 0.0
        %3111 = vmatpush1.msra.mxu0 0.0
        %3112 = vmatprep.subr.mxu0 0.0
        %3113 = vmatpush1.msra.mxu0 0.0
        %3114 = vmatprep.subr.mxu0 0.0
        %3115 = vmatpush1.msra.mxu0 0.0
        %3116 = vmatprep.mubr.f32.mxu0 0.0
        %3117 = vmatmul.mubr.f32.gmra.mrb[0].mxu0 %v3050
        %v3118 = vpop.f32.mrb[0].mxu0
        %v3119 = vadd.f32 %v3047, %v3118
        %v3120 = vpop.f32.mrb[0].mxu0
        %3121 = vdwg.mxu0
        %v3122 = vmax.f32 %v3119, 0.0
        %v3123 = vld [vmem:[%s17] sm:$0xff]
        %v3124 = vld [vmem:[%s17 + $0x8] sm:$0xff]
        %v3125 = vld [vmem:[%s17 + $0x10] sm:$0xff]
        %v3126 = vld [vmem:[%s17 + $0x18] sm:$0xff]
        %v3127 = vld [vmem:[%s17 + $0x20] sm:$0xff]
        %v3128 = vld [vmem:[%s17 + $0x28] sm:$0xff]
        %v3129 = vld [vmem:[%s17 + $0x30] sm:$0xff]
        %v3130 = vld [vmem:[%s17 + $0x38] sm:$0xff]
        %v3131 = vld [vmem:[%s18] sm:$0x1]
        %v3133 = vlaneseq
        %v3134 = vshrl.u32 %v3133, 7
        %v3135 = vsub.s32 0, %v3134
        %v3136 = vrot.slane %v3131, %v3135
        %v3139 = vsel %vm2921, %v3122, 0
        %3141 = vmatprep.subr.mxu0 0.0
        %3142 = vmatpush1.msra.mxu0 %v3123
        %3143 = vmatprep.subr.mxu0 0.0
        %3144 = vmatpush1.msra.mxu0 %v3124
        %3145 = vmatprep.subr.mxu0 0.0
        %3146 = vmatpush1.msra.mxu0 %v3125
        %3147 = vmatprep.subr.mxu0 0.0
        %3148 = vmatpush1.msra.mxu0 %v3126
        %3149 = vmatprep.subr.mxu0 0.0
        %3150 = vmatpush1.msra.mxu0 %v3127
        %3151 = vmatprep.subr.mxu0 0.0
        %3152 = vmatpush1.msra.mxu0 %v3128
        %3153 = vmatprep.subr.mxu0 0.0
        %3154 = vmatpush1.msra.mxu0 %v3129
        %3155 = vmatprep.subr.mxu0 0.0
        %3156 = vmatpush1.msra.mxu0 %v3130
        %3157 = vmatprep.subr.mxu0 0.0
        %3158 = vmatpush1.msra.mxu0 0.0
        %3159 = vmatprep.subr.mxu0 0.0
        %3160 = vmatpush1.msra.mxu0 0.0
        %3161 = vmatprep.subr.mxu0 0.0
        %3162 = vmatpush1.msra.mxu0 0.0
        %3163 = vmatprep.subr.mxu0 0.0
        %3164 = vmatpush1.msra.mxu0 0.0
        %3165 = vmatprep.subr.mxu0 0.0
        %3166 = vmatpush1.msra.mxu0 0.0
        %3167 = vmatprep.subr.mxu0 0.0
        %3168 = vmatpush1.msra.mxu0 0.0
        %3169 = vmatprep.subr.mxu0 0.0
        %3170 = vmatpush1.msra.mxu0 0.0
        %3171 = vmatprep.subr.mxu0 0.0
        %3172 = vmatpush1.msra.mxu0 0.0
        %3173 = vmatprep.subr.mxu0 0.0
        %3174 = vmatpush1.msra.mxu0 0.0
        %3175 = vmatprep.subr.mxu0 0.0
        %3176 = vmatpush1.msra.mxu0 0.0
        %3177 = vmatprep.subr.mxu0 0.0
        %3178 = vmatpush1.msra.mxu0 0.0
        %3179 = vmatprep.subr.mxu0 0.0
        %3180 = vmatpush1.msra.mxu0 0.0
        %3181 = vmatprep.subr.mxu0 0.0
        %3182 = vmatpush1.msra.mxu0 0.0
        %3183 = vmatprep.subr.mxu0 0.0
        %3184 = vmatpush1.msra.mxu0 0.0
        %3185 = vmatprep.subr.mxu0 0.0
        %3186 = vmatpush1.msra.mxu0 0.0
        %3187 = vmatprep.subr.mxu0 0.0
        %3188 = vmatpush1.msra.mxu0 0.0
        %3189 = vmatprep.subr.mxu0 0.0
        %3190 = vmatpush1.msra.mxu0 0.0
        %3191 = vmatprep.subr.mxu0 0.0
        %3192 = vmatpush1.msra.mxu0 0.0
        %3193 = vmatprep.subr.mxu0 0.0
        %3194 = vmatpush1.msra.mxu0 0.0
        %3195 = vmatprep.subr.mxu0 0.0
        %3196 = vmatpush1.msra.mxu0 0.0
        %3197 = vmatprep.subr.mxu0 0.0
        %3198 = vmatpush1.msra.mxu0 0.0
        %3199 = vmatprep.subr.mxu0 0.0
        %3200 = vmatpush1.msra.mxu0 0.0
        %3201 = vmatprep.subr.mxu0 0.0
        %3202 = vmatpush1.msra.mxu0 0.0
        %3203 = vmatprep.subr.mxu0 0.0
        %3204 = vmatpush1.msra.mxu0 0.0
        %3205 = vmatprep.mubr.f32.mxu0 0.0
        %3206 = vmatmul.mubr.f32.gmra.mrb[0].mxu0 %v3139
        %v3207 = vpop.f32.mrb[0].mxu0
        %v3208 = vadd.f32 %v3136, %v3207
        %v3209 = vpop.f32.mrb[0].mxu0
        %3210 = vdwg.mxu0
        %v3211 = vadd.f32 %v3208, %v3037
        %v3212 = vld [vmem:[%s19] sm:$0x1]
        %v3213 = vld [vmem:[%s20] sm:$0x1]
        %v3214 = vsel %vm973, %v3211, 0.0
        %3215 = vadd.xlane.f32.xlu0 %v3214
        %v3216 = vpop.xlane.xlu0 %3215
        %v3217 = vmul.f32 %v3216, %v1954
        %v3218 = vsub.f32 %v3211, %v3217
        %v3219 = vmul.f32 %v3218, %v3218
        %v3220 = vsel %vm973, %v3219, 0.0
        %3221 = vadd.xlane.f32.xlu0 %v3220
        %v3222 = vpop.xlane.xlu0 %3221
        %v3223 = vmul.f32 %v3222, %v1954
        %v3224 = vadd.f32 %v3223, 1e-06
        %v3225 = vrsqrt.pop %v3224
        %v3226 = vmul.f32 %v3218, %v3225
        %v3228 = vlaneseq
        %v3229 = vshrl.u32 %v3228, 7
        %v3230 = vsub.s32 0, %v3229
        %v3231 = vrot.slane %v3212, %v3230
        %v3233 = vmul.f32 %v3226, %v3231
        %v3235 = vlaneseq
        %v3236 = vshrl.u32 %v3235, 7
        %v3237 = vsub.s32 0, %v3236
        %v3238 = vrot.slane %v3213, %v3237
        %v3240 = vadd.f32 %v3233, %v3238
        %3241 = vst.msk [vmem:[%s930] sm:$0xff] %vm973, %v3240
        %s3242 = sand.u32 %s516, 1
        %s3243 = scalar_lea.sflag [#allocation4], %s3242
        %s3244 = sand.u32 %s516, 1
        %s3245 = smul.addr %s3244, 8
        %s3246 = scalar_lea.vmem [#allocation23], %s3245
        %s3247 = sand.u32 %s52, 1
        %s3248 = scalar_lea.sflag [#allocation25], %s3247
        %s3249 = sand.u32 %s542, 1
        %s3250 = smul.addr %s3249, 8
        %s3251 = scalar_lea.vmem [#allocation24], %s3250
        %s3252 = sand.u32 %s52, 1
        %s3253 = scalar_lea.sflag [#allocation25], %s3252
        %s3254 = sand.u32 %s568, 1
        %s3255 = smul.addr %s3254, 8
        %s3256 = scalar_lea.vmem [#allocation26], %s3255
        // Predicated region
        $region157: #{tpu_custom_call.1} parent=103 // pred_check
          %p3257 = pneg %p526
        $region158: #{tpu_custom_call.1} parent=103 // pred_check_branch
          %3259 = sbr.rel (%p3257) target = $region160
        $region159: #{tpu_custom_call.1} parent=103 // pred_region
          %s3261 = ssub.s32 128, 128
          %3262 = vsyncadd %s3243, %s3261
          %s3263 = smul.addr %s52, 128
          %s3264 = scalar_lea.hbm %s21, %s3263
          %s3266 = sshll.u32 %s3246, 4
          %s3267 = int_to_ptr.vmem [resolvable:$true] %s3266
          %3269 = dma.vmem_to_hbm [thread:$0]  %s3267, 128, %s3264, %s3243
        $region160: #{tpu_custom_call.1} parent=103 // pred_fallthru
          _
        // Predicated region
        $region161: #{tpu_custom_call.1} parent=103 // pred_check
          %p3270 = pneg %p552
        $region162: #{tpu_custom_call.1} parent=103 // pred_check_branch
          %3272 = sbr.rel (%p3270) target = $region164
        $region163: #{tpu_custom_call.1} parent=103 // pred_region
          %s3274 = ssub.s32 128, 128
          %3275 = vsyncadd %s3248, %s3274
          %s3276 = smul.addr %s52, 128
          %s3277 = scalar_lea.hbm %s22, %s3276
          %s3279 = sshll.u32 %s3251, 4
          %s3280 = int_to_ptr.vmem [resolvable:$true] %s3279
          %3282 = dma.vmem_to_hbm [thread:$0]  %s3280, 128, %s3277, %s3248
        $region164: #{tpu_custom_call.1} parent=103 // pred_fallthru
          _
        // Predicated region
        $region165: #{tpu_custom_call.1} parent=103 // pred_check
          %p3283 = pneg %p578
        $region166: #{tpu_custom_call.1} parent=103 // pred_check_branch
          %3285 = sbr.rel (%p3283) target = $region168
        $region167: #{tpu_custom_call.1} parent=103 // pred_region
          %s3287 = ssub.s32 128, 128
          %3288 = vsyncadd %s3253, %s3287
          %s3289 = smul.addr %s52, 128
          %s3290 = scalar_lea.hbm %s23, %s3289
          %s3292 = sshll.u32 %s3256, 4
          %s3293 = int_to_ptr.vmem [resolvable:$true] %s3292
          %3295 = dma.vmem_to_hbm [thread:$0]  %s3293, 128, %s3290, %s3253
        $region168: #{tpu_custom_call.1} parent=103 // pred_fallthru
          _
      $region104: #{tpu_custom_call.1} parent=5 // pred_fallthru
        _
      %p3296 = scmp.le.s32.totalorder 2, %s47
      // Predicated region
      $region169: #{tpu_custom_call.1} parent=5 // pred_check
        %p3297 = pneg %p3296
      $region170: #{tpu_custom_call.1} parent=5 // pred_check_branch
        %3299 = sbr.rel (%p3297) target = $region172
      $region171: #{tpu_custom_call.1} parent=5 // pred_region
        %s3300 = ssub.s32 %s47, 2
        // Predicated region
        $region173: #{tpu_custom_call.1} parent=171 // pred_check
          %p3301 = pneg %p532
        $region174: #{tpu_custom_call.1} parent=171 // pred_check_branch
          %3303 = sbr.rel (%p3301) target = $region176
        $region175: #{tpu_custom_call.1} parent=171 // pred_region
          %s3304 = sand.u32 %s517, 1
          %s3305 = scalar_lea.sflag [#allocation4], %s3304
          %s3306 = sand.u32 %s517, 1
          %s3307 = smul.addr %s3306, 8
          %s3308 = scalar_lea.vmem [#allocation23], %s3307
          %3309 = dma.done %s3305, 128
        $region176: #{tpu_custom_call.1} parent=171 // pred_fallthru
          _
        // Predicated region
        $region177: #{tpu_custom_call.1} parent=171 // pred_check
          %p3310 = pneg %p558
        $region178: #{tpu_custom_call.1} parent=171 // pred_check_branch
          %3312 = sbr.rel (%p3310) target = $region180
        $region179: #{tpu_custom_call.1} parent=171 // pred_region
          %s3313 = sand.u32 %s53, 1
          %s3314 = scalar_lea.sflag [#allocation25], %s3313
          %s3315 = sand.u32 %s543, 1
          %s3316 = smul.addr %s3315, 8
          %s3317 = scalar_lea.vmem [#allocation24], %s3316
          %3318 = dma.done %s3314, 128
        $region180: #{tpu_custom_call.1} parent=171 // pred_fallthru
          _
        // Predicated region
        $region181: #{tpu_custom_call.1} parent=171 // pred_check
          %p3319 = pneg %p584
        $region182: #{tpu_custom_call.1} parent=171 // pred_check_branch
          %3321 = sbr.rel (%p3319) target = $region184
        $region183: #{tpu_custom_call.1} parent=171 // pred_region
          %s3322 = sand.u32 %s53, 1
          %s3323 = scalar_lea.sflag [#allocation25], %s3322
          %s3324 = sand.u32 %s569, 1
          %s3325 = smul.addr %s3324, 8
          %s3326 = scalar_lea.vmem [#allocation26], %s3325
          %3327 = dma.done %s3323, 128
        $region184: #{tpu_custom_call.1} parent=171 // pred_fallthru
          _
      $region172: #{tpu_custom_call.1} parent=5 // pred_fallthru
        _
    $region6: #{tpu_custom_call.1} parent=1 // loop_footer
      %s51 = sadd.s32 1, %s47
    $region7: #{tpu_custom_call.1} parent=1 // loop_footer_branch
      %46 = sbr.rel target = $region3
    $region8: #{tpu_custom_call.1} parent=1 // loop_exit
      _
    %3328 = vsyncpa [#allocation3], 1
    %s3329 = scalar_lea.sflag [#allocation3], 1
    %3330 = vsyncpa %s3329, 1
    %3331 = vsyncpa [#allocation6], 1
    %s3332 = scalar_lea.sflag [#allocation6], 1
    %3333 = vsyncpa %s3332, 1
    %3334 = vsyncpa [#allocation9], 1
    %3335 = vsyncpa [#allocation12], 1
    %3336 = vsyncpa [#allocation15], 1
    %3337 = vsyncpa [#allocation18], 1
    %3338 = vsyncpa [#allocation21], 1
    %3339 = vsyncpa [#allocation4], 1
    %s3340 = scalar_lea.sflag [#allocation4], 1
    %3341 = vsyncpa %s3340, 1
    %3342 = vsyncpa [#allocation25], 1
    %s3343 = scalar_lea.sflag [#allocation25], 1
    %3344 = vsyncpa %s3343, 1

</llo_original>
